<compile_context>
chip_gen: v6e
topology: v6e:2x2x1
jax: 0.10.0
libtpu: 0.0.40
codegen_flags: <defaults>
</compile_context>

<pallas_src>
import functools
import math

import jax
import jax.numpy as jnp
from jax.experimental import pallas as pl
from jax.experimental.pallas import tpu as pltpu

_LANES = 128      # vreg lane width
_SUBLANES = 8     # vreg sublane count (f32)


def _round_up(n, m):
    return ((n + m - 1) // m) * m


def _pad_cols(a, n):
    return jnp.pad(a, ((0, 0), (0, n - a.shape[1])))


def _vae_neg_elbo_kernel(
    x_ref, eps_ref,
    w1_ref, b1_ref, wenc2_ref, benc2_ref,
    wd1_ref, bd1_ref, wd2_ref, bd2_ref,
    out_ref,
    eps_pad_ref,
    *, true_b, beta, d_chunk,
):
    f32 = jnp.float32
    bf16 = jnp.bfloat16

    i = pl.program_id(0)
    x = x_ref[...]                                   # (BT, D)  f32
    bt, d = x.shape
    l = eps_ref.shape[1]                             # true latent dim
    lp = eps_pad_ref.shape[1]                        # lane-padded latent dim (128)

    # ---------------- encoder ----------------
    h = jnp.dot(x.astype(bf16), w1_ref[...], preferred_element_type=f32) + b1_ref[...]
    h = jnp.maximum(h, 0.0)                          # (BT, H)

    # Fused (mu || log_std) projection; each half zero-padded to LP lanes so the slices below
    # fall on vreg boundaries. Padded lanes are exactly 0.
    enc2 = jnp.dot(h.astype(bf16), wenc2_ref[...], preferred_element_type=f32) + benc2_ref[...]
    mu = enc2[:, :lp]                                # (BT, LP)
    log_std = enc2[:, lp:]                           # (BT, LP)

    std = jnp.exp(log_std)                           # EUP; padded lanes -> exp(0) = 1
    var = std * std                                  # VPU mul, reuse std (no 2nd exp)

    # eps arrives unpadded bf16 (BT, L). Place it into a zeroed LP-wide f32 slab in VMEM so
    # the rsample stays lane-dense; pad lanes are 0 -> z pad lanes are exactly 0.
    eps_pad_ref[...] = jnp.zeros_like(eps_pad_ref)
    eps_pad_ref[:, :l] = eps_ref[...].astype(f32)
    eps = eps_pad_ref[...]

    # ---------------- reparameterized sample (q.rsample) ----------------
    z = mu + std * eps                               # padded lanes: 0 + 1*0 = 0

    # ---------------- decoder ----------------
    hd = jnp.dot(z.astype(bf16), wd1_ref[...], preferred_element_type=f32) + bd1_ref[...]
    hd = jnp.maximum(hd, 0.0)                        # (BT, H)
    hd16 = hd.astype(bf16)

    # ---------------- log p(x|z): Independent Normal(x_mu, 1), sum over D ----------------
    # Chunk the decoder output so only a (BT, d_chunk) f32 slab of x_mu / diff is ever live
    # (bounds VMEM / vreg pressure on v7x when D and bt are large).
    n_chunks = d // d_chunk

    def recon_chunk(off):
        w2c = wd2_ref[:, pl.ds(off, d_chunk)]        # (H, dc) bf16
        b2c = bd2_ref[:, pl.ds(off, d_chunk)]        # (1, dc) f32
        x_c = x_ref[:, pl.ds(off, d_chunk)]          # (BT, dc) f32
        x_mu_c = jnp.dot(hd16, w2c, preferred_element_type=f32) + b2c
        diff = x_c - x_mu_c
        return jnp.sum(diff * diff, axis=-1, keepdims=True)

    if n_chunks == 1:
        sq = recon_chunk(0)                          # static full-width slice
    else:
        def body(c, acc):
            off = pl.multiple_of(c * d_chunk, d_chunk)   # chunks are 128-lane aligned
            return acc + recon_chunk(off)
        sq = jax.lax.fori_loop(0, n_chunks, body, jnp.zeros((bt, 1), f32),
                               unroll=(n_chunks <= 8))

    log_prob = -0.5 * sq - 0.5 * d * math.log(2.0 * math.pi)            # (BT, 1)

    # ---------------- KL(q || N(0,I)): padded lanes contribute 1 + 0 - 1 - 0 = 0 ----------
    kl = 0.5 * jnp.sum(var + mu * mu - 1.0 - 2.0 * log_std,
                       axis=-1, keepdims=True)                          # (BT, 1)

    # ---------------- masked per-tile partial sum of the ELBO ----------------
    row = jax.lax.broadcasted_iota(jnp.int32, (bt, 1), 0) + i * bt
    per_row = jnp.where(row < true_b, log_prob - beta * kl, 0.0)
    partial = jnp.sum(per_row)

    # Lane-dense (8,128) broadcast store -> unmasked vst; reduced in the wrapper.
    out_ref[...] = jnp.broadcast_to(partial.reshape(1, 1, 1), out_ref.shape).astype(out_ref.dtype)


def pack_params(params):
    """Pack/pad/cast weights ONCE (outside the per-step jit) into kernel layout."""
    f32, bf16 = jnp.float32, jnp.bfloat16
    d, h = params["w1"].shape
    l = params["w_mu"].shape[1]
    lp = _round_up(max(l, 1), _LANES)
    return {
        "w1": params["w1"].astype(bf16),                                        # (D, H)
        "b1": params["b1"].reshape(1, h).astype(f32),
        "w_enc2": jnp.concatenate(
            [_pad_cols(params["w_mu"], lp), _pad_cols(params["w_ls"], lp)],
            axis=1).astype(bf16),                                               # (H, 2*LP)
        "b_enc2": jnp.concatenate(
            [_pad_cols(params["b_mu"].reshape(1, l), lp),
             _pad_cols(params["b_ls"].reshape(1, l), lp)], axis=1).astype(f32), # (1, 2*LP)
        "wd1": jnp.pad(params["wd1"], ((0, lp - l), (0, 0))).astype(bf16),      # (LP, H)
        "bd1": params["bd1"].reshape(1, h).astype(f32),
        "wd2": params["wd2"].astype(bf16),                                      # (H, D)
        "bd2": params["bd2"].reshape(1, d).astype(f32),
    }


def vae_neg_elbo(x, eps, packed, *, beta=1.0, b_tile=512, weight_buffers=1):
    """Negative ELBO (scalar f32) via the fused, batch-tiled Pallas kernel."""
    f32, bf16 = jnp.float32, jnp.bfloat16
    B, D = x.shape
    L = eps.shape[1]
    H = packed["w1"].shape[1]
    LP = packed["wd1"].shape[0]

    # Decoder-output chunk size: biggest 128-multiple divisor of D up to 512, else D itself.
    if D % 512 == 0:
        d_chunk = 512
    elif D % 256 == 0:
        d_chunk = 256
    elif D % 128 == 0:
        d_chunk = 128
    else:
        d_chunk = D

    # ---- batch tile selection (multiple of 16 for bf16 sublane packing of eps) ----
    bt = _round_up(min(b_tile, max(B, 1)), 16)
    if B <= bt and B > 16:
        # Guarantee >=2 grid tiles so the "parallel" axis feeds both v7x TensorCores.
        bt = _round_up(-(-B // 2), 16)

    weight_bytes = sum(int(a.size) * a.dtype.itemsize for a in packed.values())
    wb = 1 if weight_buffers == 1 else 2

    def vmem_estimate(bt_):
        io = 2 * (bt_ * D * 4 + bt_ * L * 2) + 2 * _SUBLANES * _LANES * 4   # double-buffered
        interm = bt_ * (2 * H + 4 * LP + 2 * d_chunk + 8) * 4               # live f32 slabs
        scratch = bt_ * LP * 4                                              # eps pad slab
        return wb * weight_bytes + io + interm + scratch

    # v7x has only 64 MiB VMEM per TensorCore: shrink the tile until it fits with headroom.
    budget = int(0.7 * (64 << 20))
    while bt > 16 and vmem_estimate(bt) > budget:
        bt = _round_up(max(bt // 2, 16), 16)

    b_pad = _round_up(B, bt)
    num_tiles = b_pad // bt

    # Only x is padded per call (rows); eps stays unpadded in lanes and bf16 in HBM.
    x_p = jnp.pad(x.astype(f32), ((0, b_pad - B), (0, 0)))                  # (Bp, D)
    eps_p = jnp.pad(eps.astype(bf16), ((0, b_pad - B), (0, 0)))             # (Bp, L) bf16

    def _const_spec(a):
        if weight_buffers is None:
            return pl.BlockSpec(a.shape, lambda i: (0, 0))
        # Constant index_map -> fetched once; single-buffer halves weight VMEM (v7x).
        return pl.BlockSpec(a.shape, lambda i: (0, 0),
                            pipeline_mode=pl.Buffered(weight_buffers))

    in_specs = [
        pl.BlockSpec((bt, D), lambda i: (i, 0)),     # x tile
        pl.BlockSpec((bt, L), lambda i: (i, 0)),     # eps tile (last dim == full dim -> legal)
        _const_spec(packed["w1"]), _const_spec(packed["b1"]),
        _const_spec(packed["w_enc2"]), _const_spec(packed["b_enc2"]),
        _const_spec(packed["wd1"]), _const_spec(packed["bd1"]),
        _const_spec(packed["wd2"]), _const_spec(packed["bd2"]),
    ]
    out_specs = pl.BlockSpec((1, _SUBLANES, _LANES), lambda i: (i, 0, 0))
    out_shape = jax.ShapeDtypeStruct((num_tiles, _SUBLANES, _LANES), f32)

    flops = 2 * b_pad * (D * H + H * 2 * LP + LP * H + H * D)
    transcendentals = b_pad * LP                     # one exp per latent lane
    bytes_accessed = (b_pad * D * 4 + b_pad * L * 2 + weight_bytes
                      + num_tiles * _SUBLANES * _LANES * 4)

    kernel = functools.partial(_vae_neg_elbo_kernel, true_b=B, beta=beta, d_chunk=d_chunk)
    out = pl.pallas_call(
        kernel,
        out_shape=out_shape,
        grid_spec=pltpu.PrefetchScalarGridSpec(
            num_scalar_prefetch=0,
            grid=(num_tiles,),
            in_specs=in_specs,
            out_specs=out_specs,
            scratch_shapes=[pltpu.VMEM((bt, LP), f32)],   # lane-padded eps slab
        ),
        compiler_params=pltpu.CompilerParams(
            # Per-tile independent partials + per-tile output blocks -> batch axis is truly
            # parallel (shards across v7x's 2 TensorCores; harmless on v5e/v6e).
            dimension_semantics=("parallel",),
            vmem_limit_bytes=min(64 << 20, max(32 << 20, int(1.5 * vmem_estimate(bt)))),
        ),
        cost_estimate=pl.CostEstimate(
            flops=flops, transcendentals=transcendentals, bytes_accessed=bytes_accessed),
    )(x_p, eps_p, packed["w1"], packed["b1"], packed["w_enc2"], packed["b_enc2"],
      packed["wd1"], packed["bd1"], packed["wd2"], packed["bd2"])

    partials = out[:, 0, 0]                          # one partial ELBO-sum per batch tile
    return -(jnp.sum(partials) / B)                  # mean over the TRUE batch size, negated


def init_params(key, d, h, latent):
    """Deterministic parameter init (shapes implied by the encoder/decoder MLPs)."""
    ks = jax.random.split(key, 6)
    scale = 0.1
    return {
        # encoder
        "w1":   scale * jax.random.normal(ks[0], (d, h), jnp.float32),
        "b1":   jnp.zeros((1, h), jnp.float32),
        "w_mu": scale * jax.random.normal(ks[1], (h, latent), jnp.float32),
        "b_mu": jnp.zeros((1, latent), jnp.float32),
        "w_ls": scale * jax.random.normal(ks[2], (h, latent), jnp.float32),
        "b_ls": jnp.zeros((1, latent), jnp.float32),
        # decoder
        "wd1":  scale * jax.random.normal(ks[3], (latent, h), jnp.float32),
        "bd1":  jnp.zeros((1, h), jnp.float32),
        "wd2":  scale * jax.random.normal(ks[4], (h, d), jnp.float32),
        "bd2":  jnp.zeros((1, d), jnp.float32),
    }


def _reference_neg_elbo(x, eps, p, *, beta=1.0, matmul_dtype=jnp.bfloat16):
    """Pure-JAX reference. matmul_dtype=bf16 mirrors the kernel's compute dtypes exactly."""
    f32 = jnp.float32
    md = matmul_dtype

    def mm(a, w):
        return jnp.dot(a.astype(md), w.astype(md), preferred_element_type=f32)

    h = jnp.maximum(mm(x, p["w1"]) + p["b1"], 0.0)
    mu = mm(h, p["w_mu"]) + p["b_mu"]
    log_std = mm(h, p["w_ls"]) + p["b_ls"]
    std = jnp.exp(log_std)
    z = mu + std * eps.astype(f32)
    hd = jnp.maximum(mm(z, p["wd1"]) + p["bd1"], 0.0)
    x_mu = mm(hd, p["wd2"]) + p["bd2"]
    d = x.shape[1]
    log_prob = -0.5 * jnp.sum((x - x_mu) ** 2, axis=-1) - 0.5 * d * math.log(2.0 * math.pi)
    kl = 0.5 * jnp.sum(std ** 2 + mu ** 2 - 1.0 - 2.0 * log_std, axis=-1)
    return -jnp.mean(log_prob - beta * kl)


if __name__ == "__main__":
    # Small but grid-exercising shapes: 200 rows -> two tiles (v7x 2-TC split path), the
    # second tile partially masked; D/H/L stay small.
    B, D, H, L = 200, 32, 32, 8
    BETA = 1.0

    key = jax.random.PRNGKey(0)
    k_x, k_eps, k_p = jax.random.split(key, 3)

    x = jax.random.normal(k_x, (B, D), jnp.float32)
    # eps is the reparameterization noise for q.rsample(); shipped to the kernel in bf16.
    # TODO(synk): optionally generate eps in-kernel (pltpu.prng_seed + stateful_normal) to
    # drop the noise stream entirely; kept as an input here for deterministic testing.
    eps = jax.random.normal(k_eps, (B, L), jnp.float32).astype(jnp.bfloat16)
    params = init_params(k_p, D, H, L)

    packed = pack_params(params)                     # hoisted out of the per-step jit

    loss_fn = jax.jit(functools.partial(vae_neg_elbo, beta=BETA, b_tile=512))
    try:
        neg_elbo = jax.block_until_ready(loss_fn(x, eps, packed))
    except Exception:
        # Fallback for jax builds that reject single-buffered (pl.Buffered(1)) weight specs.
        loss_fn = jax.jit(functools.partial(vae_neg_elbo, beta=BETA, b_tile=512,
                                            weight_buffers=None))
        neg_elbo = jax.block_until_ready(loss_fn(x, eps, packed))

    ref_bf16 = jax.block_until_ready(
        _reference_neg_elbo(x, eps, params, beta=BETA, matmul_dtype=jnp.bfloat16))
    ref_f32 = jax.block_until_ready(
        _reference_neg_elbo(x, eps, params, beta=BETA, matmul_dtype=jnp.float32))

    assert jnp.isfinite(neg_elbo), "non-finite negative ELBO"
    # Kernel vs. dtype-matched (bf16-matmul) reference: should agree tightly.
    assert abs(float(neg_elbo) - float(ref_bf16)) < 1e-2 * max(1.0, abs(float(ref_bf16))), \
        (float(neg_elbo), float(ref_bf16))
    # Kernel vs. full-f32 reference: bf16 matmuls only perturb the loss slightly.
    assert abs(float(neg_elbo) - float(ref_f32)) < 5e-2 * max(1.0, abs(float(ref_f32))), \
        (float(neg_elbo), float(ref_f32))

    print("KERNEL_OK")
</pallas_src>

<mosaic_0001>
module attributes {stable_mosaic.version = 11 : i64} {
  func.func @_vae_neg_elbo_kernel(%arg0: i32, %arg1: memref<112x32xf32, #tpu.memory_space<vmem>>, %arg2: memref<112x8xbf16, #tpu.memory_space<vmem>>, %arg3: memref<32x32xbf16, #tpu.memory_space<vmem>>, %arg4: memref<1x32xf32, #tpu.memory_space<vmem>>, %arg5: memref<32x256xbf16, #tpu.memory_space<vmem>>, %arg6: memref<1x256xf32, #tpu.memory_space<vmem>>, %arg7: memref<128x32xbf16, #tpu.memory_space<vmem>>, %arg8: memref<1x32xf32, #tpu.memory_space<vmem>>, %arg9: memref<32x32xbf16, #tpu.memory_space<vmem>>, %arg10: memref<1x32xf32, #tpu.memory_space<vmem>>, %arg11: memref<1x8x128xf32, #tpu.memory_space<vmem>>, %arg12: memref<112x128xf32, #tpu.memory_space<vmem>>) attributes {dimension_semantics = [#tpu.dimension_semantics<parallel>], iteration_bounds = array<i64: 2>, scalar_prefetch = 0 : i64, scratch_operands = 1 : i64, tpu.core_type = #tpu.core_type<tc>, window_params = [{transform_indices = @transform_0, window_bounds = array<i64: 112, 32>}, {transform_indices = @transform_1, window_bounds = array<i64: 112, 8>}, {pipeline_mode = #tpu.pipeline_mode<synchronous>, transform_indices = @transform_2, window_bounds = array<i64: 32, 32>}, {pipeline_mode = #tpu.pipeline_mode<synchronous>, transform_indices = @transform_3, window_bounds = array<i64: 1, 32>}, {pipeline_mode = #tpu.pipeline_mode<synchronous>, transform_indices = @transform_4, window_bounds = array<i64: 32, 256>}, {pipeline_mode = #tpu.pipeline_mode<synchronous>, transform_indices = @transform_5, window_bounds = array<i64: 1, 256>}, {pipeline_mode = #tpu.pipeline_mode<synchronous>, transform_indices = @transform_6, window_bounds = array<i64: 128, 32>}, {pipeline_mode = #tpu.pipeline_mode<synchronous>, transform_indices = @transform_7, window_bounds = array<i64: 1, 32>}, {pipeline_mode = #tpu.pipeline_mode<synchronous>, transform_indices = @transform_8, window_bounds = array<i64: 32, 32>}, {pipeline_mode = #tpu.pipeline_mode<synchronous>, transform_indices = @transform_9, window_bounds = array<i64: 1, 32>}, {transform_indices = @transform_10, window_bounds = array<i64: 1, 8, 128>}]} {
    %c0 = arith.constant 0 : index
    %c0_0 = arith.constant 0 : index
    %0 = vector.load %arg1[%c0, %c0_0] : memref<112x32xf32, #tpu.memory_space<vmem>>, vector<112x32xf32>
    %1 = arith.truncf %0 : vector<112x32xf32> to vector<112x32xbf16>
    %c0_1 = arith.constant 0 : index
    %c0_2 = arith.constant 0 : index
    %2 = vector.load %arg3[%c0_1, %c0_2] : memref<32x32xbf16, #tpu.memory_space<vmem>>, vector<32x32xbf16>
    %cst = arith.constant dense<0.000000e+00> : vector<112x32xf32>
    %3 = tpu.matmul %1, %2, %cst {dimension_numbers = #tpu.dot_dimension_numbers<[1], [0], [0], [1], [0, 0, 1, 1], [], []>} : vector<112x32xbf16>, vector<32x32xbf16>, vector<112x32xf32> -> vector<112x32xf32>
    %c0_3 = arith.constant 0 : index
    %c0_4 = arith.constant 0 : index
    %4 = vector.load %arg4[%c0_3, %c0_4] : memref<1x32xf32, #tpu.memory_space<vmem>>, vector<1x32xf32>
    %5 = vector.broadcast %4 : vector<1x32xf32> to vector<112x32xf32>
    %6 = arith.addf %3, %5 : vector<112x32xf32>
    %cst_5 = arith.constant 0.000000e+00 : f32
    %7 = vector.broadcast %cst_5 : f32 to vector<112x32xf32>
    %8 = arith.maximumf %6, %7 : vector<112x32xf32>
    %9 = arith.truncf %8 : vector<112x32xf32> to vector<112x32xbf16>
    %c0_6 = arith.constant 0 : index
    %c0_7 = arith.constant 0 : index
    %10 = vector.load %arg5[%c0_6, %c0_7] : memref<32x256xbf16, #tpu.memory_space<vmem>>, vector<32x256xbf16>
    %cst_8 = arith.constant dense<0.000000e+00> : vector<112x256xf32>
    %11 = tpu.matmul %9, %10, %cst_8 {dimension_numbers = #tpu.dot_dimension_numbers<[1], [0], [0], [1], [0, 0, 1, 1], [], []>} : vector<112x32xbf16>, vector<32x256xbf16>, vector<112x256xf32> -> vector<112x256xf32>
    %c0_9 = arith.constant 0 : index
    %c0_10 = arith.constant 0 : index
    %12 = vector.load %arg6[%c0_9, %c0_10] : memref<1x256xf32, #tpu.memory_space<vmem>>, vector<1x256xf32>
    %13 = vector.broadcast %12 : vector<1x256xf32> to vector<112x256xf32>
    %14 = arith.addf %11, %13 : vector<112x256xf32>
    %15 = vector.extract_strided_slice %14 {offsets = [0, 0], sizes = [112, 128], strides = [1, 1]} : vector<112x256xf32> to vector<112x128xf32>
    %16 = vector.extract_strided_slice %14 {offsets = [0, 128], sizes = [112, 128], strides = [1, 1]} : vector<112x256xf32> to vector<112x128xf32>
    %17 = math.exp %16 : vector<112x128xf32>
    %18 = arith.mulf %17, %17 : vector<112x128xf32>
    %cst_11 = arith.constant 0.000000e+00 : f32
    %19 = vector.broadcast %cst_11 : f32 to vector<112x128xf32>
    %c0_12 = arith.constant 0 : index
    %c0_13 = arith.constant 0 : index
    %20 = vector.load %arg12[%c0_12, %c0_13] : memref<112x128xf32, #tpu.memory_space<vmem>>, vector<112x128xf32>
    tpu.vector_store %arg12[%c0_12, %c0_13], %19 {strides = array<i32>} : memref<112x128xf32, #tpu.memory_space<vmem>>, vector<112x128xf32>,
    %c0_14 = arith.constant 0 : index
    %c0_15 = arith.constant 0 : index
    %21 = vector.load %arg2[%c0_14, %c0_15] : memref<112x8xbf16, #tpu.memory_space<vmem>>, vector<112x8xbf16>
    %22 = arith.extf %21 : vector<112x8xbf16> to vector<112x8xf32>
    %c0_16 = arith.constant 0 : index
    %c0_17 = arith.constant 0 : index
    %23 = vector.load %arg12[%c0_16, %c0_17] : memref<112x128xf32, #tpu.memory_space<vmem>>, vector<112x8xf32>
    tpu.vector_store %arg12[%c0_16, %c0_17], %22 {strides = array<i32>} : memref<112x128xf32, #tpu.memory_space<vmem>>, vector<112x8xf32>,
    %c0_18 = arith.constant 0 : index
    %c0_19 = arith.constant 0 : index
    %24 = vector.load %arg12[%c0_18, %c0_19] : memref<112x128xf32, #tpu.memory_space<vmem>>, vector<112x128xf32>
    %25 = arith.mulf %17, %24 : vector<112x128xf32>
    %26 = arith.addf %15, %25 : vector<112x128xf32>
    %27 = arith.truncf %26 : vector<112x128xf32> to vector<112x128xbf16>
    %c0_20 = arith.constant 0 : index
    %c0_21 = arith.constant 0 : index
    %28 = vector.load %arg7[%c0_20, %c0_21] : memref<128x32xbf16, #tpu.memory_space<vmem>>, vector<128x32xbf16>
    %cst_22 = arith.constant dense<0.000000e+00> : vector<112x32xf32>
    %29 = tpu.matmul %27, %28, %cst_22 {dimension_numbers = #tpu.dot_dimension_numbers<[1], [0], [0], [1], [0, 0, 1, 1], [], []>} : vector<112x128xbf16>, vector<128x32xbf16>, vector<112x32xf32> -> vector<112x32xf32>
    %c0_23 = arith.constant 0 : index
    %c0_24 = arith.constant 0 : index
    %30 = vector.load %arg8[%c0_23, %c0_24] : memref<1x32xf32, #tpu.memory_space<vmem>>, vector<1x32xf32>
    %31 = vector.broadcast %30 : vector<1x32xf32> to vector<112x32xf32>
    %32 = arith.addf %29, %31 : vector<112x32xf32>
    %cst_25 = arith.constant 0.000000e+00 : f32
    %33 = vector.broadcast %cst_25 : f32 to vector<112x32xf32>
    %34 = arith.maximumf %32, %33 : vector<112x32xf32>
    %35 = arith.truncf %34 : vector<112x32xf32> to vector<112x32xbf16>
    %c0_26 = arith.constant 0 : index
    %c0_27 = arith.constant 0 : index
    %36 = vector.load %arg9[%c0_26, %c0_27] : memref<32x32xbf16, #tpu.memory_space<vmem>>, vector<32x32xbf16>
    %c0_28 = arith.constant 0 : index
    %c0_29 = arith.constant 0 : index
    %37 = vector.load %arg10[%c0_28, %c0_29] : memref<1x32xf32, #tpu.memory_space<vmem>>, vector<1x32xf32>
    %c0_30 = arith.constant 0 : index
    %c0_31 = arith.constant 0 : index
    %38 = vector.load %arg1[%c0_30, %c0_31] : memref<112x32xf32, #tpu.memory_space<vmem>>, vector<112x32xf32>
    %cst_32 = arith.constant dense<0.000000e+00> : vector<112x32xf32>
    %39 = tpu.matmul %35, %36, %cst_32 {dimension_numbers = #tpu.dot_dimension_numbers<[1], [0], [0], [1], [0, 0, 1, 1], [], []>} : vector<112x32xbf16>, vector<32x32xbf16>, vector<112x32xf32> -> vector<112x32xf32>
    %40 = vector.broadcast %37 : vector<1x32xf32> to vector<112x32xf32>
    %41 = arith.addf %39, %40 : vector<112x32xf32>
    %42 = arith.subf %38, %41 : vector<112x32xf32>
    %43 = arith.mulf %42, %42 : vector<112x32xf32>
    %cst_33 = arith.constant dense<0.000000e+00> : vector<112xf32>
    %44 = vector.multi_reduction <add>, %43, %cst_33 [1] : vector<112x32xf32> to vector<112xf32>
    %45 = vector.shape_cast %44 : vector<112xf32> to vector<112x1xf32>
    %cst_34 = arith.constant -5.000000e-01 : f32
    %46 = vector.broadcast %cst_34 : f32 to vector<112x1xf32>
    %47 = arith.mulf %46, %45 : vector<112x1xf32>
    %cst_35 = arith.constant 29.4060326 : f32
    %48 = vector.broadcast %cst_35 : f32 to vector<112x1xf32>
    %49 = arith.subf %47, %48 : vector<112x1xf32>
    %50 = arith.mulf %15, %15 : vector<112x128xf32>
    %51 = arith.addf %18, %50 : vector<112x128xf32>
    %cst_36 = arith.constant 1.000000e+00 : f32
    %52 = vector.broadcast %cst_36 : f32 to vector<112x128xf32>
    %53 = arith.subf %51, %52 : vector<112x128xf32>
    %cst_37 = arith.constant 2.000000e+00 : f32
    %54 = vector.broadcast %cst_37 : f32 to vector<112x128xf32>
    %55 = arith.mulf %54, %16 : vector<112x128xf32>
    %56 = arith.subf %53, %55 : vector<112x128xf32>
    %cst_38 = arith.constant dense<0.000000e+00> : vector<112xf32>
    %57 = vector.multi_reduction <add>, %56, %cst_38 [1] : vector<112x128xf32> to vector<112xf32>
    %58 = vector.shape_cast %57 : vector<112xf32> to vector<112x1xf32>
    %cst_39 = arith.constant 5.000000e-01 : f32
    %59 = vector.broadcast %cst_39 : f32 to vector<112x1xf32>
    %60 = arith.mulf %59, %58 : vector<112x1xf32>
    %61 = tpu.iota {dimensions = array<i32: 0>} : vector<112x1xi32>
    %c112_i32 = arith.constant 112 : i32
    %62 = arith.muli %arg0, %c112_i32 : i32
    %63 = vector.broadcast %62 : i32 to vector<112x1xi32>
    %64 = arith.addi %61, %63 : vector<112x1xi32>
    %c200_i32 = arith.constant 200 : i32
    %65 = vector.broadcast %c200_i32 : i32 to vector<112x1xi32>
    %66 = arith.cmpi slt, %64, %65 : vector<112x1xi32>
    %cst_40 = arith.constant 1.000000e+00 : f32
    %67 = vector.broadcast %cst_40 : f32 to vector<112x1xf32>
    %68 = arith.mulf %67, %60 : vector<112x1xf32>
    %69 = arith.subf %49, %68 : vector<112x1xf32>
    %cst_41 = arith.constant 0.000000e+00 : f32
    %70 = vector.broadcast %cst_41 : f32 to vector<112x1xf32>
    %71 = arith.select %66, %69, %70 : vector<112x1xi1>, vector<112x1xf32>
    %72 = vector.shape_cast %71 : vector<112x1xf32> to vector<1x112x1xf32>
    %cst_42 = arith.constant dense<0.000000e+00> : vector<1xf32>
    %73 = vector.multi_reduction <add>, %72, %cst_42 [1, 2] : vector<1x112x1xf32> to vector<1xf32>
    %74 = vector.shape_cast %73 : vector<1xf32> to vector<1x1x1xf32>
    %75 = vector.extract %74[0, 0, 0] : f32 from vector<1x1x1xf32>
    %76 = vector.broadcast %75 : f32 to vector<1x1x1xf32>
    %77 = vector.shape_cast %76 : vector<1x1x1xf32> to vector<1x1x1xf32>
    %78 = vector.broadcast %77 : vector<1x1x1xf32> to vector<1x8x128xf32>
    %c0_43 = arith.constant 0 : index
    %c0_44 = arith.constant 0 : index
    %c0_45 = arith.constant 0 : index
    %79 = vector.load %arg11[%c0_43, %c0_44, %c0_45] : memref<1x8x128xf32, #tpu.memory_space<vmem>>, vector<1x8x128xf32>
    tpu.vector_store %arg11[%c0_43, %c0_44, %c0_45], %78 {strides = array<i32>} : memref<1x8x128xf32, #tpu.memory_space<vmem>>, vector<1x8x128xf32>,
    return
  }
  func.func @transform_0(%arg0: i32) -> (i32, i32) {
    %c0_i32 = arith.constant 0 : i32
    %c0_i32_0 = arith.constant 0 : i32
    return %arg0, %c0_i32 : i32, i32
  }
  func.func @transform_1(%arg0: i32) -> (i32, i32) {
    %c0_i32 = arith.constant 0 : i32
    %c0_i32_0 = arith.constant 0 : i32
    return %arg0, %c0_i32 : i32, i32
  }
  func.func @transform_2(%arg0: i32) -> (i32, i32) {
    %c0_i32 = arith.constant 0 : i32
    %c0_i32_0 = arith.constant 0 : i32
    %c0_i32_1 = arith.constant 0 : i32
    return %c0_i32, %c0_i32_0 : i32, i32
  }
  func.func @transform_3(%arg0: i32) -> (i32, i32) {
    %c0_i32 = arith.constant 0 : i32
    %c0_i32_0 = arith.constant 0 : i32
    %c0_i32_1 = arith.constant 0 : i32
    return %c0_i32, %c0_i32_0 : i32, i32
  }
  func.func @transform_4(%arg0: i32) -> (i32, i32) {
    %c0_i32 = arith.constant 0 : i32
    %c0_i32_0 = arith.constant 0 : i32
    %c0_i32_1 = arith.constant 0 : i32
    return %c0_i32, %c0_i32_0 : i32, i32
  }
  func.func @transform_5(%arg0: i32) -> (i32, i32) {
    %c0_i32 = arith.constant 0 : i32
    %c0_i32_0 = arith.constant 0 : i32
    %c0_i32_1 = arith.constant 0 : i32
    return %c0_i32, %c0_i32_0 : i32, i32
  }
  func.func @transform_6(%arg0: i32) -> (i32, i32) {
    %c0_i32 = arith.constant 0 : i32
    %c0_i32_0 = arith.constant 0 : i32
    %c0_i32_1 = arith.constant 0 : i32
    return %c0_i32, %c0_i32_0 : i32, i32
  }
  func.func @transform_7(%arg0: i32) -> (i32, i32) {
    %c0_i32 = arith.constant 0 : i32
    %c0_i32_0 = arith.constant 0 : i32
    %c0_i32_1 = arith.constant 0 : i32
    return %c0_i32, %c0_i32_0 : i32, i32
  }
  func.func @transform_8(%arg0: i32) -> (i32, i32) {
    %c0_i32 = arith.constant 0 : i32
    %c0_i32_0 = arith.constant 0 : i32
    %c0_i32_1 = arith.constant 0 : i32
    return %c0_i32, %c0_i32_0 : i32, i32
  }
  func.func @transform_9(%arg0: i32) -> (i32, i32) {
    %c0_i32 = arith.constant 0 : i32
    %c0_i32_0 = arith.constant 0 : i32
    %c0_i32_1 = arith.constant 0 : i32
    return %c0_i32, %c0_i32_0 : i32, i32
  }
  func.func @transform_10(%arg0: i32) -> (i32, i32, i32) {
    %c0_i32 = arith.constant 0 : i32
    %c0_i32_0 = arith.constant 0 : i32
    %c0_i32_1 = arith.constant 0 : i32
    return %arg0, %c0_i32, %c0_i32_0 : i32, i32, i32
  }
}

module attributes {stable_mosaic.version = 11 : i64} {
  func.func @_vae_neg_elbo_kernel(%arg0: i32, %arg1: memref<112x32xf32, #tpu.memory_space<vmem>>, %arg2: memref<112x8xbf16, #tpu.memory_space<vmem>>, %arg3: memref<32x32xbf16, #tpu.memory_space<vmem>>, %arg4: memref<1x32xf32, #tpu.memory_space<vmem>>, %arg5: memref<32x256xbf16, #tpu.memory_space<vmem>>, %arg6: memref<1x256xf32, #tpu.memory_space<vmem>>, %arg7: memref<128x32xbf16, #tpu.memory_space<vmem>>, %arg8: memref<1x32xf32, #tpu.memory_space<vmem>>, %arg9: memref<32x32xbf16, #tpu.memory_space<vmem>>, %arg10: memref<1x32xf32, #tpu.memory_space<vmem>>, %arg11: memref<1x8x128xf32, #tpu.memory_space<vmem>>, %arg12: memref<112x128xf32, #tpu.memory_space<vmem>>) attributes {dimension_semantics = [#tpu.dimension_semantics<parallel>], iteration_bounds = array<i64: 2>, scalar_prefetch = 0 : i64, scratch_operands = 1 : i64, tpu.core_type = #tpu.core_type<tc>, window_params = [{transform_indices = @transform_0, window_bounds = array<i64: 112, 32>}, {transform_indices = @transform_1, window_bounds = array<i64: 112, 8>}, {pipeline_mode = #tpu.pipeline_mode<synchronous>, transform_indices = @transform_2, window_bounds = array<i64: 32, 32>}, {pipeline_mode = #tpu.pipeline_mode<synchronous>, transform_indices = @transform_3, window_bounds = array<i64: 1, 32>}, {pipeline_mode = #tpu.pipeline_mode<synchronous>, transform_indices = @transform_4, window_bounds = array<i64: 32, 256>}, {pipeline_mode = #tpu.pipeline_mode<synchronous>, transform_indices = @transform_5, window_bounds = array<i64: 1, 256>}, {pipeline_mode = #tpu.pipeline_mode<synchronous>, transform_indices = @transform_6, window_bounds = array<i64: 128, 32>}, {pipeline_mode = #tpu.pipeline_mode<synchronous>, transform_indices = @transform_7, window_bounds = array<i64: 1, 32>}, {pipeline_mode = #tpu.pipeline_mode<synchronous>, transform_indices = @transform_8, window_bounds = array<i64: 32, 32>}, {pipeline_mode = #tpu.pipeline_mode<synchronous>, transform_indices = @transform_9, window_bounds = array<i64: 1, 32>}, {transform_indices = @transform_10, window_bounds = array<i64: 1, 8, 128>}]} {
    %c0 = arith.constant 0 : index
    %c0_0 = arith.constant 0 : index
    %0 = vector.load %arg1[%c0, %c0_0] : memref<112x32xf32, #tpu.memory_space<vmem>>, vector<112x32xf32>
    %1 = arith.truncf %0 : vector<112x32xf32> to vector<112x32xbf16>
    %c0_1 = arith.constant 0 : index
    %c0_2 = arith.constant 0 : index
    %2 = vector.load %arg3[%c0_1, %c0_2] : memref<32x32xbf16, #tpu.memory_space<vmem>>, vector<32x32xbf16>
    %cst = arith.constant dense<0.000000e+00> : vector<112x32xf32>
    %3 = tpu.matmul %1, %2, %cst {dimension_numbers = #tpu.dot_dimension_numbers<[1], [0], [0], [1], [0, 0, 1, 1], [], []>} : vector<112x32xbf16>, vector<32x32xbf16>, vector<112x32xf32> -> vector<112x32xf32>
    %c0_3 = arith.constant 0 : index
    %c0_4 = arith.constant 0 : index
    %4 = vector.load %arg4[%c0_3, %c0_4] : memref<1x32xf32, #tpu.memory_space<vmem>>, vector<1x32xf32>
    %5 = vector.broadcast %4 : vector<1x32xf32> to vector<112x32xf32>
    %6 = arith.addf %3, %5 : vector<112x32xf32>
    %cst_5 = arith.constant 0.000000e+00 : f32
    %7 = vector.broadcast %cst_5 : f32 to vector<112x32xf32>
    %8 = arith.maximumf %6, %7 : vector<112x32xf32>
    %9 = arith.truncf %8 : vector<112x32xf32> to vector<112x32xbf16>
    %c0_6 = arith.constant 0 : index
    %c0_7 = arith.constant 0 : index
    %10 = vector.load %arg5[%c0_6, %c0_7] : memref<32x256xbf16, #tpu.memory_space<vmem>>, vector<32x256xbf16>
    %cst_8 = arith.constant dense<0.000000e+00> : vector<112x256xf32>
    %11 = tpu.matmul %9, %10, %cst_8 {dimension_numbers = #tpu.dot_dimension_numbers<[1], [0], [0], [1], [0, 0, 1, 1], [], []>} : vector<112x32xbf16>, vector<32x256xbf16>, vector<112x256xf32> -> vector<112x256xf32>
    %c0_9 = arith.constant 0 : index
    %c0_10 = arith.constant 0 : index
    %12 = vector.load %arg6[%c0_9, %c0_10] : memref<1x256xf32, #tpu.memory_space<vmem>>, vector<1x256xf32>
    %13 = vector.broadcast %12 : vector<1x256xf32> to vector<112x256xf32>
    %14 = arith.addf %11, %13 : vector<112x256xf32>
    %15 = vector.extract_strided_slice %14 {offsets = [0, 0], sizes = [112, 128], strides = [1, 1]} : vector<112x256xf32> to vector<112x128xf32>
    %16 = vector.extract_strided_slice %14 {offsets = [0, 128], sizes = [112, 128], strides = [1, 1]} : vector<112x256xf32> to vector<112x128xf32>
    %17 = math.exp %16 : vector<112x128xf32>
    %18 = arith.mulf %17, %17 : vector<112x128xf32>
    %cst_11 = arith.constant 0.000000e+00 : f32
    %19 = vector.broadcast %cst_11 : f32 to vector<112x128xf32>
    %c0_12 = arith.constant 0 : index
    %c0_13 = arith.constant 0 : index
    %20 = vector.load %arg12[%c0_12, %c0_13] : memref<112x128xf32, #tpu.memory_space<vmem>>, vector<112x128xf32>
    tpu.vector_store %arg12[%c0_12, %c0_13], %19 {strides = array<i32>} : memref<112x128xf32, #tpu.memory_space<vmem>>, vector<112x128xf32>,
    %c0_14 = arith.constant 0 : index
    %c0_15 = arith.constant 0 : index
    %21 = vector.load %arg2[%c0_14, %c0_15] : memref<112x8xbf16, #tpu.memory_space<vmem>>, vector<112x8xbf16>
    %22 = arith.extf %21 : vector<112x8xbf16> to vector<112x8xf32>
    %c0_16 = arith.constant 0 : index
    %c0_17 = arith.constant 0 : index
    %23 = vector.load %arg12[%c0_16, %c0_17] : memref<112x128xf32, #tpu.memory_space<vmem>>, vector<112x8xf32>
    tpu.vector_store %arg12[%c0_16, %c0_17], %22 {strides = array<i32>} : memref<112x128xf32, #tpu.memory_space<vmem>>, vector<112x8xf32>,
    %c0_18 = arith.constant 0 : index
    %c0_19 = arith.constant 0 : index
    %24 = vector.load %arg12[%c0_18, %c0_19] : memref<112x128xf32, #tpu.memory_space<vmem>>, vector<112x128xf32>
    %25 = arith.mulf %17, %24 : vector<112x128xf32>
    %26 = arith.addf %15, %25 : vector<112x128xf32>
    %27 = arith.truncf %26 : vector<112x128xf32> to vector<112x128xbf16>
    %c0_20 = arith.constant 0 : index
    %c0_21 = arith.constant 0 : index
    %28 = vector.load %arg7[%c0_20, %c0_21] : memref<128x32xbf16, #tpu.memory_space<vmem>>, vector<128x32xbf16>
    %cst_22 = arith.constant dense<0.000000e+00> : vector<112x32xf32>
    %29 = tpu.matmul %27, %28, %cst_22 {dimension_numbers = #tpu.dot_dimension_numbers<[1], [0], [0], [1], [0, 0, 1, 1], [], []>} : vector<112x128xbf16>, vector<128x32xbf16>, vector<112x32xf32> -> vector<112x32xf32>
    %c0_23 = arith.constant 0 : index
    %c0_24 = arith.constant 0 : index
    %30 = vector.load %arg8[%c0_23, %c0_24] : memref<1x32xf32, #tpu.memory_space<vmem>>, vector<1x32xf32>
    %31 = vector.broadcast %30 : vector<1x32xf32> to vector<112x32xf32>
    %32 = arith.addf %29, %31 : vector<112x32xf32>
    %cst_25 = arith.constant 0.000000e+00 : f32
    %33 = vector.broadcast %cst_25 : f32 to vector<112x32xf32>
    %34 = arith.maximumf %32, %33 : vector<112x32xf32>
    %35 = arith.truncf %34 : vector<112x32xf32> to vector<112x32xbf16>
    %c0_26 = arith.constant 0 : index
    %c0_27 = arith.constant 0 : index
    %36 = vector.load %arg9[%c0_26, %c0_27] : memref<32x32xbf16, #tpu.memory_space<vmem>>, vector<32x32xbf16>
    %c0_28 = arith.constant 0 : index
    %c0_29 = arith.constant 0 : index
    %37 = vector.load %arg10[%c0_28, %c0_29] : memref<1x32xf32, #tpu.memory_space<vmem>>, vector<1x32xf32>
    %c0_30 = arith.constant 0 : index
    %c0_31 = arith.constant 0 : index
    %38 = vector.load %arg1[%c0_30, %c0_31] : memref<112x32xf32, #tpu.memory_space<vmem>>, vector<112x32xf32>
    %cst_32 = arith.constant dense<0.000000e+00> : vector<112x32xf32>
    %39 = tpu.matmul %35, %36, %cst_32 {dimension_numbers = #tpu.dot_dimension_numbers<[1], [0], [0], [1], [0, 0, 1, 1], [], []>} : vector<112x32xbf16>, vector<32x32xbf16>, vector<112x32xf32> -> vector<112x32xf32>
    %40 = vector.broadcast %37 : vector<1x32xf32> to vector<112x32xf32>
    %41 = arith.addf %39, %40 : vector<112x32xf32>
    %42 = arith.subf %38, %41 : vector<112x32xf32>
    %43 = arith.mulf %42, %42 : vector<112x32xf32>
    %cst_33 = arith.constant dense<0.000000e+00> : vector<112xf32>
    %44 = vector.multi_reduction <add>, %43, %cst_33 [1] : vector<112x32xf32> to vector<112xf32>
    %45 = vector.shape_cast %44 : vector<112xf32> to vector<112x1xf32>
    %cst_34 = arith.constant -5.000000e-01 : f32
    %46 = vector.broadcast %cst_34 : f32 to vector<112x1xf32>
    %47 = arith.mulf %46, %45 : vector<112x1xf32>
    %cst_35 = arith.constant 29.4060326 : f32
    %48 = vector.broadcast %cst_35 : f32 to vector<112x1xf32>
    %49 = arith.subf %47, %48 : vector<112x1xf32>
    %50 = arith.mulf %15, %15 : vector<112x128xf32>
    %51 = arith.addf %18, %50 : vector<112x128xf32>
    %cst_36 = arith.constant 1.000000e+00 : f32
    %52 = vector.broadcast %cst_36 : f32 to vector<112x128xf32>
    %53 = arith.subf %51, %52 : vector<112x128xf32>
    %cst_37 = arith.constant 2.000000e+00 : f32
    %54 = vector.broadcast %cst_37 : f32 to vector<112x128xf32>
    %55 = arith.mulf %54, %16 : vector<112x128xf32>
    %56 = arith.subf %53, %55 : vector<112x128xf32>
    %cst_38 = arith.constant dense<0.000000e+00> : vector<112xf32>
    %57 = vector.multi_reduction <add>, %56, %cst_38 [1] : vector<112x128xf32> to vector<112xf32>
    %58 = vector.shape_cast %57 : vector<112xf32> to vector<112x1xf32>
    %cst_39 = arith.constant 5.000000e-01 : f32
    %59 = vector.broadcast %cst_39 : f32 to vector<112x1xf32>
    %60 = arith.mulf %59, %58 : vector<112x1xf32>
    %61 = tpu.iota {dimensions = array<i32: 0>} : vector<112x1xi32>
    %c112_i32 = arith.constant 112 : i32
    %62 = arith.muli %arg0, %c112_i32 : i32
    %63 = vector.broadcast %62 : i32 to vector<112x1xi32>
    %64 = arith.addi %61, %63 : vector<112x1xi32>
    %c200_i32 = arith.constant 200 : i32
    %65 = vector.broadcast %c200_i32 : i32 to vector<112x1xi32>
    %66 = arith.cmpi slt, %64, %65 : vector<112x1xi32>
    %cst_40 = arith.constant 1.000000e+00 : f32
    %67 = vector.broadcast %cst_40 : f32 to vector<112x1xf32>
    %68 = arith.mulf %67, %60 : vector<112x1xf32>
    %69 = arith.subf %49, %68 : vector<112x1xf32>
    %cst_41 = arith.constant 0.000000e+00 : f32
    %70 = vector.broadcast %cst_41 : f32 to vector<112x1xf32>
    %71 = arith.select %66, %69, %70 : vector<112x1xi1>, vector<112x1xf32>
    %72 = vector.shape_cast %71 : vector<112x1xf32> to vector<1x112x1xf32>
    %cst_42 = arith.constant dense<0.000000e+00> : vector<1xf32>
    %73 = vector.multi_reduction <add>, %72, %cst_42 [1, 2] : vector<1x112x1xf32> to vector<1xf32>
    %74 = vector.shape_cast %73 : vector<1xf32> to vector<1x1x1xf32>
    %75 = vector.extract %74[0, 0, 0] : f32 from vector<1x1x1xf32>
    %76 = vector.broadcast %75 : f32 to vector<1x1x1xf32>
    %77 = vector.shape_cast %76 : vector<1x1x1xf32> to vector<1x1x1xf32>
    %78 = vector.broadcast %77 : vector<1x1x1xf32> to vector<1x8x128xf32>
    %c0_43 = arith.constant 0 : index
    %c0_44 = arith.constant 0 : index
    %c0_45 = arith.constant 0 : index
    %79 = vector.load %arg11[%c0_43, %c0_44, %c0_45] : memref<1x8x128xf32, #tpu.memory_space<vmem>>, vector<1x8x128xf32>
    tpu.vector_store %arg11[%c0_43, %c0_44, %c0_45], %78 {strides = array<i32>} : memref<1x8x128xf32, #tpu.memory_space<vmem>>, vector<1x8x128xf32>,
    return
  }
  func.func @transform_0(%arg0: i32) -> (i32, i32) {
    %c0_i32 = arith.constant 0 : i32
    %c0_i32_0 = arith.constant 0 : i32
    return %arg0, %c0_i32 : i32, i32
  }
  func.func @transform_1(%arg0: i32) -> (i32, i32) {
    %c0_i32 = arith.constant 0 : i32
    %c0_i32_0 = arith.constant 0 : i32
    return %arg0, %c0_i32 : i32, i32
  }
  func.func @transform_2(%arg0: i32) -> (i32, i32) {
    %c0_i32 = arith.constant 0 : i32
    %c0_i32_0 = arith.constant 0 : i32
    %c0_i32_1 = arith.constant 0 : i32
    return %c0_i32, %c0_i32_0 : i32, i32
  }
  func.func @transform_3(%arg0: i32) -> (i32, i32) {
    %c0_i32 = arith.constant 0 : i32
    %c0_i32_0 = arith.constant 0 : i32
    %c0_i32_1 = arith.constant 0 : i32
    return %c0_i32, %c0_i32_0 : i32, i32
  }
  func.func @transform_4(%arg0: i32) -> (i32, i32) {
    %c0_i32 = arith.constant 0 : i32
    %c0_i32_0 = arith.constant 0 : i32
    %c0_i32_1 = arith.constant 0 : i32
    return %c0_i32, %c0_i32_0 : i32, i32
  }
  func.func @transform_5(%arg0: i32) -> (i32, i32) {
    %c0_i32 = arith.constant 0 : i32
    %c0_i32_0 = arith.constant 0 : i32
    %c0_i32_1 = arith.constant 0 : i32
    return %c0_i32, %c0_i32_0 : i32, i32
  }
  func.func @transform_6(%arg0: i32) -> (i32, i32) {
    %c0_i32 = arith.constant 0 : i32
    %c0_i32_0 = arith.constant 0 : i32
    %c0_i32_1 = arith.constant 0 : i32
    return %c0_i32, %c0_i32_0 : i32, i32
  }
  func.func @transform_7(%arg0: i32) -> (i32, i32) {
    %c0_i32 = arith.constant 0 : i32
    %c0_i32_0 = arith.constant 0 : i32
    %c0_i32_1 = arith.constant 0 : i32
    return %c0_i32, %c0_i32_0 : i32, i32
  }
  func.func @transform_8(%arg0: i32) -> (i32, i32) {
    %c0_i32 = arith.constant 0 : i32
    %c0_i32_0 = arith.constant 0 : i32
    %c0_i32_1 = arith.constant 0 : i32
    return %c0_i32, %c0_i32_0 : i32, i32
  }
  func.func @transform_9(%arg0: i32) -> (i32, i32) {
    %c0_i32 = arith.constant 0 : i32
    %c0_i32_0 = arith.constant 0 : i32
    %c0_i32_1 = arith.constant 0 : i32
    return %c0_i32, %c0_i32_0 : i32, i32
  }
  func.func @transform_10(%arg0: i32) -> (i32, i32, i32) {
    %c0_i32 = arith.constant 0 : i32
    %c0_i32_0 = arith.constant 0 : i32
    %c0_i32_1 = arith.constant 0 : i32
    return %arg0, %c0_i32, %c0_i32_0 : i32, i32, i32
  }
}

</mosaic_0001>

<llo_original>
// kernel: vae_neg_elbo.1
$region0: #{vae_neg_elbo.1}
  #allocation0 [shape = 'u32[]', space=smem, size = 0x4, offset = 0x4, fixed_abs, tag = 'smem constant byte address 0x4 - core index']
  #allocation1 [shape = 'u32[144,128]{1,0:T(1,128)}', space=vmem, size = 0x12000, scoped, tag = 'internal scratch']
  #allocation2 [shape = 'f32[112,128]{1,0:T(8,128)}', space=vmem, size = 0xe000, scoped, tag = 'scratch operand']
  %s0 = inlined_call_operand.vmem [shape: f32[224,32], index: 0, kind: input, shape index: {}]
  %s1 = inlined_call_operand.vmem [shape: bf16[224,8], index: 1, kind: input, shape index: {}]
  %s2 = inlined_call_operand.vmem [shape: bf16[32,32], index: 2, kind: input, shape index: {}]
  %s3 = inlined_call_operand.vmem [shape: f32[1,32], index: 3, kind: input, shape index: {}]
  %s4 = inlined_call_operand.vmem [shape: bf16[32,256], index: 4, kind: input, shape index: {}]
  %s5 = inlined_call_operand.vmem [shape: f32[1,256], index: 5, kind: input, shape index: {}]
  %s6 = inlined_call_operand.vmem [shape: bf16[128,32], index: 6, kind: input, shape index: {}]
  %s7 = inlined_call_operand.vmem [shape: f32[1,32], index: 7, kind: input, shape index: {}]
  %s8 = inlined_call_operand.vmem [shape: bf16[32,32], index: 8, kind: input, shape index: {}]
  %s9 = inlined_call_operand.vmem [shape: f32[1,32], index: 9, kind: input, shape index: {}]
  %s10 = inlined_call_operand.vmem [shape: f32[2,8,128], index: 10, kind: output, shape index: {}]
  %s11 = sld [smem:[#allocation0]]
  $region73: #{vae_neg_elbo.1} parent=0
    _
  %s13 = ssub.s32 1, %s11
  %s14 = scalar_select 0, %s13, %s11
  loop: start=0, step=1, limit=4
  $region2: #{vae_neg_elbo.1} parent=0 // loop_pre_header
    _
  $region3: #{vae_neg_elbo.1} parent=0 // loop_header
    %s16 = sphi 0, %s20
    %p17 = scmp.ge.s32.totalorder %s16, 4
    %s26 = sphi 0, %s28
    %s29 = sphi 0, %s26
    %s30 = sphi 0, %s29
    %s46 = sphi 0, %s30
    %s52 = sphi 0, %s54
    %s55 = sphi 0, %s52
    %s56 = sphi 0, %s55
    %s72 = sphi 0, %s56
    %s76 = sphi 0, %s76
    %s78 = sphi 0, %s76
    %s79 = sphi 0, %s78
    %s93 = sphi 0, %s79
    %s97 = sphi 0, %s97
    %s99 = sphi 0, %s97
    %s100 = sphi 0, %s99
    %s114 = sphi 0, %s100
    %s118 = sphi 0, %s118
    %s120 = sphi 0, %s118
    %s121 = sphi 0, %s120
    %s135 = sphi 0, %s121
    %s139 = sphi 0, %s139
    %s141 = sphi 0, %s139
    %s142 = sphi 0, %s141
    %s156 = sphi 0, %s142
    %s160 = sphi 0, %s160
    %s162 = sphi 0, %s160
    %s163 = sphi 0, %s162
    %s177 = sphi 0, %s163
    %s181 = sphi 0, %s181
    %s183 = sphi 0, %s181
    %s184 = sphi 0, %s183
    %s198 = sphi 0, %s184
    %s202 = sphi 0, %s202
    %s204 = sphi 0, %s202
    %s205 = sphi 0, %s204
    %s219 = sphi 0, %s205
    %s223 = sphi 0, %s223
    %s225 = sphi 0, %s223
    %s226 = sphi 0, %s225
    %s240 = sphi 0, %s226
    %s246 = sphi 0, %s248
    %s249 = sphi 0, %s246
    %s250 = sphi 0, %s249
    %s266 = sphi 0, %s250
  $region4: #{vae_neg_elbo.1} parent=0 // loop_header_branch
    %19 = sbr.rel (%p17) target = $region8
  $region5: #{vae_neg_elbo.1} parent=0 // loop_body
    %s21 = ssub.s32 %s16, 1
    %s22 = ssub.s32 %s16, 2
    %s23 = sadd.s32 %s16, 1
    %s24 = ssub.s32 %s16, %s23
    %p25 = scmp.eq.s32.totalorder %s24, 0
    %s27 = sadd.s32 %s26, 1
    %s28 = scalar_select %p25, %s26, %s27
    %p31 = pneg %p25
    %p32 = scmp.eq.s32.totalorder %s16, 1
    %p33 = por %p31, %p32
    %p34 = scmp.ne.s32.totalorder %s26, %s29
    %p35 = scmp.eq.s32.totalorder %s16, 0
    %p36 = por %p34, %p35
    %p37 = scmp.ne.s32.totalorder %s26, %s29
    %p38 = scmp.eq.s32.totalorder %s21, 1
    %p39 = por %p37, %p38
    %p40 = scmp.ne.s32.totalorder %s29, %s30
    %p41 = scmp.eq.s32.totalorder %s21, 0
    %p42 = por %p40, %p41
    %p43 = scmp.ne.s32.totalorder %s29, %s30
    %p44 = scmp.eq.s32.totalorder %s22, 1
    %p45 = por %p43, %p44
    %p47 = scmp.ne.s32.totalorder %s30, %s46
    %p48 = scmp.eq.s32.totalorder %s22, 0
    %p49 = por %p47, %p48
    %s50 = ssub.s32 %s16, %s23
    %p51 = scmp.eq.s32.totalorder %s50, 0
    %s53 = sadd.s32 %s52, 1
    %s54 = scalar_select %p51, %s52, %s53
    %p57 = pneg %p51
    %p58 = scmp.eq.s32.totalorder %s16, 1
    %p59 = por %p57, %p58
    %p60 = scmp.ne.s32.totalorder %s52, %s55
    %p61 = scmp.eq.s32.totalorder %s16, 0
    %p62 = por %p60, %p61
    %p63 = scmp.ne.s32.totalorder %s52, %s55
    %p64 = scmp.eq.s32.totalorder %s21, 1
    %p65 = por %p63, %p64
    %p66 = scmp.ne.s32.totalorder %s55, %s56
    %p67 = scmp.eq.s32.totalorder %s21, 0
    %p68 = por %p66, %p67
    %p69 = scmp.ne.s32.totalorder %s55, %s56
    %p70 = scmp.eq.s32.totalorder %s22, 1
    %p71 = por %p69, %p70
    %p73 = scmp.ne.s32.totalorder %s56, %s72
    %p74 = scmp.eq.s32.totalorder %s22, 0
    %p75 = por %p73, %p74
    %s77 = sadd.s32 %s76, 1
    %p80 = scmp.eq.s32.totalorder %s16, 1
    %p81 = scmp.ne.s32.totalorder %s76, %s78
    %p82 = scmp.eq.s32.totalorder %s16, 0
    %p83 = por %p81, %p82
    %p84 = scmp.ne.s32.totalorder %s76, %s78
    %p85 = scmp.eq.s32.totalorder %s21, 1
    %p86 = por %p84, %p85
    %p87 = scmp.ne.s32.totalorder %s78, %s79
    %p88 = scmp.eq.s32.totalorder %s21, 0
    %p89 = por %p87, %p88
    %p90 = scmp.ne.s32.totalorder %s78, %s79
    %p91 = scmp.eq.s32.totalorder %s22, 1
    %p92 = por %p90, %p91
    %p94 = scmp.ne.s32.totalorder %s79, %s93
    %p95 = scmp.eq.s32.totalorder %s22, 0
    %p96 = por %p94, %p95
    %s98 = sadd.s32 %s97, 1
    %p101 = scmp.eq.s32.totalorder %s16, 1
    %p102 = scmp.ne.s32.totalorder %s97, %s99
    %p103 = scmp.eq.s32.totalorder %s16, 0
    %p104 = por %p102, %p103
    %p105 = scmp.ne.s32.totalorder %s97, %s99
    %p106 = scmp.eq.s32.totalorder %s21, 1
    %p107 = por %p105, %p106
    %p108 = scmp.ne.s32.totalorder %s99, %s100
    %p109 = scmp.eq.s32.totalorder %s21, 0
    %p110 = por %p108, %p109
    %p111 = scmp.ne.s32.totalorder %s99, %s100
    %p112 = scmp.eq.s32.totalorder %s22, 1
    %p113 = por %p111, %p112
    %p115 = scmp.ne.s32.totalorder %s100, %s114
    %p116 = scmp.eq.s32.totalorder %s22, 0
    %p117 = por %p115, %p116
    %s119 = sadd.s32 %s118, 1
    %p122 = scmp.eq.s32.totalorder %s16, 1
    %p123 = scmp.ne.s32.totalorder %s118, %s120
    %p124 = scmp.eq.s32.totalorder %s16, 0
    %p125 = por %p123, %p124
    %p126 = scmp.ne.s32.totalorder %s118, %s120
    %p127 = scmp.eq.s32.totalorder %s21, 1
    %p128 = por %p126, %p127
    %p129 = scmp.ne.s32.totalorder %s120, %s121
    %p130 = scmp.eq.s32.totalorder %s21, 0
    %p131 = por %p129, %p130
    %p132 = scmp.ne.s32.totalorder %s120, %s121
    %p133 = scmp.eq.s32.totalorder %s22, 1
    %p134 = por %p132, %p133
    %p136 = scmp.ne.s32.totalorder %s121, %s135
    %p137 = scmp.eq.s32.totalorder %s22, 0
    %p138 = por %p136, %p137
    %s140 = sadd.s32 %s139, 1
    %p143 = scmp.eq.s32.totalorder %s16, 1
    %p144 = scmp.ne.s32.totalorder %s139, %s141
    %p145 = scmp.eq.s32.totalorder %s16, 0
    %p146 = por %p144, %p145
    %p147 = scmp.ne.s32.totalorder %s139, %s141
    %p148 = scmp.eq.s32.totalorder %s21, 1
    %p149 = por %p147, %p148
    %p150 = scmp.ne.s32.totalorder %s141, %s142
    %p151 = scmp.eq.s32.totalorder %s21, 0
    %p152 = por %p150, %p151
    %p153 = scmp.ne.s32.totalorder %s141, %s142
    %p154 = scmp.eq.s32.totalorder %s22, 1
    %p155 = por %p153, %p154
    %p157 = scmp.ne.s32.totalorder %s142, %s156
    %p158 = scmp.eq.s32.totalorder %s22, 0
    %p159 = por %p157, %p158
    %s161 = sadd.s32 %s160, 1
    %p164 = scmp.eq.s32.totalorder %s16, 1
    %p165 = scmp.ne.s32.totalorder %s160, %s162
    %p166 = scmp.eq.s32.totalorder %s16, 0
    %p167 = por %p165, %p166
    %p168 = scmp.ne.s32.totalorder %s160, %s162
    %p169 = scmp.eq.s32.totalorder %s21, 1
    %p170 = por %p168, %p169
    %p171 = scmp.ne.s32.totalorder %s162, %s163
    %p172 = scmp.eq.s32.totalorder %s21, 0
    %p173 = por %p171, %p172
    %p174 = scmp.ne.s32.totalorder %s162, %s163
    %p175 = scmp.eq.s32.totalorder %s22, 1
    %p176 = por %p174, %p175
    %p178 = scmp.ne.s32.totalorder %s163, %s177
    %p179 = scmp.eq.s32.totalorder %s22, 0
    %p180 = por %p178, %p179
    %s182 = sadd.s32 %s181, 1
    %p185 = scmp.eq.s32.totalorder %s16, 1
    %p186 = scmp.ne.s32.totalorder %s181, %s183
    %p187 = scmp.eq.s32.totalorder %s16, 0
    %p188 = por %p186, %p187
    %p189 = scmp.ne.s32.totalorder %s181, %s183
    %p190 = scmp.eq.s32.totalorder %s21, 1
    %p191 = por %p189, %p190
    %p192 = scmp.ne.s32.totalorder %s183, %s184
    %p193 = scmp.eq.s32.totalorder %s21, 0
    %p194 = por %p192, %p193
    %p195 = scmp.ne.s32.totalorder %s183, %s184
    %p196 = scmp.eq.s32.totalorder %s22, 1
    %p197 = por %p195, %p196
    %p199 = scmp.ne.s32.totalorder %s184, %s198
    %p200 = scmp.eq.s32.totalorder %s22, 0
    %p201 = por %p199, %p200
    %s203 = sadd.s32 %s202, 1
    %p206 = scmp.eq.s32.totalorder %s16, 1
    %p207 = scmp.ne.s32.totalorder %s202, %s204
    %p208 = scmp.eq.s32.totalorder %s16, 0
    %p209 = por %p207, %p208
    %p210 = scmp.ne.s32.totalorder %s202, %s204
    %p211 = scmp.eq.s32.totalorder %s21, 1
    %p212 = por %p210, %p211
    %p213 = scmp.ne.s32.totalorder %s204, %s205
    %p214 = scmp.eq.s32.totalorder %s21, 0
    %p215 = por %p213, %p214
    %p216 = scmp.ne.s32.totalorder %s204, %s205
    %p217 = scmp.eq.s32.totalorder %s22, 1
    %p218 = por %p216, %p217
    %p220 = scmp.ne.s32.totalorder %s205, %s219
    %p221 = scmp.eq.s32.totalorder %s22, 0
    %p222 = por %p220, %p221
    %s224 = sadd.s32 %s223, 1
    %p227 = scmp.eq.s32.totalorder %s16, 1
    %p228 = scmp.ne.s32.totalorder %s223, %s225
    %p229 = scmp.eq.s32.totalorder %s16, 0
    %p230 = por %p228, %p229
    %p231 = scmp.ne.s32.totalorder %s223, %s225
    %p232 = scmp.eq.s32.totalorder %s21, 1
    %p233 = por %p231, %p232
    %p234 = scmp.ne.s32.totalorder %s225, %s226
    %p235 = scmp.eq.s32.totalorder %s21, 0
    %p236 = por %p234, %p235
    %p237 = scmp.ne.s32.totalorder %s225, %s226
    %p238 = scmp.eq.s32.totalorder %s22, 1
    %p239 = por %p237, %p238
    %p241 = scmp.ne.s32.totalorder %s226, %s240
    %p242 = scmp.eq.s32.totalorder %s22, 0
    %p243 = por %p241, %p242
    %s244 = ssub.s32 %s16, %s23
    %p245 = scmp.eq.s32.totalorder %s244, 0
    %s247 = sadd.s32 %s246, 1
    %s248 = scalar_select %p245, %s246, %s247
    %p251 = pneg %p245
    %p252 = scmp.eq.s32.totalorder %s16, 1
    %p253 = por %p251, %p252
    %p254 = scmp.ne.s32.totalorder %s246, %s249
    %p255 = scmp.eq.s32.totalorder %s16, 0
    %p256 = por %p254, %p255
    %p257 = scmp.ne.s32.totalorder %s246, %s249
    %p258 = scmp.eq.s32.totalorder %s21, 1
    %p259 = por %p257, %p258
    %p260 = scmp.ne.s32.totalorder %s249, %s250
    %p261 = scmp.eq.s32.totalorder %s21, 0
    %p262 = por %p260, %p261
    %p263 = scmp.ne.s32.totalorder %s249, %s250
    %p264 = scmp.eq.s32.totalorder %s22, 1
    %p265 = por %p263, %p264
    %p267 = scmp.ne.s32.totalorder %s250, %s266
    %p268 = scmp.eq.s32.totalorder %s22, 0
    %p269 = por %p267, %p268
    %p270 = scmp.le.s32.totalorder 1, %s16
    %p271 = scmp.lt.s32.totalorder %s16, 3
    %p272 = pnand %p270, %p271
    %p273 = pneg %p272
    // Predicated region
    $region9: #{vae_neg_elbo.1} parent=5 // pred_check
      _
    $region10: #{vae_neg_elbo.1} parent=5 // pred_check_branch
      %275 = sbr.rel (%p272) target = $region12
    $region11: #{vae_neg_elbo.1} parent=5 // pred_region
      %s276 = ssub.s32 %s16, 1
      // Predicated region
      $region13: #{vae_neg_elbo.1} parent=11 // pred_check
        %p277 = pneg %p89
      $region14: #{vae_neg_elbo.1} parent=11 // pred_check_branch
        %279 = sbr.rel (%p277) target = $region16
      $region15: #{vae_neg_elbo.1} parent=11 // pred_region
        _
      $region16: #{vae_neg_elbo.1} parent=11 // pred_fallthru
        _
      // Predicated region
      $region17: #{vae_neg_elbo.1} parent=11 // pred_check
        %p280 = pneg %p110
      $region18: #{vae_neg_elbo.1} parent=11 // pred_check_branch
        %282 = sbr.rel (%p280) target = $region20
      $region19: #{vae_neg_elbo.1} parent=11 // pred_region
        _
      $region20: #{vae_neg_elbo.1} parent=11 // pred_fallthru
        _
      // Predicated region
      $region21: #{vae_neg_elbo.1} parent=11 // pred_check
        %p283 = pneg %p131
      $region22: #{vae_neg_elbo.1} parent=11 // pred_check_branch
        %285 = sbr.rel (%p283) target = $region24
      $region23: #{vae_neg_elbo.1} parent=11 // pred_region
        _
      $region24: #{vae_neg_elbo.1} parent=11 // pred_fallthru
        _
      // Predicated region
      $region25: #{vae_neg_elbo.1} parent=11 // pred_check
        %p286 = pneg %p152
      $region26: #{vae_neg_elbo.1} parent=11 // pred_check_branch
        %288 = sbr.rel (%p286) target = $region28
      $region27: #{vae_neg_elbo.1} parent=11 // pred_region
        _
      $region28: #{vae_neg_elbo.1} parent=11 // pred_fallthru
        _
      // Predicated region
      $region29: #{vae_neg_elbo.1} parent=11 // pred_check
        %p289 = pneg %p173
      $region30: #{vae_neg_elbo.1} parent=11 // pred_check_branch
        %291 = sbr.rel (%p289) target = $region32
      $region31: #{vae_neg_elbo.1} parent=11 // pred_region
        _
      $region32: #{vae_neg_elbo.1} parent=11 // pred_fallthru
        _
      // Predicated region
      $region33: #{vae_neg_elbo.1} parent=11 // pred_check
        %p292 = pneg %p194
      $region34: #{vae_neg_elbo.1} parent=11 // pred_check_branch
        %294 = sbr.rel (%p292) target = $region36
      $region35: #{vae_neg_elbo.1} parent=11 // pred_region
        _
      $region36: #{vae_neg_elbo.1} parent=11 // pred_fallthru
        _
      // Predicated region
      $region37: #{vae_neg_elbo.1} parent=11 // pred_check
        %p295 = pneg %p215
      $region38: #{vae_neg_elbo.1} parent=11 // pred_check_branch
        %297 = sbr.rel (%p295) target = $region40
      $region39: #{vae_neg_elbo.1} parent=11 // pred_region
        _
      $region40: #{vae_neg_elbo.1} parent=11 // pred_fallthru
        _
      // Predicated region
      $region41: #{vae_neg_elbo.1} parent=11 // pred_check
        %p298 = pneg %p236
      $region42: #{vae_neg_elbo.1} parent=11 // pred_check_branch
        %300 = sbr.rel (%p298) target = $region44
      $region43: #{vae_neg_elbo.1} parent=11 // pred_region
        _
      $region44: #{vae_neg_elbo.1} parent=11 // pred_fallthru
        _
    $region12: #{vae_neg_elbo.1} parent=5 // pred_fallthru
      _
    %p301 = scmp.lt.s32.totalorder %s16, 2
    // Predicated region
    $region45: #{vae_neg_elbo.1} parent=5 // pred_check
      %p302 = pneg %p301
    $region46: #{vae_neg_elbo.1} parent=5 // pred_check_branch
      %304 = sbr.rel (%p302) target = $region48
    $region47: #{vae_neg_elbo.1} parent=5 // pred_region
      // Predicated region
      $region49: #{vae_neg_elbo.1} parent=47 // pred_check
        %p305 = pneg %p36
      $region50: #{vae_neg_elbo.1} parent=47 // pred_check_branch
        %307 = sbr.rel (%p305) target = $region52
      $region51: #{vae_neg_elbo.1} parent=47 // pred_region
        %s308 = smul.u32 14, %s16
        %p309 = scmp.lt.s32.totalorder %s308, 27
        %s310 = scalar_select %p309, %s308, 27
        %s311 = smul.addr %s310, 8
        %s312 = scalar_lea.vmem %s0, %s311
        %s313 = smul.u32 14, %s16
      $region52: #{vae_neg_elbo.1} parent=47 // pred_fallthru
        _
      // Predicated region
      $region53: #{vae_neg_elbo.1} parent=47 // pred_check
        %p314 = pneg %p62
      $region54: #{vae_neg_elbo.1} parent=47 // pred_check_branch
        %316 = sbr.rel (%p314) target = $region56
      $region55: #{vae_neg_elbo.1} parent=47 // pred_region
        %s317 = smul.u32 14, %s16
        %p318 = scmp.lt.s32.totalorder %s317, 27
        %s319 = scalar_select %p318, %s317, 27
        %s320 = smul.addr %s319, 4
        %s321 = scalar_lea.vmem %s1, %s320
        %s322 = smul.u32 14, %s16
      $region56: #{vae_neg_elbo.1} parent=47 // pred_fallthru
        _
    $region48: #{vae_neg_elbo.1} parent=5 // pred_fallthru
      _
    %p323 = scmp.le.s32.totalorder 1, %s16
    %p324 = scmp.lt.s32.totalorder %s16, 3
    %p325 = pnand %p323, %p324
    %p326 = pneg %p325
    // Predicated region
    $region57: #{vae_neg_elbo.1} parent=5 // pred_check
      _
    $region58: #{vae_neg_elbo.1} parent=5 // pred_check_branch
      %328 = sbr.rel (%p325) target = $region60
    $region59: #{vae_neg_elbo.1} parent=5 // pred_region
      %s329 = ssub.s32 %s16, 1
      %s330 = smul.u32 14, %s21
      %p331 = scmp.lt.s32.totalorder %s330, 27
      %s332 = scalar_select %p331, %s330, 27
      %s333 = smul.addr %s332, 8
      %s334 = scalar_lea.vmem %s0, %s333
      %p335 = pneg %p42
      %p336 = pneg %p39
      %s337 = smul.u32 14, %s21
      %p338 = scmp.lt.s32.totalorder %s337, 27
      %s339 = scalar_select %p338, %s337, 27
      %s340 = smul.addr %s339, 4
      %s341 = scalar_lea.vmem %s1, %s340
      %p342 = pneg %p68
      %p343 = pneg %p65
      %p344 = pneg %p89
      %p345 = pneg %p86
      %p346 = pneg %p110
      %p347 = pneg %p107
      %p348 = pneg %p131
      %p349 = pneg %p128
      %p350 = pneg %p152
      %p351 = pneg %p149
      %p352 = pneg %p173
      %p353 = pneg %p170
      %p354 = pneg %p194
      %p355 = pneg %p191
      %p356 = pneg %p215
      %p357 = pneg %p212
      %p358 = pneg %p236
      %p359 = pneg %p233
      %p360 = pneg %p262
      %p361 = pneg %p259
      %p362 = scmp.lt.s32.totalorder %s21, 1
      %s363 = scalar_select %p362, %s21, 1
      %s364 = smul.addr %s363, 8
      %s365 = scalar_lea.vmem %s10, %s364
      %s366 = smul.u32 14, %s21
      %p367 = scmp.lt.s32.totalorder %s366, 27
      %s368 = scalar_select %p367, %s366, 27
      %s369 = smul.addr %s368, 8
      %s370 = scalar_lea.vmem %s0, %s369
      %s371 = smul.u32 14, %s21
      %s372 = smul.u32 14, %s21
      %p373 = scmp.lt.s32.totalorder %s372, 27
      %s374 = scalar_select %p373, %s372, 27
      %s375 = smul.addr %s374, 4
      %s376 = scalar_lea.vmem %s1, %s375
      %s377 = smul.u32 14, %s21
      %p378 = scmp.lt.s32.totalorder %s21, 1
      %s379 = scalar_select %p378, %s21, 1
      %s380 = smul.addr %s379, 8
      %s381 = scalar_lea.vmem %s10, %s380
      %v383 = vld [vmem:[%s370] sm:$0xff]
      %v384 = vld [vmem:[%s370 + $0x8] sm:$0xff]
      %v385 = vld [vmem:[%s370 + $0x10] sm:$0xff]
      %v386 = vld [vmem:[%s370 + $0x18] sm:$0xff]
      %v387 = vld [vmem:[%s370 + $0x20] sm:$0xff]
      %v388 = vld [vmem:[%s370 + $0x28] sm:$0xff]
      %v389 = vld [vmem:[%s370 + $0x30] sm:$0xff]
      %v390 = vld [vmem:[%s370 + $0x38] sm:$0xff]
      %v391 = vld [vmem:[%s370 + $0x40] sm:$0xff]
      %v392 = vld [vmem:[%s370 + $0x48] sm:$0xff]
      %v393 = vld [vmem:[%s370 + $0x50] sm:$0xff]
      %v394 = vld [vmem:[%s370 + $0x58] sm:$0xff]
      %v395 = vld [vmem:[%s370 + $0x60] sm:$0xff]
      %v396 = vld [vmem:[%s370 + $0x68] sm:$0xff]
      %v397 = vpack.c.bf16 %v384, %v383
      %v398 = vpack.c.bf16 %v386, %v385
      %v399 = vpack.c.bf16 %v388, %v387
      %v400 = vpack.c.bf16 %v390, %v389
      %v401 = vpack.c.bf16 %v392, %v391
      %v402 = vpack.c.bf16 %v394, %v393
      %v403 = vpack.c.bf16 %v396, %v395
      %v404 = vld [vmem:[%s2] sm:$0xf]
      %v405 = vld [vmem:[%s2 + $0x4] sm:$0xf]
      %v406 = vld [vmem:[%s2 + $0x8] sm:$0xf]
      %v407 = vld [vmem:[%s2 + $0xc] sm:$0xf]
      %v408 = vld [vmem:[%s3] sm:$0x1]
      %v410 = vlaneseq
      %v411 = vshrl.u32 %v410, 7
      %v412 = vsub.s32 0, %v411
      %v413 = vrot.slane %v408, %v412
      %v419 = vunpack.c.l.b16 %v404
      %v420 = vunpack.c.l.b16 %v405
      %v421 = vunpack.c.l.b16 %v406
      %v422 = vunpack.c.l.b16 %v407
      %v423 = vpack.c.b16 %v420, %v419
      %v424 = vpack.c.b16 %v422, %v421
      %vm427 = vcmask 261120
      %v429 = vsel %vm427, %v397, 0
      %v432 = vsel %vm427, %v398, 0
      %v435 = vsel %vm427, %v399, 0
      %v438 = vsel %vm427, %v400, 0
      %v441 = vsel %vm427, %v401, 0
      %v444 = vsel %vm427, %v402, 0
      %v447 = vsel %vm427, %v403, 0
      %449 = vmatprep.subr.bf16.mxu0 0
      %450 = vmatpush1.bf16.msra.mxu0 0
      %451 = vmatprep.subr.bf16.mxu0 0
      %452 = vmatpush1.bf16.msra.mxu0 0
      %453 = vmatprep.subr.bf16.mxu0 0
      %454 = vmatpush1.bf16.msra.mxu0 0
      %455 = vmatprep.subr.bf16.mxu0 0
      %456 = vmatpush1.bf16.msra.mxu0 0
      %457 = vmatprep.subr.bf16.mxu0 0
      %458 = vmatpush1.bf16.msra.mxu0 0
      %459 = vmatprep.subr.bf16.mxu0 0
      %460 = vmatpush1.bf16.msra.mxu0 0
      %461 = vmatprep.subr.bf16.mxu0 0
      %462 = vmatpush1.bf16.msra.mxu0 %v424
      %463 = vmatprep.subr.bf16.mxu0 0
      %464 = vmatpush1.bf16.msra.mxu0 %v423
      %465 = vmatprep.subr.bf16.mxu0 0
      %466 = vmatpush2.bf16.msra.mxu0 0
      %467 = vmatprep.subr.bf16.mxu0 0
      %468 = vmatpush2.bf16.msra.mxu0 0
      %469 = vmatprep.subr.bf16.mxu0 0
      %470 = vmatpush2.bf16.msra.mxu0 0
      %471 = vmatprep.subr.bf16.mxu0 0
      %472 = vmatpush2.bf16.msra.mxu0 0
      %473 = vmatprep.subr.bf16.mxu0 0
      %474 = vmatpush2.bf16.msra.mxu0 0
      %475 = vmatprep.subr.bf16.mxu0 0
      %476 = vmatpush2.bf16.msra.mxu0 0
      %477 = vmatprep.subr.bf16.mxu0 0
      %478 = vmatpush2.bf16.msra.mxu0 0
      %479 = vmatprep.subr.bf16.mxu0 0
      %480 = vmatpush2.bf16.msra.mxu0 0
      %481 = vmatprep.mubr.bf16.mxu0 0
      %482 = vmatmul.mubr.bf16.gmra.mxu0 %v429
      %v483 = vpop.f32.mrf.mxu0
      %v484 = vadd.f32 %v413, %v483
      %v485 = vpop.f32.mrf.mxu0
      %v486 = vpop.f32.mrf.mxu0
      %v487 = vadd.f32 %v413, %v486
      %v488 = vpop.f32.mrf.mxu0
      %489 = vmatprep.mubr.bf16.mxu0 0
      %490 = vmatmul.mubr.bf16.gmra.mxu0 %v432
      %v491 = vpop.f32.mrf.mxu0
      %v492 = vadd.f32 %v413, %v491
      %v493 = vpop.f32.mrf.mxu0
      %v494 = vpop.f32.mrf.mxu0
      %v495 = vadd.f32 %v413, %v494
      %v496 = vpop.f32.mrf.mxu0
      %497 = vmatprep.mubr.bf16.mxu0 0
      %498 = vmatmul.mubr.bf16.gmra.mxu0 %v435
      %v499 = vpop.f32.mrf.mxu0
      %v500 = vadd.f32 %v413, %v499
      %v501 = vpop.f32.mrf.mxu0
      %v502 = vpop.f32.mrf.mxu0
      %v503 = vadd.f32 %v413, %v502
      %v504 = vpop.f32.mrf.mxu0
      %505 = vmatprep.mubr.bf16.mxu0 0
      %506 = vmatmul.mubr.bf16.gmra.mxu0 %v438
      %v507 = vpop.f32.mrf.mxu0
      %v508 = vadd.f32 %v413, %v507
      %v509 = vpop.f32.mrf.mxu0
      %v510 = vpop.f32.mrf.mxu0
      %v511 = vadd.f32 %v413, %v510
      %v512 = vpop.f32.mrf.mxu0
      %513 = vmatprep.mubr.bf16.mxu0 0
      %514 = vmatmul.mubr.bf16.gmra.mxu0 %v441
      %v515 = vpop.f32.mrf.mxu0
      %v516 = vadd.f32 %v413, %v515
      %v517 = vpop.f32.mrf.mxu0
      %v518 = vpop.f32.mrf.mxu0
      %v519 = vadd.f32 %v413, %v518
      %v520 = vpop.f32.mrf.mxu0
      %521 = vmatprep.mubr.bf16.mxu0 0
      %522 = vmatmul.mubr.bf16.gmra.mxu0 %v444
      %v523 = vpop.f32.mrf.mxu0
      %v524 = vadd.f32 %v413, %v523
      %v525 = vpop.f32.mrf.mxu0
      %v526 = vpop.f32.mrf.mxu0
      %v527 = vadd.f32 %v413, %v526
      %v528 = vpop.f32.mrf.mxu0
      %529 = vmatprep.mubr.bf16.mxu0 0
      %530 = vmatmul.mubr.bf16.gmra.mxu0 %v447
      %v531 = vpop.f32.mrf.mxu0
      %v532 = vadd.f32 %v413, %v531
      %v533 = vpop.f32.mrf.mxu0
      %v534 = vpop.f32.mrf.mxu0
      %v535 = vadd.f32 %v413, %v534
      %v536 = vpop.f32.mrf.mxu0
      %537 = vdwg.mxu0
      %v538 = vmax.f32 %v484, 0.0
      %v539 = vmax.f32 %v487, 0.0
      %v540 = vmax.f32 %v492, 0.0
      %v541 = vmax.f32 %v495, 0.0
      %v542 = vmax.f32 %v500, 0.0
      %v543 = vmax.f32 %v503, 0.0
      %v544 = vmax.f32 %v508, 0.0
      %v545 = vmax.f32 %v511, 0.0
      %v546 = vmax.f32 %v516, 0.0
      %v547 = vmax.f32 %v519, 0.0
      %v548 = vmax.f32 %v524, 0.0
      %v549 = vmax.f32 %v527, 0.0
      %v550 = vmax.f32 %v532, 0.0
      %v551 = vmax.f32 %v535, 0.0
      %v552 = vpack.c.bf16 %v539, %v538
      %v553 = vpack.c.bf16 %v541, %v540
      %v554 = vpack.c.bf16 %v543, %v542
      %v555 = vpack.c.bf16 %v545, %v544
      %v556 = vpack.c.bf16 %v547, %v546
      %v557 = vpack.c.bf16 %v549, %v548
      %v558 = vpack.c.bf16 %v551, %v550
      %v559 = vld [vmem:[%s4] sm:$0xff]
      %v560 = vld [vmem:[%s4 + $0x8] sm:$0xff]
      %v561 = vld [vmem:[%s4 + $0x10] sm:$0xff]
      %v562 = vld [vmem:[%s4 + $0x18] sm:$0xff]
      %v563 = vld [vmem:[%s5] sm:$0x3]
      %v565 = vlaneseq
      %v566 = vshrl.u32 %v565, 7
      %v567 = vsub.s32 0, %v566
      %v568 = vrot.slane %v563, %v567
      %v569 = vlaneseq
      %v570 = vshrl.u32 %v569, 7
      %v571 = vsub.s32 1, %v570
      %v572 = vrot.slane %v563, %v571
      %v579 = vunpack.c.l.b16 %v559
      %v580 = vunpack.c.h.b16 %v559
      %v581 = vunpack.c.l.b16 %v560
      %v582 = vunpack.c.h.b16 %v560
      %v583 = vunpack.c.l.b16 %v561
      %v584 = vunpack.c.h.b16 %v561
      %v585 = vunpack.c.l.b16 %v562
      %v586 = vunpack.c.h.b16 %v562
      %v587 = vpack.c.b16 %v581, %v579
      %v588 = vpack.c.b16 %v582, %v580
      %v589 = vpack.c.b16 %v585, %v583
      %v590 = vpack.c.b16 %v586, %v584
      %v596 = vsel %vm427, %v552, 0
      %v599 = vsel %vm427, %v553, 0
      %v602 = vsel %vm427, %v554, 0
      %v605 = vsel %vm427, %v555, 0
      %v608 = vsel %vm427, %v556, 0
      %v611 = vsel %vm427, %v557, 0
      %v614 = vsel %vm427, %v558, 0
      %616 = vmatprep.subr.bf16.mxu0 0
      %617 = vmatpush1.bf16.msra.mxu0 0
      %618 = vmatprep.subr.bf16.mxu0 0
      %619 = vmatpush1.bf16.msra.mxu0 0
      %620 = vmatprep.subr.bf16.mxu0 0
      %621 = vmatpush1.bf16.msra.mxu0 0
      %622 = vmatprep.subr.bf16.mxu0 0
      %623 = vmatpush1.bf16.msra.mxu0 0
      %624 = vmatprep.subr.bf16.mxu0 0
      %625 = vmatpush1.bf16.msra.mxu0 0
      %626 = vmatprep.subr.bf16.mxu0 0
      %627 = vmatpush1.bf16.msra.mxu0 0
      %628 = vmatprep.subr.bf16.mxu0 %v590
      %629 = vmatpush1.bf16.msra.mxu0 %v589
      %630 = vmatprep.subr.bf16.mxu0 %v588
      %631 = vmatpush1.bf16.msra.mxu0 %v587
      %632 = vmatprep.subr.bf16.mxu0 0
      %633 = vmatpush2.bf16.msra.mxu0 0
      %634 = vmatprep.subr.bf16.mxu0 0
      %635 = vmatpush2.bf16.msra.mxu0 0
      %636 = vmatprep.subr.bf16.mxu0 0
      %637 = vmatpush2.bf16.msra.mxu0 0
      %638 = vmatprep.subr.bf16.mxu0 0
      %639 = vmatpush2.bf16.msra.mxu0 0
      %640 = vmatprep.subr.bf16.mxu0 0
      %641 = vmatpush2.bf16.msra.mxu0 0
      %642 = vmatprep.subr.bf16.mxu0 0
      %643 = vmatpush2.bf16.msra.mxu0 0
      %644 = vmatprep.subr.bf16.mxu0 0
      %645 = vmatpush2.bf16.msra.mxu0 0
      %646 = vmatprep.subr.bf16.mxu0 0
      %647 = vmatpush2.bf16.msra.mxu0 0
      %648 = vmatprep.mubr.bf16.mxu0 0
      %649 = vmatmul.mubr.bf16.gmra.mxu0 %v596
      %v650 = vpop.f32.mrf.mxu0
      %v651 = vadd.f32 %v568, %v650
      %v652 = vpop.f32.mrf.mxu0
      %v653 = vadd.f32 %v572, %v652
      %v654 = vpop.f32.mrf.mxu0
      %v655 = vadd.f32 %v568, %v654
      %v656 = vpop.f32.mrf.mxu0
      %v657 = vadd.f32 %v572, %v656
      %658 = vmatprep.mubr.bf16.mxu0 0
      %659 = vmatmul.mubr.bf16.gmra.mxu0 %v599
      %v660 = vpop.f32.mrf.mxu0
      %v661 = vadd.f32 %v568, %v660
      %v662 = vpop.f32.mrf.mxu0
      %v663 = vadd.f32 %v572, %v662
      %v664 = vpop.f32.mrf.mxu0
      %v665 = vadd.f32 %v568, %v664
      %v666 = vpop.f32.mrf.mxu0
      %v667 = vadd.f32 %v572, %v666
      %668 = vmatprep.mubr.bf16.mxu0 0
      %669 = vmatmul.mubr.bf16.gmra.mxu0 %v602
      %v670 = vpop.f32.mrf.mxu0
      %v671 = vadd.f32 %v568, %v670
      %v672 = vpop.f32.mrf.mxu0
      %v673 = vadd.f32 %v572, %v672
      %v674 = vpop.f32.mrf.mxu0
      %v675 = vadd.f32 %v568, %v674
      %v676 = vpop.f32.mrf.mxu0
      %v677 = vadd.f32 %v572, %v676
      %678 = vmatprep.mubr.bf16.mxu0 0
      %679 = vmatmul.mubr.bf16.gmra.mxu0 %v605
      %v680 = vpop.f32.mrf.mxu0
      %v681 = vadd.f32 %v568, %v680
      %v682 = vpop.f32.mrf.mxu0
      %v683 = vadd.f32 %v572, %v682
      %v684 = vpop.f32.mrf.mxu0
      %v685 = vadd.f32 %v568, %v684
      %v686 = vpop.f32.mrf.mxu0
      %v687 = vadd.f32 %v572, %v686
      %688 = vmatprep.mubr.bf16.mxu0 0
      %689 = vmatmul.mubr.bf16.gmra.mxu0 %v608
      %v690 = vpop.f32.mrf.mxu0
      %v691 = vadd.f32 %v568, %v690
      %v692 = vpop.f32.mrf.mxu0
      %v693 = vadd.f32 %v572, %v692
      %v694 = vpop.f32.mrf.mxu0
      %v695 = vadd.f32 %v568, %v694
      %v696 = vpop.f32.mrf.mxu0
      %v697 = vadd.f32 %v572, %v696
      %698 = vmatprep.mubr.bf16.mxu0 0
      %699 = vmatmul.mubr.bf16.gmra.mxu0 %v611
      %v700 = vpop.f32.mrf.mxu0
      %v701 = vadd.f32 %v568, %v700
      %v702 = vpop.f32.mrf.mxu0
      %v703 = vadd.f32 %v572, %v702
      %v704 = vpop.f32.mrf.mxu0
      %v705 = vadd.f32 %v568, %v704
      %v706 = vpop.f32.mrf.mxu0
      %v707 = vadd.f32 %v572, %v706
      %708 = vmatprep.mubr.bf16.mxu0 0
      %709 = vmatmul.mubr.bf16.gmra.mxu0 %v614
      %v710 = vpop.f32.mrf.mxu0
      %v711 = vadd.f32 %v568, %v710
      %v712 = vpop.f32.mrf.mxu0
      %v713 = vadd.f32 %v572, %v712
      %v714 = vpop.f32.mrf.mxu0
      %v715 = vadd.f32 %v568, %v714
      %v716 = vpop.f32.mrf.mxu0
      %v717 = vadd.f32 %v572, %v716
      %718 = vdwg.mxu0
      %v719 = vmul.f32 %v653, 1.442695
      %v720 = vpow.pop %v719
      %v721 = vmul.f32 %v657, 1.442695
      %v722 = vpow.pop %v721
      %v723 = vmul.f32 %v663, 1.442695
      %v724 = vpow.pop %v723
      %v725 = vmul.f32 %v667, 1.442695
      %v726 = vpow.pop %v725
      %v727 = vmul.f32 %v673, 1.442695
      %v728 = vpow.pop %v727
      %v729 = vmul.f32 %v677, 1.442695
      %v730 = vpow.pop %v729
      %v731 = vmul.f32 %v683, 1.442695
      %v732 = vpow.pop %v731
      %v733 = vmul.f32 %v687, 1.442695
      %v734 = vpow.pop %v733
      %v735 = vmul.f32 %v693, 1.442695
      %v736 = vpow.pop %v735
      %v737 = vmul.f32 %v697, 1.442695
      %v738 = vpow.pop %v737
      %v739 = vmul.f32 %v703, 1.442695
      %v740 = vpow.pop %v739
      %v741 = vmul.f32 %v707, 1.442695
      %v742 = vpow.pop %v741
      %v743 = vmul.f32 %v713, 1.442695
      %v744 = vpow.pop %v743
      %v745 = vmul.f32 %v717, 1.442695
      %v746 = vpow.pop %v745
      %v747 = vmul.f32 %v720, %v720
      %v748 = vmul.f32 %v722, %v722
      %v749 = vmul.f32 %v724, %v724
      %v750 = vmul.f32 %v726, %v726
      %v751 = vmul.f32 %v728, %v728
      %v752 = vmul.f32 %v730, %v730
      %v753 = vmul.f32 %v732, %v732
      %v754 = vmul.f32 %v734, %v734
      %v755 = vmul.f32 %v736, %v736
      %v756 = vmul.f32 %v738, %v738
      %v757 = vmul.f32 %v740, %v740
      %v758 = vmul.f32 %v742, %v742
      %v759 = vmul.f32 %v744, %v744
      %v760 = vmul.f32 %v746, %v746
      %761 = vst [vmem:[#allocation2] sm:$0xff] 0.0
      %762 = vst [vmem:[#allocation2 + $0x8] sm:$0xff] 0.0
      %763 = vst [vmem:[#allocation2 + $0x10] sm:$0xff] 0.0
      %764 = vst [vmem:[#allocation2 + $0x18] sm:$0xff] 0.0
      %765 = vst [vmem:[#allocation2 + $0x20] sm:$0xff] 0.0
      %766 = vst [vmem:[#allocation2 + $0x28] sm:$0xff] 0.0
      %767 = vst [vmem:[#allocation2 + $0x30] sm:$0xff] 0.0
      %768 = vst [vmem:[#allocation2 + $0x38] sm:$0xff] 0.0
      %769 = vst [vmem:[#allocation2 + $0x40] sm:$0xff] 0.0
      %770 = vst [vmem:[#allocation2 + $0x48] sm:$0xff] 0.0
      %771 = vst [vmem:[#allocation2 + $0x50] sm:$0xff] 0.0
      %772 = vst [vmem:[#allocation2 + $0x58] sm:$0xff] 0.0
      %773 = vst [vmem:[#allocation2 + $0x60] sm:$0xff] 0.0
      %774 = vst [vmem:[#allocation2 + $0x68] sm:$0xff] 0.0
      %v775 = vld [vmem:[%s376] sm:$0xf]
      %v776 = vld [vmem:[%s376 + $0x4] sm:$0xf]
      %v777 = vld [vmem:[%s376 + $0x8] sm:$0xf]
      %v778 = vld [vmem:[%s376 + $0xc] sm:$0xf]
      %v779 = vld [vmem:[%s376 + $0x10] sm:$0xf]
      %v780 = vld [vmem:[%s376 + $0x14] sm:$0xf]
      %v781 = vld [vmem:[%s376 + $0x18] sm:$0xf]
      %v782 = vld [vmem:[%s376 + $0x1c] sm:$0xf]
      %v783 = vld [vmem:[%s376 + $0x20] sm:$0xf]
      %v784 = vld [vmem:[%s376 + $0x24] sm:$0xf]
      %v785 = vld [vmem:[%s376 + $0x28] sm:$0xf]
      %v786 = vld [vmem:[%s376 + $0x2c] sm:$0xf]
      %v787 = vld [vmem:[%s376 + $0x30] sm:$0xf]
      %v788 = vld [vmem:[%s376 + $0x34] sm:$0xf]
      %v789 = vunpack.c.l.bf16 %v775
      %v790 = vunpack.c.l.bf16 %v776
      %v791 = vunpack.c.l.bf16 %v777
      %v792 = vunpack.c.l.bf16 %v778
      %v793 = vunpack.c.l.bf16 %v779
      %v794 = vunpack.c.l.bf16 %v780
      %v795 = vunpack.c.l.bf16 %v781
      %v796 = vunpack.c.l.bf16 %v782
      %v797 = vunpack.c.l.bf16 %v783
      %v798 = vunpack.c.l.bf16 %v784
      %v799 = vunpack.c.l.bf16 %v785
      %v800 = vunpack.c.l.bf16 %v786
      %v801 = vunpack.c.l.bf16 %v787
      %v802 = vunpack.c.l.bf16 %v788
      %vm803 = vcmask 64512
      %804 = vst.msk [vmem:[#allocation2] sm:$0xff] %vm803, %v789
      %805 = vst.msk [vmem:[#allocation2 + $0x8] sm:$0xff] %vm803, %v790
      %806 = vst.msk [vmem:[#allocation2 + $0x10] sm:$0xff] %vm803, %v791
      %807 = vst.msk [vmem:[#allocation2 + $0x18] sm:$0xff] %vm803, %v792
      %808 = vst.msk [vmem:[#allocation2 + $0x20] sm:$0xff] %vm803, %v793
      %809 = vst.msk [vmem:[#allocation2 + $0x28] sm:$0xff] %vm803, %v794
      %810 = vst.msk [vmem:[#allocation2 + $0x30] sm:$0xff] %vm803, %v795
      %811 = vst.msk [vmem:[#allocation2 + $0x38] sm:$0xff] %vm803, %v796
      %812 = vst.msk [vmem:[#allocation2 + $0x40] sm:$0xff] %vm803, %v797
      %813 = vst.msk [vmem:[#allocation2 + $0x48] sm:$0xff] %vm803, %v798
      %814 = vst.msk [vmem:[#allocation2 + $0x50] sm:$0xff] %vm803, %v799
      %815 = vst.msk [vmem:[#allocation2 + $0x58] sm:$0xff] %vm803, %v800
      %816 = vst.msk [vmem:[#allocation2 + $0x60] sm:$0xff] %vm803, %v801
      %817 = vst.msk [vmem:[#allocation2 + $0x68] sm:$0xff] %vm803, %v802
      %v818 = vld [vmem:[#allocation2] sm:$0xff]
      %v819 = vld [vmem:[#allocation2 + $0x8] sm:$0xff]
      %v820 = vld [vmem:[#allocation2 + $0x10] sm:$0xff]
      %v821 = vld [vmem:[#allocation2 + $0x18] sm:$0xff]
      %v822 = vld [vmem:[#allocation2 + $0x20] sm:$0xff]
      %v823 = vld [vmem:[#allocation2 + $0x28] sm:$0xff]
      %v824 = vld [vmem:[#allocation2 + $0x30] sm:$0xff]
      %v825 = vld [vmem:[#allocation2 + $0x38] sm:$0xff]
      %v826 = vld [vmem:[#allocation2 + $0x40] sm:$0xff]
      %v827 = vld [vmem:[#allocation2 + $0x48] sm:$0xff]
      %v828 = vld [vmem:[#allocation2 + $0x50] sm:$0xff]
      %v829 = vld [vmem:[#allocation2 + $0x58] sm:$0xff]
      %v830 = vld [vmem:[#allocation2 + $0x60] sm:$0xff]
      %v831 = vld [vmem:[#allocation2 + $0x68] sm:$0xff]
      %v832 = vmul.f32 %v720, %v818
      %v833 = vmul.f32 %v722, %v819
      %v834 = vmul.f32 %v724, %v820
      %v835 = vmul.f32 %v726, %v821
      %v836 = vmul.f32 %v728, %v822
      %v837 = vmul.f32 %v730, %v823
      %v838 = vmul.f32 %v732, %v824
      %v839 = vmul.f32 %v734, %v825
      %v840 = vmul.f32 %v736, %v826
      %v841 = vmul.f32 %v738, %v827
      %v842 = vmul.f32 %v740, %v828
      %v843 = vmul.f32 %v742, %v829
      %v844 = vmul.f32 %v744, %v830
      %v845 = vmul.f32 %v746, %v831
      %v846 = vadd.f32 %v651, %v832
      %v847 = vadd.f32 %v655, %v833
      %v848 = vadd.f32 %v661, %v834
      %v849 = vadd.f32 %v665, %v835
      %v850 = vadd.f32 %v671, %v836
      %v851 = vadd.f32 %v675, %v837
      %v852 = vadd.f32 %v681, %v838
      %v853 = vadd.f32 %v685, %v839
      %v854 = vadd.f32 %v691, %v840
      %v855 = vadd.f32 %v695, %v841
      %v856 = vadd.f32 %v701, %v842
      %v857 = vadd.f32 %v705, %v843
      %v858 = vadd.f32 %v711, %v844
      %v859 = vadd.f32 %v715, %v845
      %v860 = vpack.c.bf16 %v847, %v846
      %v861 = vpack.c.bf16 %v849, %v848
      %v862 = vpack.c.bf16 %v851, %v850
      %v863 = vpack.c.bf16 %v853, %v852
      %v864 = vpack.c.bf16 %v855, %v854
      %v865 = vpack.c.bf16 %v857, %v856
      %v866 = vpack.c.bf16 %v859, %v858
      %v867 = vld [vmem:[%s6] sm:$0xf]
      %v868 = vld [vmem:[%s6 + $0x4] sm:$0xf]
      %v869 = vld [vmem:[%s6 + $0x8] sm:$0xf]
      %v870 = vld [vmem:[%s6 + $0xc] sm:$0xf]
      %v871 = vld [vmem:[%s6 + $0x10] sm:$0xf]
      %v872 = vld [vmem:[%s6 + $0x14] sm:$0xf]
      %v873 = vld [vmem:[%s6 + $0x18] sm:$0xf]
      %v874 = vld [vmem:[%s6 + $0x1c] sm:$0xf]
      %v875 = vld [vmem:[%s6 + $0x20] sm:$0xf]
      %v876 = vld [vmem:[%s6 + $0x24] sm:$0xf]
      %v877 = vld [vmem:[%s6 + $0x28] sm:$0xf]
      %v878 = vld [vmem:[%s6 + $0x2c] sm:$0xf]
      %v879 = vld [vmem:[%s6 + $0x30] sm:$0xf]
      %v880 = vld [vmem:[%s6 + $0x34] sm:$0xf]
      %v881 = vld [vmem:[%s6 + $0x38] sm:$0xf]
      %v882 = vld [vmem:[%s6 + $0x3c] sm:$0xf]
      %v883 = vld [vmem:[%s7] sm:$0x1]
      %v885 = vlaneseq
      %v886 = vshrl.u32 %v885, 7
      %v887 = vsub.s32 0, %v886
      %v888 = vrot.slane %v883, %v887
      %v906 = vunpack.c.l.b16 %v867
      %v907 = vunpack.c.l.b16 %v868
      %v908 = vunpack.c.l.b16 %v869
      %v909 = vunpack.c.l.b16 %v870
      %v910 = vunpack.c.l.b16 %v871
      %v911 = vunpack.c.l.b16 %v872
      %v912 = vunpack.c.l.b16 %v873
      %v913 = vunpack.c.l.b16 %v874
      %v914 = vunpack.c.l.b16 %v875
      %v915 = vunpack.c.l.b16 %v876
      %v916 = vunpack.c.l.b16 %v877
      %v917 = vunpack.c.l.b16 %v878
      %v918 = vunpack.c.l.b16 %v879
      %v919 = vunpack.c.l.b16 %v880
      %v920 = vunpack.c.l.b16 %v881
      %v921 = vunpack.c.l.b16 %v882
      %v922 = vpack.c.b16 %v907, %v906
      %v923 = vpack.c.b16 %v909, %v908
      %v924 = vpack.c.b16 %v911, %v910
      %v925 = vpack.c.b16 %v913, %v912
      %v926 = vpack.c.b16 %v915, %v914
      %v927 = vpack.c.b16 %v917, %v916
      %v928 = vpack.c.b16 %v919, %v918
      %v929 = vpack.c.b16 %v921, %v920
      %938 = vmatprep.subr.bf16.mxu0 0
      %939 = vmatpush1.bf16.msra.mxu0 %v929
      %940 = vmatprep.subr.bf16.mxu0 0
      %941 = vmatpush1.bf16.msra.mxu0 %v928
      %942 = vmatprep.subr.bf16.mxu0 0
      %943 = vmatpush1.bf16.msra.mxu0 %v927
      %944 = vmatprep.subr.bf16.mxu0 0
      %945 = vmatpush1.bf16.msra.mxu0 %v926
      %946 = vmatprep.subr.bf16.mxu0 0
      %947 = vmatpush1.bf16.msra.mxu0 %v925
      %948 = vmatprep.subr.bf16.mxu0 0
      %949 = vmatpush1.bf16.msra.mxu0 %v924
      %950 = vmatprep.subr.bf16.mxu0 0
      %951 = vmatpush1.bf16.msra.mxu0 %v923
      %952 = vmatprep.subr.bf16.mxu0 0
      %953 = vmatpush1.bf16.msra.mxu0 %v922
      %954 = vmatprep.subr.bf16.mxu0 0
      %955 = vmatpush2.bf16.msra.mxu0 0
      %956 = vmatprep.subr.bf16.mxu0 0
      %957 = vmatpush2.bf16.msra.mxu0 0
      %958 = vmatprep.subr.bf16.mxu0 0
      %959 = vmatpush2.bf16.msra.mxu0 0
      %960 = vmatprep.subr.bf16.mxu0 0
      %961 = vmatpush2.bf16.msra.mxu0 0
      %962 = vmatprep.subr.bf16.mxu0 0
      %963 = vmatpush2.bf16.msra.mxu0 0
      %964 = vmatprep.subr.bf16.mxu0 0
      %965 = vmatpush2.bf16.msra.mxu0 0
      %966 = vmatprep.subr.bf16.mxu0 0
      %967 = vmatpush2.bf16.msra.mxu0 0
      %968 = vmatprep.subr.bf16.mxu0 0
      %969 = vmatpush2.bf16.msra.mxu0 0
      %970 = vmatprep.mubr.bf16.mxu0 0
      %971 = vmatmul.mubr.bf16.gmra.mxu0 %v860
      %v972 = vpop.f32.mrf.mxu0
      %v973 = vadd.f32 %v888, %v972
      %v974 = vpop.f32.mrf.mxu0
      %v975 = vpop.f32.mrf.mxu0
      %v976 = vadd.f32 %v888, %v975
      %v977 = vpop.f32.mrf.mxu0
      %978 = vmatprep.mubr.bf16.mxu0 0
      %979 = vmatmul.mubr.bf16.gmra.mxu0 %v861
      %v980 = vpop.f32.mrf.mxu0
      %v981 = vadd.f32 %v888, %v980
      %v982 = vpop.f32.mrf.mxu0
      %v983 = vpop.f32.mrf.mxu0
      %v984 = vadd.f32 %v888, %v983
      %v985 = vpop.f32.mrf.mxu0
      %986 = vmatprep.mubr.bf16.mxu0 0
      %987 = vmatmul.mubr.bf16.gmra.mxu0 %v862
      %v988 = vpop.f32.mrf.mxu0
      %v989 = vadd.f32 %v888, %v988
      %v990 = vpop.f32.mrf.mxu0
      %v991 = vpop.f32.mrf.mxu0
      %v992 = vadd.f32 %v888, %v991
      %v993 = vpop.f32.mrf.mxu0
      %994 = vmatprep.mubr.bf16.mxu0 0
      %995 = vmatmul.mubr.bf16.gmra.mxu0 %v863
      %v996 = vpop.f32.mrf.mxu0
      %v997 = vadd.f32 %v888, %v996
      %v998 = vpop.f32.mrf.mxu0
      %v999 = vpop.f32.mrf.mxu0
      %v1000 = vadd.f32 %v888, %v999
      %v1001 = vpop.f32.mrf.mxu0
      %1002 = vmatprep.mubr.bf16.mxu0 0
      %1003 = vmatmul.mubr.bf16.gmra.mxu0 %v864
      %v1004 = vpop.f32.mrf.mxu0
      %v1005 = vadd.f32 %v888, %v1004
      %v1006 = vpop.f32.mrf.mxu0
      %v1007 = vpop.f32.mrf.mxu0
      %v1008 = vadd.f32 %v888, %v1007
      %v1009 = vpop.f32.mrf.mxu0
      %1010 = vmatprep.mubr.bf16.mxu0 0
      %1011 = vmatmul.mubr.bf16.gmra.mxu0 %v865
      %v1012 = vpop.f32.mrf.mxu0
      %v1013 = vadd.f32 %v888, %v1012
      %v1014 = vpop.f32.mrf.mxu0
      %v1015 = vpop.f32.mrf.mxu0
      %v1016 = vadd.f32 %v888, %v1015
      %v1017 = vpop.f32.mrf.mxu0
      %1018 = vmatprep.mubr.bf16.mxu0 0
      %1019 = vmatmul.mubr.bf16.gmra.mxu0 %v866
      %v1020 = vpop.f32.mrf.mxu0
      %v1021 = vadd.f32 %v888, %v1020
      %v1022 = vpop.f32.mrf.mxu0
      %v1023 = vpop.f32.mrf.mxu0
      %v1024 = vadd.f32 %v888, %v1023
      %v1025 = vpop.f32.mrf.mxu0
      %1026 = vdwg.mxu0
      %v1027 = vmax.f32 %v973, 0.0
      %v1028 = vmax.f32 %v976, 0.0
      %v1029 = vmax.f32 %v981, 0.0
      %v1030 = vmax.f32 %v984, 0.0
      %v1031 = vmax.f32 %v989, 0.0
      %v1032 = vmax.f32 %v992, 0.0
      %v1033 = vmax.f32 %v997, 0.0
      %v1034 = vmax.f32 %v1000, 0.0
      %v1035 = vmax.f32 %v1005, 0.0
      %v1036 = vmax.f32 %v1008, 0.0
      %v1037 = vmax.f32 %v1013, 0.0
      %v1038 = vmax.f32 %v1016, 0.0
      %v1039 = vmax.f32 %v1021, 0.0
      %v1040 = vmax.f32 %v1024, 0.0
      %v1041 = vpack.c.bf16 %v1028, %v1027
      %v1042 = vpack.c.bf16 %v1030, %v1029
      %v1043 = vpack.c.bf16 %v1032, %v1031
      %v1044 = vpack.c.bf16 %v1034, %v1033
      %v1045 = vpack.c.bf16 %v1036, %v1035
      %v1046 = vpack.c.bf16 %v1038, %v1037
      %v1047 = vpack.c.bf16 %v1040, %v1039
      %v1048 = vld [vmem:[%s8] sm:$0xf]
      %v1049 = vld [vmem:[%s8 + $0x4] sm:$0xf]
      %v1050 = vld [vmem:[%s8 + $0x8] sm:$0xf]
      %v1051 = vld [vmem:[%s8 + $0xc] sm:$0xf]
      %v1052 = vld [vmem:[%s9] sm:$0x1]
      %v1053 = vld [vmem:[%s370] sm:$0xff]
      %v1054 = vld [vmem:[%s370 + $0x8] sm:$0xff]
      %v1055 = vld [vmem:[%s370 + $0x10] sm:$0xff]
      %v1056 = vld [vmem:[%s370 + $0x18] sm:$0xff]
      %v1057 = vld [vmem:[%s370 + $0x20] sm:$0xff]
      %v1058 = vld [vmem:[%s370 + $0x28] sm:$0xff]
      %v1059 = vld [vmem:[%s370 + $0x30] sm:$0xff]
      %v1060 = vld [vmem:[%s370 + $0x38] sm:$0xff]
      %v1061 = vld [vmem:[%s370 + $0x40] sm:$0xff]
      %v1062 = vld [vmem:[%s370 + $0x48] sm:$0xff]
      %v1063 = vld [vmem:[%s370 + $0x50] sm:$0xff]
      %v1064 = vld [vmem:[%s370 + $0x58] sm:$0xff]
      %v1065 = vld [vmem:[%s370 + $0x60] sm:$0xff]
      %v1066 = vld [vmem:[%s370 + $0x68] sm:$0xff]
      %v1068 = vlaneseq
      %v1069 = vshrl.u32 %v1068, 7
      %v1070 = vsub.s32 0, %v1069
      %v1071 = vrot.slane %v1052, %v1070
      %v1077 = vunpack.c.l.b16 %v1048
      %v1078 = vunpack.c.l.b16 %v1049
      %v1079 = vunpack.c.l.b16 %v1050
      %v1080 = vunpack.c.l.b16 %v1051
      %v1081 = vpack.c.b16 %v1078, %v1077
      %v1082 = vpack.c.b16 %v1080, %v1079
      %v1086 = vsel %vm427, %v1041, 0
      %v1089 = vsel %vm427, %v1042, 0
      %v1092 = vsel %vm427, %v1043, 0
      %v1095 = vsel %vm427, %v1044, 0
      %v1098 = vsel %vm427, %v1045, 0
      %v1101 = vsel %vm427, %v1046, 0
      %v1104 = vsel %vm427, %v1047, 0
      %1106 = vmatprep.subr.bf16.mxu0 0
      %1107 = vmatpush1.bf16.msra.mxu0 0
      %1108 = vmatprep.subr.bf16.mxu0 0
      %1109 = vmatpush1.bf16.msra.mxu0 0
      %1110 = vmatprep.subr.bf16.mxu0 0
      %1111 = vmatpush1.bf16.msra.mxu0 0
      %1112 = vmatprep.subr.bf16.mxu0 0
      %1113 = vmatpush1.bf16.msra.mxu0 0
      %1114 = vmatprep.subr.bf16.mxu0 0
      %1115 = vmatpush1.bf16.msra.mxu0 0
      %1116 = vmatprep.subr.bf16.mxu0 0
      %1117 = vmatpush1.bf16.msra.mxu0 0
      %1118 = vmatprep.subr.bf16.mxu0 0
      %1119 = vmatpush1.bf16.msra.mxu0 %v1082
      %1120 = vmatprep.subr.bf16.mxu0 0
      %1121 = vmatpush1.bf16.msra.mxu0 %v1081
      %1122 = vmatprep.subr.bf16.mxu0 0
      %1123 = vmatpush2.bf16.msra.mxu0 0
      %1124 = vmatprep.subr.bf16.mxu0 0
      %1125 = vmatpush2.bf16.msra.mxu0 0
      %1126 = vmatprep.subr.bf16.mxu0 0
      %1127 = vmatpush2.bf16.msra.mxu0 0
      %1128 = vmatprep.subr.bf16.mxu0 0
      %1129 = vmatpush2.bf16.msra.mxu0 0
      %1130 = vmatprep.subr.bf16.mxu0 0
      %1131 = vmatpush2.bf16.msra.mxu0 0
      %1132 = vmatprep.subr.bf16.mxu0 0
      %1133 = vmatpush2.bf16.msra.mxu0 0
      %1134 = vmatprep.subr.bf16.mxu0 0
      %1135 = vmatpush2.bf16.msra.mxu0 0
      %1136 = vmatprep.subr.bf16.mxu0 0
      %1137 = vmatpush2.bf16.msra.mxu0 0
      %1138 = vmatprep.mubr.bf16.mxu0 0
      %1139 = vmatmul.mubr.bf16.gmra.mxu0 %v1086
      %v1140 = vpop.f32.mrf.mxu0
      %v1141 = vadd.f32 %v1071, %v1140
      %v1142 = vpop.f32.mrf.mxu0
      %v1143 = vpop.f32.mrf.mxu0
      %v1144 = vadd.f32 %v1071, %v1143
      %v1145 = vpop.f32.mrf.mxu0
      %1146 = vmatprep.mubr.bf16.mxu0 0
      %1147 = vmatmul.mubr.bf16.gmra.mxu0 %v1089
      %v1148 = vpop.f32.mrf.mxu0
      %v1149 = vadd.f32 %v1071, %v1148
      %v1150 = vpop.f32.mrf.mxu0
      %v1151 = vpop.f32.mrf.mxu0
      %v1152 = vadd.f32 %v1071, %v1151
      %v1153 = vpop.f32.mrf.mxu0
      %1154 = vmatprep.mubr.bf16.mxu0 0
      %1155 = vmatmul.mubr.bf16.gmra.mxu0 %v1092
      %v1156 = vpop.f32.mrf.mxu0
      %v1157 = vadd.f32 %v1071, %v1156
      %v1158 = vpop.f32.mrf.mxu0
      %v1159 = vpop.f32.mrf.mxu0
      %v1160 = vadd.f32 %v1071, %v1159
      %v1161 = vpop.f32.mrf.mxu0
      %1162 = vmatprep.mubr.bf16.mxu0 0
      %1163 = vmatmul.mubr.bf16.gmra.mxu0 %v1095
      %v1164 = vpop.f32.mrf.mxu0
      %v1165 = vadd.f32 %v1071, %v1164
      %v1166 = vpop.f32.mrf.mxu0
      %v1167 = vpop.f32.mrf.mxu0
      %v1168 = vadd.f32 %v1071, %v1167
      %v1169 = vpop.f32.mrf.mxu0
      %1170 = vmatprep.mubr.bf16.mxu0 0
      %1171 = vmatmul.mubr.bf16.gmra.mxu0 %v1098
      %v1172 = vpop.f32.mrf.mxu0
      %v1173 = vadd.f32 %v1071, %v1172
      %v1174 = vpop.f32.mrf.mxu0
      %v1175 = vpop.f32.mrf.mxu0
      %v1176 = vadd.f32 %v1071, %v1175
      %v1177 = vpop.f32.mrf.mxu0
      %1178 = vmatprep.mubr.bf16.mxu0 0
      %1179 = vmatmul.mubr.bf16.gmra.mxu0 %v1101
      %v1180 = vpop.f32.mrf.mxu0
      %v1181 = vadd.f32 %v1071, %v1180
      %v1182 = vpop.f32.mrf.mxu0
      %v1183 = vpop.f32.mrf.mxu0
      %v1184 = vadd.f32 %v1071, %v1183
      %v1185 = vpop.f32.mrf.mxu0
      %1186 = vmatprep.mubr.bf16.mxu0 0
      %1187 = vmatmul.mubr.bf16.gmra.mxu0 %v1104
      %v1188 = vpop.f32.mrf.mxu0
      %v1189 = vadd.f32 %v1071, %v1188
      %v1190 = vpop.f32.mrf.mxu0
      %v1191 = vpop.f32.mrf.mxu0
      %v1192 = vadd.f32 %v1071, %v1191
      %v1193 = vpop.f32.mrf.mxu0
      %1194 = vdwg.mxu0
      %v1195 = vsub.f32 %v1053, %v1141
      %v1196 = vsub.f32 %v1054, %v1144
      %v1197 = vsub.f32 %v1055, %v1149
      %v1198 = vsub.f32 %v1056, %v1152
      %v1199 = vsub.f32 %v1057, %v1157
      %v1200 = vsub.f32 %v1058, %v1160
      %v1201 = vsub.f32 %v1059, %v1165
      %v1202 = vsub.f32 %v1060, %v1168
      %v1203 = vsub.f32 %v1061, %v1173
      %v1204 = vsub.f32 %v1062, %v1176
      %v1205 = vsub.f32 %v1063, %v1181
      %v1206 = vsub.f32 %v1064, %v1184
      %v1207 = vsub.f32 %v1065, %v1189
      %v1208 = vsub.f32 %v1066, %v1192
      %v1209 = vmul.f32 %v1195, %v1195
      %v1210 = vmul.f32 %v1196, %v1196
      %v1211 = vmul.f32 %v1197, %v1197
      %v1212 = vmul.f32 %v1198, %v1198
      %v1213 = vmul.f32 %v1199, %v1199
      %v1214 = vmul.f32 %v1200, %v1200
      %v1215 = vmul.f32 %v1201, %v1201
      %v1216 = vmul.f32 %v1202, %v1202
      %v1217 = vmul.f32 %v1203, %v1203
      %v1218 = vmul.f32 %v1204, %v1204
      %v1219 = vmul.f32 %v1205, %v1205
      %v1220 = vmul.f32 %v1206, %v1206
      %v1221 = vmul.f32 %v1207, %v1207
      %v1222 = vmul.f32 %v1208, %v1208
      %v1223 = vsel %vm427, %v1209, 0.0
      %1224 = vadd.xlane.f32.xlu0 %v1223
      %v1225 = vpop.xlane.xlu0 %1224
      %v1226 = vsel %vm427, %v1210, 0.0
      %1227 = vadd.xlane.f32.xlu0 %v1226
      %v1228 = vpop.xlane.xlu0 %1227
      %v1229 = vsel %vm427, %v1211, 0.0
      %1230 = vadd.xlane.f32.xlu0 %v1229
      %v1231 = vpop.xlane.xlu0 %1230
      %v1232 = vsel %vm427, %v1212, 0.0
      %1233 = vadd.xlane.f32.xlu0 %v1232
      %v1234 = vpop.xlane.xlu0 %1233
      %v1235 = vsel %vm427, %v1213, 0.0
      %1236 = vadd.xlane.f32.xlu0 %v1235
      %v1237 = vpop.xlane.xlu0 %1236
      %v1238 = vsel %vm427, %v1214, 0.0
      %1239 = vadd.xlane.f32.xlu0 %v1238
      %v1240 = vpop.xlane.xlu0 %1239
      %v1241 = vsel %vm427, %v1215, 0.0
      %1242 = vadd.xlane.f32.xlu0 %v1241
      %v1243 = vpop.xlane.xlu0 %1242
      %v1244 = vsel %vm427, %v1216, 0.0
      %1245 = vadd.xlane.f32.xlu0 %v1244
      %v1246 = vpop.xlane.xlu0 %1245
      %v1247 = vsel %vm427, %v1217, 0.0
      %1248 = vadd.xlane.f32.xlu0 %v1247
      %v1249 = vpop.xlane.xlu0 %1248
      %v1250 = vsel %vm427, %v1218, 0.0
      %1251 = vadd.xlane.f32.xlu0 %v1250
      %v1252 = vpop.xlane.xlu0 %1251
      %v1253 = vsel %vm427, %v1219, 0.0
      %1254 = vadd.xlane.f32.xlu0 %v1253
      %v1255 = vpop.xlane.xlu0 %1254
      %v1256 = vsel %vm427, %v1220, 0.0
      %1257 = vadd.xlane.f32.xlu0 %v1256
      %v1258 = vpop.xlane.xlu0 %1257
      %v1259 = vsel %vm427, %v1221, 0.0
      %1260 = vadd.xlane.f32.xlu0 %v1259
      %v1261 = vpop.xlane.xlu0 %1260
      %v1262 = vsel %vm427, %v1222, 0.0
      %1263 = vadd.xlane.f32.xlu0 %v1262
      %v1264 = vpop.xlane.xlu0 %1263
      %v1265 = vmul.f32 %v1225, -0.5
      %v1266 = vmul.f32 %v1228, -0.5
      %v1267 = vmul.f32 %v1231, -0.5
      %v1268 = vmul.f32 %v1234, -0.5
      %v1269 = vmul.f32 %v1237, -0.5
      %v1270 = vmul.f32 %v1240, -0.5
      %v1271 = vmul.f32 %v1243, -0.5
      %v1272 = vmul.f32 %v1246, -0.5
      %v1273 = vmul.f32 %v1249, -0.5
      %v1274 = vmul.f32 %v1252, -0.5
      %v1275 = vmul.f32 %v1255, -0.5
      %v1276 = vmul.f32 %v1258, -0.5
      %v1277 = vmul.f32 %v1261, -0.5
      %v1278 = vmul.f32 %v1264, -0.5
      %v1279 = vsub.f32 %v1265, 29.406033
      %v1280 = vsub.f32 %v1266, 29.406033
      %v1281 = vsub.f32 %v1267, 29.406033
      %v1282 = vsub.f32 %v1268, 29.406033
      %v1283 = vsub.f32 %v1269, 29.406033
      %v1284 = vsub.f32 %v1270, 29.406033
      %v1285 = vsub.f32 %v1271, 29.406033
      %v1286 = vsub.f32 %v1272, 29.406033
      %v1287 = vsub.f32 %v1273, 29.406033
      %v1288 = vsub.f32 %v1274, 29.406033
      %v1289 = vsub.f32 %v1275, 29.406033
      %v1290 = vsub.f32 %v1276, 29.406033
      %v1291 = vsub.f32 %v1277, 29.406033
      %v1292 = vsub.f32 %v1278, 29.406033
      %v1293 = vmul.f32 %v651, %v651
      %v1294 = vmul.f32 %v655, %v655
      %v1295 = vmul.f32 %v661, %v661
      %v1296 = vmul.f32 %v665, %v665
      %v1297 = vmul.f32 %v671, %v671
      %v1298 = vmul.f32 %v675, %v675
      %v1299 = vmul.f32 %v681, %v681
      %v1300 = vmul.f32 %v685, %v685
      %v1301 = vmul.f32 %v691, %v691
      %v1302 = vmul.f32 %v695, %v695
      %v1303 = vmul.f32 %v701, %v701
      %v1304 = vmul.f32 %v705, %v705
      %v1305 = vmul.f32 %v711, %v711
      %v1306 = vmul.f32 %v715, %v715
      %v1307 = vadd.f32 %v747, %v1293
      %v1308 = vadd.f32 %v748, %v1294
      %v1309 = vadd.f32 %v749, %v1295
      %v1310 = vadd.f32 %v750, %v1296
      %v1311 = vadd.f32 %v751, %v1297
      %v1312 = vadd.f32 %v752, %v1298
      %v1313 = vadd.f32 %v753, %v1299
      %v1314 = vadd.f32 %v754, %v1300
      %v1315 = vadd.f32 %v755, %v1301
      %v1316 = vadd.f32 %v756, %v1302
      %v1317 = vadd.f32 %v757, %v1303
      %v1318 = vadd.f32 %v758, %v1304
      %v1319 = vadd.f32 %v759, %v1305
      %v1320 = vadd.f32 %v760, %v1306
      %v1321 = vsub.f32 %v1307, 1.0
      %v1322 = vsub.f32 %v1308, 1.0
      %v1323 = vsub.f32 %v1309, 1.0
      %v1324 = vsub.f32 %v1310, 1.0
      %v1325 = vsub.f32 %v1311, 1.0
      %v1326 = vsub.f32 %v1312, 1.0
      %v1327 = vsub.f32 %v1313, 1.0
      %v1328 = vsub.f32 %v1314, 1.0
      %v1329 = vsub.f32 %v1315, 1.0
      %v1330 = vsub.f32 %v1316, 1.0
      %v1331 = vsub.f32 %v1317, 1.0
      %v1332 = vsub.f32 %v1318, 1.0
      %v1333 = vsub.f32 %v1319, 1.0
      %v1334 = vsub.f32 %v1320, 1.0
      %v1335 = vmul.f32 %v653, 2.0
      %v1336 = vmul.f32 %v657, 2.0
      %v1337 = vmul.f32 %v663, 2.0
      %v1338 = vmul.f32 %v667, 2.0
      %v1339 = vmul.f32 %v673, 2.0
      %v1340 = vmul.f32 %v677, 2.0
      %v1341 = vmul.f32 %v683, 2.0
      %v1342 = vmul.f32 %v687, 2.0
      %v1343 = vmul.f32 %v693, 2.0
      %v1344 = vmul.f32 %v697, 2.0
      %v1345 = vmul.f32 %v703, 2.0
      %v1346 = vmul.f32 %v707, 2.0
      %v1347 = vmul.f32 %v713, 2.0
      %v1348 = vmul.f32 %v717, 2.0
      %v1349 = vsub.f32 %v1321, %v1335
      %v1350 = vsub.f32 %v1322, %v1336
      %v1351 = vsub.f32 %v1323, %v1337
      %v1352 = vsub.f32 %v1324, %v1338
      %v1353 = vsub.f32 %v1325, %v1339
      %v1354 = vsub.f32 %v1326, %v1340
      %v1355 = vsub.f32 %v1327, %v1341
      %v1356 = vsub.f32 %v1328, %v1342
      %v1357 = vsub.f32 %v1329, %v1343
      %v1358 = vsub.f32 %v1330, %v1344
      %v1359 = vsub.f32 %v1331, %v1345
      %v1360 = vsub.f32 %v1332, %v1346
      %v1361 = vsub.f32 %v1333, %v1347
      %v1362 = vsub.f32 %v1334, %v1348
      %1363 = vadd.xlane.f32.xlu0 %v1349
      %v1364 = vpop.xlane.xlu0 %1363
      %1365 = vadd.xlane.f32.xlu0 %v1350
      %v1366 = vpop.xlane.xlu0 %1365
      %1367 = vadd.xlane.f32.xlu0 %v1351
      %v1368 = vpop.xlane.xlu0 %1367
      %1369 = vadd.xlane.f32.xlu0 %v1352
      %v1370 = vpop.xlane.xlu0 %1369
      %1371 = vadd.xlane.f32.xlu0 %v1353
      %v1372 = vpop.xlane.xlu0 %1371
      %1373 = vadd.xlane.f32.xlu0 %v1354
      %v1374 = vpop.xlane.xlu0 %1373
      %1375 = vadd.xlane.f32.xlu0 %v1355
      %v1376 = vpop.xlane.xlu0 %1375
      %1377 = vadd.xlane.f32.xlu0 %v1356
      %v1378 = vpop.xlane.xlu0 %1377
      %1379 = vadd.xlane.f32.xlu0 %v1357
      %v1380 = vpop.xlane.xlu0 %1379
      %1381 = vadd.xlane.f32.xlu0 %v1358
      %v1382 = vpop.xlane.xlu0 %1381
      %1383 = vadd.xlane.f32.xlu0 %v1359
      %v1384 = vpop.xlane.xlu0 %1383
      %1385 = vadd.xlane.f32.xlu0 %v1360
      %v1386 = vpop.xlane.xlu0 %1385
      %1387 = vadd.xlane.f32.xlu0 %v1361
      %v1388 = vpop.xlane.xlu0 %1387
      %1389 = vadd.xlane.f32.xlu0 %v1362
      %v1390 = vpop.xlane.xlu0 %1389
      %v1391 = vmul.f32 %v1364, 0.5
      %v1392 = vmul.f32 %v1366, 0.5
      %v1393 = vmul.f32 %v1368, 0.5
      %v1394 = vmul.f32 %v1370, 0.5
      %v1395 = vmul.f32 %v1372, 0.5
      %v1396 = vmul.f32 %v1374, 0.5
      %v1397 = vmul.f32 %v1376, 0.5
      %v1398 = vmul.f32 %v1378, 0.5
      %v1399 = vmul.f32 %v1380, 0.5
      %v1400 = vmul.f32 %v1382, 0.5
      %v1401 = vmul.f32 %v1384, 0.5
      %v1402 = vmul.f32 %v1386, 0.5
      %v1403 = vmul.f32 %v1388, 0.5
      %v1404 = vmul.f32 %v1390, 0.5
      %v1405 = vlaneseq
      %v1406 = vshrl.u32 %v1405, 7
      %v1407 = vadd.s32 %v1406, 8
      %v1408 = vadd.s32 %v1406, 16
      %v1409 = vadd.s32 %v1406, 24
      %v1410 = vadd.s32 %v1406, 32
      %v1411 = vadd.s32 %v1406, 40
      %v1412 = vadd.s32 %v1406, 48
      %v1413 = vadd.s32 %v1406, 56
      %v1414 = vadd.s32 %v1406, 64
      %v1415 = vadd.s32 %v1406, 72
      %v1416 = vadd.s32 %v1406, 80
      %v1417 = vadd.s32 %v1406, 88
      %v1418 = vadd.s32 %v1406, 96
      %v1419 = vadd.s32 %v1406, 104
      %s1420 = smul.u32 %s21, 112
      %v1421 = vstv %s1420
      %v1422 = vadd.s32 %v1406, %v1421
      %v1423 = vadd.s32 %v1407, %v1421
      %v1424 = vadd.s32 %v1408, %v1421
      %v1425 = vadd.s32 %v1409, %v1421
      %v1426 = vadd.s32 %v1410, %v1421
      %v1427 = vadd.s32 %v1411, %v1421
      %v1428 = vadd.s32 %v1412, %v1421
      %v1429 = vadd.s32 %v1413, %v1421
      %v1430 = vadd.s32 %v1414, %v1421
      %v1431 = vadd.s32 %v1415, %v1421
      %v1432 = vadd.s32 %v1416, %v1421
      %v1433 = vadd.s32 %v1417, %v1421
      %v1434 = vadd.s32 %v1418, %v1421
      %v1435 = vadd.s32 %v1419, %v1421
      %vm1436 = vcmp.lt.s32.totalorder %v1422, 200
      %vm1437 = vcmp.lt.s32.totalorder %v1423, 200
      %vm1438 = vcmp.lt.s32.totalorder %v1424, 200
      %vm1439 = vcmp.lt.s32.totalorder %v1425, 200
      %vm1440 = vcmp.lt.s32.totalorder %v1426, 200
      %vm1441 = vcmp.lt.s32.totalorder %v1427, 200
      %vm1442 = vcmp.lt.s32.totalorder %v1428, 200
      %vm1443 = vcmp.lt.s32.totalorder %v1429, 200
      %vm1444 = vcmp.lt.s32.totalorder %v1430, 200
      %vm1445 = vcmp.lt.s32.totalorder %v1431, 200
      %vm1446 = vcmp.lt.s32.totalorder %v1432, 200
      %vm1447 = vcmp.lt.s32.totalorder %v1433, 200
      %vm1448 = vcmp.lt.s32.totalorder %v1434, 200
      %vm1449 = vcmp.lt.s32.totalorder %v1435, 200
      %v1450 = vsub.f32 %v1279, %v1391
      %v1451 = vsub.f32 %v1280, %v1392
      %v1452 = vsub.f32 %v1281, %v1393
      %v1453 = vsub.f32 %v1282, %v1394
      %v1454 = vsub.f32 %v1283, %v1395
      %v1455 = vsub.f32 %v1284, %v1396
      %v1456 = vsub.f32 %v1285, %v1397
      %v1457 = vsub.f32 %v1286, %v1398
      %v1458 = vsub.f32 %v1287, %v1399
      %v1459 = vsub.f32 %v1288, %v1400
      %v1460 = vsub.f32 %v1289, %v1401
      %v1461 = vsub.f32 %v1290, %v1402
      %v1462 = vsub.f32 %v1291, %v1403
      %v1463 = vsub.f32 %v1292, %v1404
      %v1464 = vsel %vm1436, %v1450, 0.0
      %v1465 = vsel %vm1437, %v1451, 0.0
      %v1466 = vsel %vm1438, %v1452, 0.0
      %v1467 = vsel %vm1439, %v1453, 0.0
      %v1468 = vsel %vm1440, %v1454, 0.0
      %v1469 = vsel %vm1441, %v1455, 0.0
      %v1470 = vsel %vm1442, %v1456, 0.0
      %v1471 = vsel %vm1443, %v1457, 0.0
      %v1472 = vsel %vm1444, %v1458, 0.0
      %v1473 = vsel %vm1445, %v1459, 0.0
      %v1474 = vsel %vm1446, %v1460, 0.0
      %v1475 = vsel %vm1447, %v1461, 0.0
      %v1476 = vsel %vm1448, %v1462, 0.0
      %v1477 = vsel %vm1449, %v1463, 0.0
      %vm1478 = vcmask 7168
      %v1479 = vsel %vm1478, %v1464, 0.0
      %v1480 = vsel %vm1478, %v1465, 0.0
      %v1481 = vadd.f32 %v1479, %v1480
      %v1482 = vsel %vm1478, %v1466, 0.0
      %v1483 = vadd.f32 %v1481, %v1482
      %v1484 = vsel %vm1478, %v1467, 0.0
      %v1485 = vadd.f32 %v1483, %v1484
      %v1486 = vsel %vm1478, %v1468, 0.0
      %v1487 = vadd.f32 %v1485, %v1486
      %v1488 = vsel %vm1478, %v1469, 0.0
      %v1489 = vadd.f32 %v1487, %v1488
      %v1490 = vsel %vm1478, %v1470, 0.0
      %v1491 = vadd.f32 %v1489, %v1490
      %v1492 = vsel %vm1478, %v1471, 0.0
      %v1493 = vadd.f32 %v1491, %v1492
      %v1494 = vsel %vm1478, %v1472, 0.0
      %v1495 = vadd.f32 %v1493, %v1494
      %v1496 = vsel %vm1478, %v1473, 0.0
      %v1497 = vadd.f32 %v1495, %v1496
      %v1498 = vsel %vm1478, %v1474, 0.0
      %v1499 = vadd.f32 %v1497, %v1498
      %v1500 = vsel %vm1478, %v1475, 0.0
      %v1501 = vadd.f32 %v1499, %v1500
      %v1502 = vsel %vm1478, %v1476, 0.0
      %v1503 = vadd.f32 %v1501, %v1502
      %v1504 = vsel %vm1478, %v1477, 0.0
      %v1505 = vadd.f32 %v1503, %v1504
      %1506 = vadd.xlane.f32.xlu0 %v1505
      %v1507 = vpop.xlane.xlu0 %1506
      %v1508 = vrot.slane %v1507, 4
      %v1509 = vadd.f32 %v1507, %v1508
      %v1510 = vrot.slane %v1509, 2
      %v1511 = vadd.f32 %v1509, %v1510
      %v1512 = vrot.slane %v1511, 1
      %v1513 = vadd.f32 %v1511, %v1512
      %s1514 = vtos %v1513
      %v1515 = vstv %s1514
      %1516 = vst [vmem:[%s381] sm:$0xff] %v1515
      %p1517 = scmp.lt.s32.totalorder %s21, 1
      %s1518 = scalar_select %p1517, %s21, 1
      %s1519 = smul.addr %s1518, 8
      %s1520 = scalar_lea.vmem %s10, %s1519
      // Predicated region
      $region61: #{vae_neg_elbo.1} parent=59 // pred_check
        %p1521 = pneg %p259
      $region62: #{vae_neg_elbo.1} parent=59 // pred_check_branch
        %1523 = sbr.rel (%p1521) target = $region64
      $region63: #{vae_neg_elbo.1} parent=59 // pred_region
        _
      $region64: #{vae_neg_elbo.1} parent=59 // pred_fallthru
        _
    $region60: #{vae_neg_elbo.1} parent=5 // pred_fallthru
      _
    %p1524 = scmp.le.s32.totalorder 2, %s16
    // Predicated region
    $region65: #{vae_neg_elbo.1} parent=5 // pred_check
      %p1525 = pneg %p1524
    $region66: #{vae_neg_elbo.1} parent=5 // pred_check_branch
      %1527 = sbr.rel (%p1525) target = $region68
    $region67: #{vae_neg_elbo.1} parent=5 // pred_region
      %s1528 = ssub.s32 %s16, 2
      // Predicated region
      $region69: #{vae_neg_elbo.1} parent=67 // pred_check
        %p1529 = pneg %p265
      $region70: #{vae_neg_elbo.1} parent=67 // pred_check_branch
        %1531 = sbr.rel (%p1529) target = $region72
      $region71: #{vae_neg_elbo.1} parent=67 // pred_region
        %p1532 = scmp.lt.s32.totalorder %s22, 1
        %s1533 = scalar_select %p1532, %s22, 1
        %s1534 = smul.addr %s1533, 8
        %s1535 = scalar_lea.vmem %s10, %s1534
      $region72: #{vae_neg_elbo.1} parent=67 // pred_fallthru
        _
    $region68: #{vae_neg_elbo.1} parent=5 // pred_fallthru
      _
  $region6: #{vae_neg_elbo.1} parent=0 // loop_footer
    %s20 = sadd.s32 1, %s16
  $region7: #{vae_neg_elbo.1} parent=0 // loop_footer_branch
    %15 = sbr.rel target = $region3
  $region8: #{vae_neg_elbo.1} parent=0 // loop_exit
    _

// kernel: vae_neg_elbo.1
$region0: #{vae_neg_elbo.1}
  #allocation0 [shape = 'u32[]', space=smem, size = 0x4, offset = 0x4, fixed_abs, tag = 'smem constant byte address 0x4 - core index']
  #allocation1 [shape = 'u32[144,128]{1,0:T(1,128)}', space=vmem, size = 0x12000, scoped, tag = 'internal scratch']
  #allocation2 [shape = 'f32[112,128]{1,0:T(8,128)}', space=vmem, size = 0xe000, scoped, tag = 'scratch operand']
  %s0 = inlined_call_operand.vmem [shape: f32[224,32], index: 0, kind: input, shape index: {}]
  %s1 = inlined_call_operand.vmem [shape: bf16[224,8], index: 1, kind: input, shape index: {}]
  %s2 = inlined_call_operand.vmem [shape: bf16[32,32], index: 2, kind: input, shape index: {}]
  %s3 = inlined_call_operand.vmem [shape: f32[1,32], index: 3, kind: input, shape index: {}]
  %s4 = inlined_call_operand.vmem [shape: bf16[32,256], index: 4, kind: input, shape index: {}]
  %s5 = inlined_call_operand.vmem [shape: f32[1,256], index: 5, kind: input, shape index: {}]
  %s6 = inlined_call_operand.vmem [shape: bf16[128,32], index: 6, kind: input, shape index: {}]
  %s7 = inlined_call_operand.vmem [shape: f32[1,32], index: 7, kind: input, shape index: {}]
  %s8 = inlined_call_operand.vmem [shape: bf16[32,32], index: 8, kind: input, shape index: {}]
  %s9 = inlined_call_operand.vmem [shape: f32[1,32], index: 9, kind: input, shape index: {}]
  %s10 = inlined_call_operand.vmem [shape: f32[2,8,128], index: 10, kind: output, shape index: {}]
  %s11 = sld [smem:[#allocation0]]
  $region73: #{vae_neg_elbo.1} parent=0
    _
  %s13 = ssub.s32 1, %s11
  %s14 = scalar_select 0, %s13, %s11
  loop: start=0, step=1, limit=4
  $region2: #{vae_neg_elbo.1} parent=0 // loop_pre_header
    _
  $region3: #{vae_neg_elbo.1} parent=0 // loop_header
    %s16 = sphi 0, %s20
    %p17 = scmp.ge.s32.totalorder %s16, 4
    %s26 = sphi 0, %s28
    %s29 = sphi 0, %s26
    %s30 = sphi 0, %s29
    %s46 = sphi 0, %s30
    %s52 = sphi 0, %s54
    %s55 = sphi 0, %s52
    %s56 = sphi 0, %s55
    %s72 = sphi 0, %s56
    %s76 = sphi 0, %s76
    %s78 = sphi 0, %s76
    %s79 = sphi 0, %s78
    %s93 = sphi 0, %s79
    %s97 = sphi 0, %s97
    %s99 = sphi 0, %s97
    %s100 = sphi 0, %s99
    %s114 = sphi 0, %s100
    %s118 = sphi 0, %s118
    %s120 = sphi 0, %s118
    %s121 = sphi 0, %s120
    %s135 = sphi 0, %s121
    %s139 = sphi 0, %s139
    %s141 = sphi 0, %s139
    %s142 = sphi 0, %s141
    %s156 = sphi 0, %s142
    %s160 = sphi 0, %s160
    %s162 = sphi 0, %s160
    %s163 = sphi 0, %s162
    %s177 = sphi 0, %s163
    %s181 = sphi 0, %s181
    %s183 = sphi 0, %s181
    %s184 = sphi 0, %s183
    %s198 = sphi 0, %s184
    %s202 = sphi 0, %s202
    %s204 = sphi 0, %s202
    %s205 = sphi 0, %s204
    %s219 = sphi 0, %s205
    %s223 = sphi 0, %s223
    %s225 = sphi 0, %s223
    %s226 = sphi 0, %s225
    %s240 = sphi 0, %s226
    %s246 = sphi 0, %s248
    %s249 = sphi 0, %s246
    %s250 = sphi 0, %s249
    %s266 = sphi 0, %s250
  $region4: #{vae_neg_elbo.1} parent=0 // loop_header_branch
    %19 = sbr.rel (%p17) target = $region8
  $region5: #{vae_neg_elbo.1} parent=0 // loop_body
    %s21 = ssub.s32 %s16, 1
    %s22 = ssub.s32 %s16, 2
    %s23 = sadd.s32 %s16, 1
    %s24 = ssub.s32 %s16, %s23
    %p25 = scmp.eq.s32.totalorder %s24, 0
    %s27 = sadd.s32 %s26, 1
    %s28 = scalar_select %p25, %s26, %s27
    %p31 = pneg %p25
    %p32 = scmp.eq.s32.totalorder %s16, 1
    %p33 = por %p31, %p32
    %p34 = scmp.ne.s32.totalorder %s26, %s29
    %p35 = scmp.eq.s32.totalorder %s16, 0
    %p36 = por %p34, %p35
    %p37 = scmp.ne.s32.totalorder %s26, %s29
    %p38 = scmp.eq.s32.totalorder %s21, 1
    %p39 = por %p37, %p38
    %p40 = scmp.ne.s32.totalorder %s29, %s30
    %p41 = scmp.eq.s32.totalorder %s21, 0
    %p42 = por %p40, %p41
    %p43 = scmp.ne.s32.totalorder %s29, %s30
    %p44 = scmp.eq.s32.totalorder %s22, 1
    %p45 = por %p43, %p44
    %p47 = scmp.ne.s32.totalorder %s30, %s46
    %p48 = scmp.eq.s32.totalorder %s22, 0
    %p49 = por %p47, %p48
    %s50 = ssub.s32 %s16, %s23
    %p51 = scmp.eq.s32.totalorder %s50, 0
    %s53 = sadd.s32 %s52, 1
    %s54 = scalar_select %p51, %s52, %s53
    %p57 = pneg %p51
    %p58 = scmp.eq.s32.totalorder %s16, 1
    %p59 = por %p57, %p58
    %p60 = scmp.ne.s32.totalorder %s52, %s55
    %p61 = scmp.eq.s32.totalorder %s16, 0
    %p62 = por %p60, %p61
    %p63 = scmp.ne.s32.totalorder %s52, %s55
    %p64 = scmp.eq.s32.totalorder %s21, 1
    %p65 = por %p63, %p64
    %p66 = scmp.ne.s32.totalorder %s55, %s56
    %p67 = scmp.eq.s32.totalorder %s21, 0
    %p68 = por %p66, %p67
    %p69 = scmp.ne.s32.totalorder %s55, %s56
    %p70 = scmp.eq.s32.totalorder %s22, 1
    %p71 = por %p69, %p70
    %p73 = scmp.ne.s32.totalorder %s56, %s72
    %p74 = scmp.eq.s32.totalorder %s22, 0
    %p75 = por %p73, %p74
    %s77 = sadd.s32 %s76, 1
    %p80 = scmp.eq.s32.totalorder %s16, 1
    %p81 = scmp.ne.s32.totalorder %s76, %s78
    %p82 = scmp.eq.s32.totalorder %s16, 0
    %p83 = por %p81, %p82
    %p84 = scmp.ne.s32.totalorder %s76, %s78
    %p85 = scmp.eq.s32.totalorder %s21, 1
    %p86 = por %p84, %p85
    %p87 = scmp.ne.s32.totalorder %s78, %s79
    %p88 = scmp.eq.s32.totalorder %s21, 0
    %p89 = por %p87, %p88
    %p90 = scmp.ne.s32.totalorder %s78, %s79
    %p91 = scmp.eq.s32.totalorder %s22, 1
    %p92 = por %p90, %p91
    %p94 = scmp.ne.s32.totalorder %s79, %s93
    %p95 = scmp.eq.s32.totalorder %s22, 0
    %p96 = por %p94, %p95
    %s98 = sadd.s32 %s97, 1
    %p101 = scmp.eq.s32.totalorder %s16, 1
    %p102 = scmp.ne.s32.totalorder %s97, %s99
    %p103 = scmp.eq.s32.totalorder %s16, 0
    %p104 = por %p102, %p103
    %p105 = scmp.ne.s32.totalorder %s97, %s99
    %p106 = scmp.eq.s32.totalorder %s21, 1
    %p107 = por %p105, %p106
    %p108 = scmp.ne.s32.totalorder %s99, %s100
    %p109 = scmp.eq.s32.totalorder %s21, 0
    %p110 = por %p108, %p109
    %p111 = scmp.ne.s32.totalorder %s99, %s100
    %p112 = scmp.eq.s32.totalorder %s22, 1
    %p113 = por %p111, %p112
    %p115 = scmp.ne.s32.totalorder %s100, %s114
    %p116 = scmp.eq.s32.totalorder %s22, 0
    %p117 = por %p115, %p116
    %s119 = sadd.s32 %s118, 1
    %p122 = scmp.eq.s32.totalorder %s16, 1
    %p123 = scmp.ne.s32.totalorder %s118, %s120
    %p124 = scmp.eq.s32.totalorder %s16, 0
    %p125 = por %p123, %p124
    %p126 = scmp.ne.s32.totalorder %s118, %s120
    %p127 = scmp.eq.s32.totalorder %s21, 1
    %p128 = por %p126, %p127
    %p129 = scmp.ne.s32.totalorder %s120, %s121
    %p130 = scmp.eq.s32.totalorder %s21, 0
    %p131 = por %p129, %p130
    %p132 = scmp.ne.s32.totalorder %s120, %s121
    %p133 = scmp.eq.s32.totalorder %s22, 1
    %p134 = por %p132, %p133
    %p136 = scmp.ne.s32.totalorder %s121, %s135
    %p137 = scmp.eq.s32.totalorder %s22, 0
    %p138 = por %p136, %p137
    %s140 = sadd.s32 %s139, 1
    %p143 = scmp.eq.s32.totalorder %s16, 1
    %p144 = scmp.ne.s32.totalorder %s139, %s141
    %p145 = scmp.eq.s32.totalorder %s16, 0
    %p146 = por %p144, %p145
    %p147 = scmp.ne.s32.totalorder %s139, %s141
    %p148 = scmp.eq.s32.totalorder %s21, 1
    %p149 = por %p147, %p148
    %p150 = scmp.ne.s32.totalorder %s141, %s142
    %p151 = scmp.eq.s32.totalorder %s21, 0
    %p152 = por %p150, %p151
    %p153 = scmp.ne.s32.totalorder %s141, %s142
    %p154 = scmp.eq.s32.totalorder %s22, 1
    %p155 = por %p153, %p154
    %p157 = scmp.ne.s32.totalorder %s142, %s156
    %p158 = scmp.eq.s32.totalorder %s22, 0
    %p159 = por %p157, %p158
    %s161 = sadd.s32 %s160, 1
    %p164 = scmp.eq.s32.totalorder %s16, 1
    %p165 = scmp.ne.s32.totalorder %s160, %s162
    %p166 = scmp.eq.s32.totalorder %s16, 0
    %p167 = por %p165, %p166
    %p168 = scmp.ne.s32.totalorder %s160, %s162
    %p169 = scmp.eq.s32.totalorder %s21, 1
    %p170 = por %p168, %p169
    %p171 = scmp.ne.s32.totalorder %s162, %s163
    %p172 = scmp.eq.s32.totalorder %s21, 0
    %p173 = por %p171, %p172
    %p174 = scmp.ne.s32.totalorder %s162, %s163
    %p175 = scmp.eq.s32.totalorder %s22, 1
    %p176 = por %p174, %p175
    %p178 = scmp.ne.s32.totalorder %s163, %s177
    %p179 = scmp.eq.s32.totalorder %s22, 0
    %p180 = por %p178, %p179
    %s182 = sadd.s32 %s181, 1
    %p185 = scmp.eq.s32.totalorder %s16, 1
    %p186 = scmp.ne.s32.totalorder %s181, %s183
    %p187 = scmp.eq.s32.totalorder %s16, 0
    %p188 = por %p186, %p187
    %p189 = scmp.ne.s32.totalorder %s181, %s183
    %p190 = scmp.eq.s32.totalorder %s21, 1
    %p191 = por %p189, %p190
    %p192 = scmp.ne.s32.totalorder %s183, %s184
    %p193 = scmp.eq.s32.totalorder %s21, 0
    %p194 = por %p192, %p193
    %p195 = scmp.ne.s32.totalorder %s183, %s184
    %p196 = scmp.eq.s32.totalorder %s22, 1
    %p197 = por %p195, %p196
    %p199 = scmp.ne.s32.totalorder %s184, %s198
    %p200 = scmp.eq.s32.totalorder %s22, 0
    %p201 = por %p199, %p200
    %s203 = sadd.s32 %s202, 1
    %p206 = scmp.eq.s32.totalorder %s16, 1
    %p207 = scmp.ne.s32.totalorder %s202, %s204
    %p208 = scmp.eq.s32.totalorder %s16, 0
    %p209 = por %p207, %p208
    %p210 = scmp.ne.s32.totalorder %s202, %s204
    %p211 = scmp.eq.s32.totalorder %s21, 1
    %p212 = por %p210, %p211
    %p213 = scmp.ne.s32.totalorder %s204, %s205
    %p214 = scmp.eq.s32.totalorder %s21, 0
    %p215 = por %p213, %p214
    %p216 = scmp.ne.s32.totalorder %s204, %s205
    %p217 = scmp.eq.s32.totalorder %s22, 1
    %p218 = por %p216, %p217
    %p220 = scmp.ne.s32.totalorder %s205, %s219
    %p221 = scmp.eq.s32.totalorder %s22, 0
    %p222 = por %p220, %p221
    %s224 = sadd.s32 %s223, 1
    %p227 = scmp.eq.s32.totalorder %s16, 1
    %p228 = scmp.ne.s32.totalorder %s223, %s225
    %p229 = scmp.eq.s32.totalorder %s16, 0
    %p230 = por %p228, %p229
    %p231 = scmp.ne.s32.totalorder %s223, %s225
    %p232 = scmp.eq.s32.totalorder %s21, 1
    %p233 = por %p231, %p232
    %p234 = scmp.ne.s32.totalorder %s225, %s226
    %p235 = scmp.eq.s32.totalorder %s21, 0
    %p236 = por %p234, %p235
    %p237 = scmp.ne.s32.totalorder %s225, %s226
    %p238 = scmp.eq.s32.totalorder %s22, 1
    %p239 = por %p237, %p238
    %p241 = scmp.ne.s32.totalorder %s226, %s240
    %p242 = scmp.eq.s32.totalorder %s22, 0
    %p243 = por %p241, %p242
    %s244 = ssub.s32 %s16, %s23
    %p245 = scmp.eq.s32.totalorder %s244, 0
    %s247 = sadd.s32 %s246, 1
    %s248 = scalar_select %p245, %s246, %s247
    %p251 = pneg %p245
    %p252 = scmp.eq.s32.totalorder %s16, 1
    %p253 = por %p251, %p252
    %p254 = scmp.ne.s32.totalorder %s246, %s249
    %p255 = scmp.eq.s32.totalorder %s16, 0
    %p256 = por %p254, %p255
    %p257 = scmp.ne.s32.totalorder %s246, %s249
    %p258 = scmp.eq.s32.totalorder %s21, 1
    %p259 = por %p257, %p258
    %p260 = scmp.ne.s32.totalorder %s249, %s250
    %p261 = scmp.eq.s32.totalorder %s21, 0
    %p262 = por %p260, %p261
    %p263 = scmp.ne.s32.totalorder %s249, %s250
    %p264 = scmp.eq.s32.totalorder %s22, 1
    %p265 = por %p263, %p264
    %p267 = scmp.ne.s32.totalorder %s250, %s266
    %p268 = scmp.eq.s32.totalorder %s22, 0
    %p269 = por %p267, %p268
    %p270 = scmp.le.s32.totalorder 1, %s16
    %p271 = scmp.lt.s32.totalorder %s16, 3
    %p272 = pnand %p270, %p271
    %p273 = pneg %p272
    // Predicated region
    $region9: #{vae_neg_elbo.1} parent=5 // pred_check
      _
    $region10: #{vae_neg_elbo.1} parent=5 // pred_check_branch
      %275 = sbr.rel (%p272) target = $region12
    $region11: #{vae_neg_elbo.1} parent=5 // pred_region
      %s276 = ssub.s32 %s16, 1
      // Predicated region
      $region13: #{vae_neg_elbo.1} parent=11 // pred_check
        %p277 = pneg %p89
      $region14: #{vae_neg_elbo.1} parent=11 // pred_check_branch
        %279 = sbr.rel (%p277) target = $region16
      $region15: #{vae_neg_elbo.1} parent=11 // pred_region
        _
      $region16: #{vae_neg_elbo.1} parent=11 // pred_fallthru
        _
      // Predicated region
      $region17: #{vae_neg_elbo.1} parent=11 // pred_check
        %p280 = pneg %p110
      $region18: #{vae_neg_elbo.1} parent=11 // pred_check_branch
        %282 = sbr.rel (%p280) target = $region20
      $region19: #{vae_neg_elbo.1} parent=11 // pred_region
        _
      $region20: #{vae_neg_elbo.1} parent=11 // pred_fallthru
        _
      // Predicated region
      $region21: #{vae_neg_elbo.1} parent=11 // pred_check
        %p283 = pneg %p131
      $region22: #{vae_neg_elbo.1} parent=11 // pred_check_branch
        %285 = sbr.rel (%p283) target = $region24
      $region23: #{vae_neg_elbo.1} parent=11 // pred_region
        _
      $region24: #{vae_neg_elbo.1} parent=11 // pred_fallthru
        _
      // Predicated region
      $region25: #{vae_neg_elbo.1} parent=11 // pred_check
        %p286 = pneg %p152
      $region26: #{vae_neg_elbo.1} parent=11 // pred_check_branch
        %288 = sbr.rel (%p286) target = $region28
      $region27: #{vae_neg_elbo.1} parent=11 // pred_region
        _
      $region28: #{vae_neg_elbo.1} parent=11 // pred_fallthru
        _
      // Predicated region
      $region29: #{vae_neg_elbo.1} parent=11 // pred_check
        %p289 = pneg %p173
      $region30: #{vae_neg_elbo.1} parent=11 // pred_check_branch
        %291 = sbr.rel (%p289) target = $region32
      $region31: #{vae_neg_elbo.1} parent=11 // pred_region
        _
      $region32: #{vae_neg_elbo.1} parent=11 // pred_fallthru
        _
      // Predicated region
      $region33: #{vae_neg_elbo.1} parent=11 // pred_check
        %p292 = pneg %p194
      $region34: #{vae_neg_elbo.1} parent=11 // pred_check_branch
        %294 = sbr.rel (%p292) target = $region36
      $region35: #{vae_neg_elbo.1} parent=11 // pred_region
        _
      $region36: #{vae_neg_elbo.1} parent=11 // pred_fallthru
        _
      // Predicated region
      $region37: #{vae_neg_elbo.1} parent=11 // pred_check
        %p295 = pneg %p215
      $region38: #{vae_neg_elbo.1} parent=11 // pred_check_branch
        %297 = sbr.rel (%p295) target = $region40
      $region39: #{vae_neg_elbo.1} parent=11 // pred_region
        _
      $region40: #{vae_neg_elbo.1} parent=11 // pred_fallthru
        _
      // Predicated region
      $region41: #{vae_neg_elbo.1} parent=11 // pred_check
        %p298 = pneg %p236
      $region42: #{vae_neg_elbo.1} parent=11 // pred_check_branch
        %300 = sbr.rel (%p298) target = $region44
      $region43: #{vae_neg_elbo.1} parent=11 // pred_region
        _
      $region44: #{vae_neg_elbo.1} parent=11 // pred_fallthru
        _
    $region12: #{vae_neg_elbo.1} parent=5 // pred_fallthru
      _
    %p301 = scmp.lt.s32.totalorder %s16, 2
    // Predicated region
    $region45: #{vae_neg_elbo.1} parent=5 // pred_check
      %p302 = pneg %p301
    $region46: #{vae_neg_elbo.1} parent=5 // pred_check_branch
      %304 = sbr.rel (%p302) target = $region48
    $region47: #{vae_neg_elbo.1} parent=5 // pred_region
      // Predicated region
      $region49: #{vae_neg_elbo.1} parent=47 // pred_check
        %p305 = pneg %p36
      $region50: #{vae_neg_elbo.1} parent=47 // pred_check_branch
        %307 = sbr.rel (%p305) target = $region52
      $region51: #{vae_neg_elbo.1} parent=47 // pred_region
        %s308 = smul.u32 14, %s16
        %p309 = scmp.lt.s32.totalorder %s308, 27
        %s310 = scalar_select %p309, %s308, 27
        %s311 = smul.addr %s310, 8
        %s312 = scalar_lea.vmem %s0, %s311
        %s313 = smul.u32 14, %s16
      $region52: #{vae_neg_elbo.1} parent=47 // pred_fallthru
        _
      // Predicated region
      $region53: #{vae_neg_elbo.1} parent=47 // pred_check
        %p314 = pneg %p62
      $region54: #{vae_neg_elbo.1} parent=47 // pred_check_branch
        %316 = sbr.rel (%p314) target = $region56
      $region55: #{vae_neg_elbo.1} parent=47 // pred_region
        %s317 = smul.u32 14, %s16
        %p318 = scmp.lt.s32.totalorder %s317, 27
        %s319 = scalar_select %p318, %s317, 27
        %s320 = smul.addr %s319, 4
        %s321 = scalar_lea.vmem %s1, %s320
        %s322 = smul.u32 14, %s16
      $region56: #{vae_neg_elbo.1} parent=47 // pred_fallthru
        _
    $region48: #{vae_neg_elbo.1} parent=5 // pred_fallthru
      _
    %p323 = scmp.le.s32.totalorder 1, %s16
    %p324 = scmp.lt.s32.totalorder %s16, 3
    %p325 = pnand %p323, %p324
    %p326 = pneg %p325
    // Predicated region
    $region57: #{vae_neg_elbo.1} parent=5 // pred_check
      _
    $region58: #{vae_neg_elbo.1} parent=5 // pred_check_branch
      %328 = sbr.rel (%p325) target = $region60
    $region59: #{vae_neg_elbo.1} parent=5 // pred_region
      %s329 = ssub.s32 %s16, 1
      %s330 = smul.u32 14, %s21
      %p331 = scmp.lt.s32.totalorder %s330, 27
      %s332 = scalar_select %p331, %s330, 27
      %s333 = smul.addr %s332, 8
      %s334 = scalar_lea.vmem %s0, %s333
      %p335 = pneg %p42
      %p336 = pneg %p39
      %s337 = smul.u32 14, %s21
      %p338 = scmp.lt.s32.totalorder %s337, 27
      %s339 = scalar_select %p338, %s337, 27
      %s340 = smul.addr %s339, 4
      %s341 = scalar_lea.vmem %s1, %s340
      %p342 = pneg %p68
      %p343 = pneg %p65
      %p344 = pneg %p89
      %p345 = pneg %p86
      %p346 = pneg %p110
      %p347 = pneg %p107
      %p348 = pneg %p131
      %p349 = pneg %p128
      %p350 = pneg %p152
      %p351 = pneg %p149
      %p352 = pneg %p173
      %p353 = pneg %p170
      %p354 = pneg %p194
      %p355 = pneg %p191
      %p356 = pneg %p215
      %p357 = pneg %p212
      %p358 = pneg %p236
      %p359 = pneg %p233
      %p360 = pneg %p262
      %p361 = pneg %p259
      %p362 = scmp.lt.s32.totalorder %s21, 1
      %s363 = scalar_select %p362, %s21, 1
      %s364 = smul.addr %s363, 8
      %s365 = scalar_lea.vmem %s10, %s364
      %s366 = smul.u32 14, %s21
      %p367 = scmp.lt.s32.totalorder %s366, 27
      %s368 = scalar_select %p367, %s366, 27
      %s369 = smul.addr %s368, 8
      %s370 = scalar_lea.vmem %s0, %s369
      %s371 = smul.u32 14, %s21
      %s372 = smul.u32 14, %s21
      %p373 = scmp.lt.s32.totalorder %s372, 27
      %s374 = scalar_select %p373, %s372, 27
      %s375 = smul.addr %s374, 4
      %s376 = scalar_lea.vmem %s1, %s375
      %s377 = smul.u32 14, %s21
      %p378 = scmp.lt.s32.totalorder %s21, 1
      %s379 = scalar_select %p378, %s21, 1
      %s380 = smul.addr %s379, 8
      %s381 = scalar_lea.vmem %s10, %s380
      %v383 = vld [vmem:[%s370] sm:$0xff]
      %v384 = vld [vmem:[%s370 + $0x8] sm:$0xff]
      %v385 = vld [vmem:[%s370 + $0x10] sm:$0xff]
      %v386 = vld [vmem:[%s370 + $0x18] sm:$0xff]
      %v387 = vld [vmem:[%s370 + $0x20] sm:$0xff]
      %v388 = vld [vmem:[%s370 + $0x28] sm:$0xff]
      %v389 = vld [vmem:[%s370 + $0x30] sm:$0xff]
      %v390 = vld [vmem:[%s370 + $0x38] sm:$0xff]
      %v391 = vld [vmem:[%s370 + $0x40] sm:$0xff]
      %v392 = vld [vmem:[%s370 + $0x48] sm:$0xff]
      %v393 = vld [vmem:[%s370 + $0x50] sm:$0xff]
      %v394 = vld [vmem:[%s370 + $0x58] sm:$0xff]
      %v395 = vld [vmem:[%s370 + $0x60] sm:$0xff]
      %v396 = vld [vmem:[%s370 + $0x68] sm:$0xff]
      %v397 = vpack.c.bf16 %v384, %v383
      %v398 = vpack.c.bf16 %v386, %v385
      %v399 = vpack.c.bf16 %v388, %v387
      %v400 = vpack.c.bf16 %v390, %v389
      %v401 = vpack.c.bf16 %v392, %v391
      %v402 = vpack.c.bf16 %v394, %v393
      %v403 = vpack.c.bf16 %v396, %v395
      %v404 = vld [vmem:[%s2] sm:$0xf]
      %v405 = vld [vmem:[%s2 + $0x4] sm:$0xf]
      %v406 = vld [vmem:[%s2 + $0x8] sm:$0xf]
      %v407 = vld [vmem:[%s2 + $0xc] sm:$0xf]
      %v408 = vld [vmem:[%s3] sm:$0x1]
      %v410 = vlaneseq
      %v411 = vshrl.u32 %v410, 7
      %v412 = vsub.s32 0, %v411
      %v413 = vrot.slane %v408, %v412
      %v419 = vunpack.c.l.b16 %v404
      %v420 = vunpack.c.l.b16 %v405
      %v421 = vunpack.c.l.b16 %v406
      %v422 = vunpack.c.l.b16 %v407
      %v423 = vpack.c.b16 %v420, %v419
      %v424 = vpack.c.b16 %v422, %v421
      %vm427 = vcmask 261120
      %v429 = vsel %vm427, %v397, 0
      %v432 = vsel %vm427, %v398, 0
      %v435 = vsel %vm427, %v399, 0
      %v438 = vsel %vm427, %v400, 0
      %v441 = vsel %vm427, %v401, 0
      %v444 = vsel %vm427, %v402, 0
      %v447 = vsel %vm427, %v403, 0
      %449 = vmatprep.subr.bf16.mxu0 0
      %450 = vmatpush1.bf16.msra.mxu0 0
      %451 = vmatprep.subr.bf16.mxu0 0
      %452 = vmatpush1.bf16.msra.mxu0 0
      %453 = vmatprep.subr.bf16.mxu0 0
      %454 = vmatpush1.bf16.msra.mxu0 0
      %455 = vmatprep.subr.bf16.mxu0 0
      %456 = vmatpush1.bf16.msra.mxu0 0
      %457 = vmatprep.subr.bf16.mxu0 0
      %458 = vmatpush1.bf16.msra.mxu0 0
      %459 = vmatprep.subr.bf16.mxu0 0
      %460 = vmatpush1.bf16.msra.mxu0 0
      %461 = vmatprep.subr.bf16.mxu0 0
      %462 = vmatpush1.bf16.msra.mxu0 %v424
      %463 = vmatprep.subr.bf16.mxu0 0
      %464 = vmatpush1.bf16.msra.mxu0 %v423
      %465 = vmatprep.subr.bf16.mxu0 0
      %466 = vmatpush2.bf16.msra.mxu0 0
      %467 = vmatprep.subr.bf16.mxu0 0
      %468 = vmatpush2.bf16.msra.mxu0 0
      %469 = vmatprep.subr.bf16.mxu0 0
      %470 = vmatpush2.bf16.msra.mxu0 0
      %471 = vmatprep.subr.bf16.mxu0 0
      %472 = vmatpush2.bf16.msra.mxu0 0
      %473 = vmatprep.subr.bf16.mxu0 0
      %474 = vmatpush2.bf16.msra.mxu0 0
      %475 = vmatprep.subr.bf16.mxu0 0
      %476 = vmatpush2.bf16.msra.mxu0 0
      %477 = vmatprep.subr.bf16.mxu0 0
      %478 = vmatpush2.bf16.msra.mxu0 0
      %479 = vmatprep.subr.bf16.mxu0 0
      %480 = vmatpush2.bf16.msra.mxu0 0
      %481 = vmatprep.mubr.bf16.mxu0 0
      %482 = vmatmul.mubr.bf16.gmra.mxu0 %v429
      %v483 = vpop.f32.mrf.mxu0
      %v484 = vadd.f32 %v413, %v483
      %v485 = vpop.f32.mrf.mxu0
      %v486 = vpop.f32.mrf.mxu0
      %v487 = vadd.f32 %v413, %v486
      %v488 = vpop.f32.mrf.mxu0
      %489 = vmatprep.mubr.bf16.mxu0 0
      %490 = vmatmul.mubr.bf16.gmra.mxu0 %v432
      %v491 = vpop.f32.mrf.mxu0
      %v492 = vadd.f32 %v413, %v491
      %v493 = vpop.f32.mrf.mxu0
      %v494 = vpop.f32.mrf.mxu0
      %v495 = vadd.f32 %v413, %v494
      %v496 = vpop.f32.mrf.mxu0
      %497 = vmatprep.mubr.bf16.mxu0 0
      %498 = vmatmul.mubr.bf16.gmra.mxu0 %v435
      %v499 = vpop.f32.mrf.mxu0
      %v500 = vadd.f32 %v413, %v499
      %v501 = vpop.f32.mrf.mxu0
      %v502 = vpop.f32.mrf.mxu0
      %v503 = vadd.f32 %v413, %v502
      %v504 = vpop.f32.mrf.mxu0
      %505 = vmatprep.mubr.bf16.mxu0 0
      %506 = vmatmul.mubr.bf16.gmra.mxu0 %v438
      %v507 = vpop.f32.mrf.mxu0
      %v508 = vadd.f32 %v413, %v507
      %v509 = vpop.f32.mrf.mxu0
      %v510 = vpop.f32.mrf.mxu0
      %v511 = vadd.f32 %v413, %v510
      %v512 = vpop.f32.mrf.mxu0
      %513 = vmatprep.mubr.bf16.mxu0 0
      %514 = vmatmul.mubr.bf16.gmra.mxu0 %v441
      %v515 = vpop.f32.mrf.mxu0
      %v516 = vadd.f32 %v413, %v515
      %v517 = vpop.f32.mrf.mxu0
      %v518 = vpop.f32.mrf.mxu0
      %v519 = vadd.f32 %v413, %v518
      %v520 = vpop.f32.mrf.mxu0
      %521 = vmatprep.mubr.bf16.mxu0 0
      %522 = vmatmul.mubr.bf16.gmra.mxu0 %v444
      %v523 = vpop.f32.mrf.mxu0
      %v524 = vadd.f32 %v413, %v523
      %v525 = vpop.f32.mrf.mxu0
      %v526 = vpop.f32.mrf.mxu0
      %v527 = vadd.f32 %v413, %v526
      %v528 = vpop.f32.mrf.mxu0
      %529 = vmatprep.mubr.bf16.mxu0 0
      %530 = vmatmul.mubr.bf16.gmra.mxu0 %v447
      %v531 = vpop.f32.mrf.mxu0
      %v532 = vadd.f32 %v413, %v531
      %v533 = vpop.f32.mrf.mxu0
      %v534 = vpop.f32.mrf.mxu0
      %v535 = vadd.f32 %v413, %v534
      %v536 = vpop.f32.mrf.mxu0
      %537 = vdwg.mxu0
      %v538 = vmax.f32 %v484, 0.0
      %v539 = vmax.f32 %v487, 0.0
      %v540 = vmax.f32 %v492, 0.0
      %v541 = vmax.f32 %v495, 0.0
      %v542 = vmax.f32 %v500, 0.0
      %v543 = vmax.f32 %v503, 0.0
      %v544 = vmax.f32 %v508, 0.0
      %v545 = vmax.f32 %v511, 0.0
      %v546 = vmax.f32 %v516, 0.0
      %v547 = vmax.f32 %v519, 0.0
      %v548 = vmax.f32 %v524, 0.0
      %v549 = vmax.f32 %v527, 0.0
      %v550 = vmax.f32 %v532, 0.0
      %v551 = vmax.f32 %v535, 0.0
      %v552 = vpack.c.bf16 %v539, %v538
      %v553 = vpack.c.bf16 %v541, %v540
      %v554 = vpack.c.bf16 %v543, %v542
      %v555 = vpack.c.bf16 %v545, %v544
      %v556 = vpack.c.bf16 %v547, %v546
      %v557 = vpack.c.bf16 %v549, %v548
      %v558 = vpack.c.bf16 %v551, %v550
      %v559 = vld [vmem:[%s4] sm:$0xff]
      %v560 = vld [vmem:[%s4 + $0x8] sm:$0xff]
      %v561 = vld [vmem:[%s4 + $0x10] sm:$0xff]
      %v562 = vld [vmem:[%s4 + $0x18] sm:$0xff]
      %v563 = vld [vmem:[%s5] sm:$0x3]
      %v565 = vlaneseq
      %v566 = vshrl.u32 %v565, 7
      %v567 = vsub.s32 0, %v566
      %v568 = vrot.slane %v563, %v567
      %v569 = vlaneseq
      %v570 = vshrl.u32 %v569, 7
      %v571 = vsub.s32 1, %v570
      %v572 = vrot.slane %v563, %v571
      %v579 = vunpack.c.l.b16 %v559
      %v580 = vunpack.c.h.b16 %v559
      %v581 = vunpack.c.l.b16 %v560
      %v582 = vunpack.c.h.b16 %v560
      %v583 = vunpack.c.l.b16 %v561
      %v584 = vunpack.c.h.b16 %v561
      %v585 = vunpack.c.l.b16 %v562
      %v586 = vunpack.c.h.b16 %v562
      %v587 = vpack.c.b16 %v581, %v579
      %v588 = vpack.c.b16 %v582, %v580
      %v589 = vpack.c.b16 %v585, %v583
      %v590 = vpack.c.b16 %v586, %v584
      %v596 = vsel %vm427, %v552, 0
      %v599 = vsel %vm427, %v553, 0
      %v602 = vsel %vm427, %v554, 0
      %v605 = vsel %vm427, %v555, 0
      %v608 = vsel %vm427, %v556, 0
      %v611 = vsel %vm427, %v557, 0
      %v614 = vsel %vm427, %v558, 0
      %616 = vmatprep.subr.bf16.mxu0 0
      %617 = vmatpush1.bf16.msra.mxu0 0
      %618 = vmatprep.subr.bf16.mxu0 0
      %619 = vmatpush1.bf16.msra.mxu0 0
      %620 = vmatprep.subr.bf16.mxu0 0
      %621 = vmatpush1.bf16.msra.mxu0 0
      %622 = vmatprep.subr.bf16.mxu0 0
      %623 = vmatpush1.bf16.msra.mxu0 0
      %624 = vmatprep.subr.bf16.mxu0 0
      %625 = vmatpush1.bf16.msra.mxu0 0
      %626 = vmatprep.subr.bf16.mxu0 0
      %627 = vmatpush1.bf16.msra.mxu0 0
      %628 = vmatprep.subr.bf16.mxu0 %v590
      %629 = vmatpush1.bf16.msra.mxu0 %v589
      %630 = vmatprep.subr.bf16.mxu0 %v588
      %631 = vmatpush1.bf16.msra.mxu0 %v587
      %632 = vmatprep.subr.bf16.mxu0 0
      %633 = vmatpush2.bf16.msra.mxu0 0
      %634 = vmatprep.subr.bf16.mxu0 0
      %635 = vmatpush2.bf16.msra.mxu0 0
      %636 = vmatprep.subr.bf16.mxu0 0
      %637 = vmatpush2.bf16.msra.mxu0 0
      %638 = vmatprep.subr.bf16.mxu0 0
      %639 = vmatpush2.bf16.msra.mxu0 0
      %640 = vmatprep.subr.bf16.mxu0 0
      %641 = vmatpush2.bf16.msra.mxu0 0
      %642 = vmatprep.subr.bf16.mxu0 0
      %643 = vmatpush2.bf16.msra.mxu0 0
      %644 = vmatprep.subr.bf16.mxu0 0
      %645 = vmatpush2.bf16.msra.mxu0 0
      %646 = vmatprep.subr.bf16.mxu0 0
      %647 = vmatpush2.bf16.msra.mxu0 0
      %648 = vmatprep.mubr.bf16.mxu0 0
      %649 = vmatmul.mubr.bf16.gmra.mxu0 %v596
      %v650 = vpop.f32.mrf.mxu0
      %v651 = vadd.f32 %v568, %v650
      %v652 = vpop.f32.mrf.mxu0
      %v653 = vadd.f32 %v572, %v652
      %v654 = vpop.f32.mrf.mxu0
      %v655 = vadd.f32 %v568, %v654
      %v656 = vpop.f32.mrf.mxu0
      %v657 = vadd.f32 %v572, %v656
      %658 = vmatprep.mubr.bf16.mxu0 0
      %659 = vmatmul.mubr.bf16.gmra.mxu0 %v599
      %v660 = vpop.f32.mrf.mxu0
      %v661 = vadd.f32 %v568, %v660
      %v662 = vpop.f32.mrf.mxu0
      %v663 = vadd.f32 %v572, %v662
      %v664 = vpop.f32.mrf.mxu0
      %v665 = vadd.f32 %v568, %v664
      %v666 = vpop.f32.mrf.mxu0
      %v667 = vadd.f32 %v572, %v666
      %668 = vmatprep.mubr.bf16.mxu0 0
      %669 = vmatmul.mubr.bf16.gmra.mxu0 %v602
      %v670 = vpop.f32.mrf.mxu0
      %v671 = vadd.f32 %v568, %v670
      %v672 = vpop.f32.mrf.mxu0
      %v673 = vadd.f32 %v572, %v672
      %v674 = vpop.f32.mrf.mxu0
      %v675 = vadd.f32 %v568, %v674
      %v676 = vpop.f32.mrf.mxu0
      %v677 = vadd.f32 %v572, %v676
      %678 = vmatprep.mubr.bf16.mxu0 0
      %679 = vmatmul.mubr.bf16.gmra.mxu0 %v605
      %v680 = vpop.f32.mrf.mxu0
      %v681 = vadd.f32 %v568, %v680
      %v682 = vpop.f32.mrf.mxu0
      %v683 = vadd.f32 %v572, %v682
      %v684 = vpop.f32.mrf.mxu0
      %v685 = vadd.f32 %v568, %v684
      %v686 = vpop.f32.mrf.mxu0
      %v687 = vadd.f32 %v572, %v686
      %688 = vmatprep.mubr.bf16.mxu0 0
      %689 = vmatmul.mubr.bf16.gmra.mxu0 %v608
      %v690 = vpop.f32.mrf.mxu0
      %v691 = vadd.f32 %v568, %v690
      %v692 = vpop.f32.mrf.mxu0
      %v693 = vadd.f32 %v572, %v692
      %v694 = vpop.f32.mrf.mxu0
      %v695 = vadd.f32 %v568, %v694
      %v696 = vpop.f32.mrf.mxu0
      %v697 = vadd.f32 %v572, %v696
      %698 = vmatprep.mubr.bf16.mxu0 0
      %699 = vmatmul.mubr.bf16.gmra.mxu0 %v611
      %v700 = vpop.f32.mrf.mxu0
      %v701 = vadd.f32 %v568, %v700
      %v702 = vpop.f32.mrf.mxu0
      %v703 = vadd.f32 %v572, %v702
      %v704 = vpop.f32.mrf.mxu0
      %v705 = vadd.f32 %v568, %v704
      %v706 = vpop.f32.mrf.mxu0
      %v707 = vadd.f32 %v572, %v706
      %708 = vmatprep.mubr.bf16.mxu0 0
      %709 = vmatmul.mubr.bf16.gmra.mxu0 %v614
      %v710 = vpop.f32.mrf.mxu0
      %v711 = vadd.f32 %v568, %v710
      %v712 = vpop.f32.mrf.mxu0
      %v713 = vadd.f32 %v572, %v712
      %v714 = vpop.f32.mrf.mxu0
      %v715 = vadd.f32 %v568, %v714
      %v716 = vpop.f32.mrf.mxu0
      %v717 = vadd.f32 %v572, %v716
      %718 = vdwg.mxu0
      %v719 = vmul.f32 %v653, 1.442695
      %v720 = vpow.pop %v719
      %v721 = vmul.f32 %v657, 1.442695
      %v722 = vpow.pop %v721
      %v723 = vmul.f32 %v663, 1.442695
      %v724 = vpow.pop %v723
      %v725 = vmul.f32 %v667, 1.442695
      %v726 = vpow.pop %v725
      %v727 = vmul.f32 %v673, 1.442695
      %v728 = vpow.pop %v727
      %v729 = vmul.f32 %v677, 1.442695
      %v730 = vpow.pop %v729
      %v731 = vmul.f32 %v683, 1.442695
      %v732 = vpow.pop %v731
      %v733 = vmul.f32 %v687, 1.442695
      %v734 = vpow.pop %v733
      %v735 = vmul.f32 %v693, 1.442695
      %v736 = vpow.pop %v735
      %v737 = vmul.f32 %v697, 1.442695
      %v738 = vpow.pop %v737
      %v739 = vmul.f32 %v703, 1.442695
      %v740 = vpow.pop %v739
      %v741 = vmul.f32 %v707, 1.442695
      %v742 = vpow.pop %v741
      %v743 = vmul.f32 %v713, 1.442695
      %v744 = vpow.pop %v743
      %v745 = vmul.f32 %v717, 1.442695
      %v746 = vpow.pop %v745
      %v747 = vmul.f32 %v720, %v720
      %v748 = vmul.f32 %v722, %v722
      %v749 = vmul.f32 %v724, %v724
      %v750 = vmul.f32 %v726, %v726
      %v751 = vmul.f32 %v728, %v728
      %v752 = vmul.f32 %v730, %v730
      %v753 = vmul.f32 %v732, %v732
      %v754 = vmul.f32 %v734, %v734
      %v755 = vmul.f32 %v736, %v736
      %v756 = vmul.f32 %v738, %v738
      %v757 = vmul.f32 %v740, %v740
      %v758 = vmul.f32 %v742, %v742
      %v759 = vmul.f32 %v744, %v744
      %v760 = vmul.f32 %v746, %v746
      %761 = vst [vmem:[#allocation2] sm:$0xff] 0.0
      %762 = vst [vmem:[#allocation2 + $0x8] sm:$0xff] 0.0
      %763 = vst [vmem:[#allocation2 + $0x10] sm:$0xff] 0.0
      %764 = vst [vmem:[#allocation2 + $0x18] sm:$0xff] 0.0
      %765 = vst [vmem:[#allocation2 + $0x20] sm:$0xff] 0.0
      %766 = vst [vmem:[#allocation2 + $0x28] sm:$0xff] 0.0
      %767 = vst [vmem:[#allocation2 + $0x30] sm:$0xff] 0.0
      %768 = vst [vmem:[#allocation2 + $0x38] sm:$0xff] 0.0
      %769 = vst [vmem:[#allocation2 + $0x40] sm:$0xff] 0.0
      %770 = vst [vmem:[#allocation2 + $0x48] sm:$0xff] 0.0
      %771 = vst [vmem:[#allocation2 + $0x50] sm:$0xff] 0.0
      %772 = vst [vmem:[#allocation2 + $0x58] sm:$0xff] 0.0
      %773 = vst [vmem:[#allocation2 + $0x60] sm:$0xff] 0.0
      %774 = vst [vmem:[#allocation2 + $0x68] sm:$0xff] 0.0
      %v775 = vld [vmem:[%s376] sm:$0xf]
      %v776 = vld [vmem:[%s376 + $0x4] sm:$0xf]
      %v777 = vld [vmem:[%s376 + $0x8] sm:$0xf]
      %v778 = vld [vmem:[%s376 + $0xc] sm:$0xf]
      %v779 = vld [vmem:[%s376 + $0x10] sm:$0xf]
      %v780 = vld [vmem:[%s376 + $0x14] sm:$0xf]
      %v781 = vld [vmem:[%s376 + $0x18] sm:$0xf]
      %v782 = vld [vmem:[%s376 + $0x1c] sm:$0xf]
      %v783 = vld [vmem:[%s376 + $0x20] sm:$0xf]
      %v784 = vld [vmem:[%s376 + $0x24] sm:$0xf]
      %v785 = vld [vmem:[%s376 + $0x28] sm:$0xf]
      %v786 = vld [vmem:[%s376 + $0x2c] sm:$0xf]
      %v787 = vld [vmem:[%s376 + $0x30] sm:$0xf]
      %v788 = vld [vmem:[%s376 + $0x34] sm:$0xf]
      %v789 = vunpack.c.l.bf16 %v775
      %v790 = vunpack.c.l.bf16 %v776
      %v791 = vunpack.c.l.bf16 %v777
      %v792 = vunpack.c.l.bf16 %v778
      %v793 = vunpack.c.l.bf16 %v779
      %v794 = vunpack.c.l.bf16 %v780
      %v795 = vunpack.c.l.bf16 %v781
      %v796 = vunpack.c.l.bf16 %v782
      %v797 = vunpack.c.l.bf16 %v783
      %v798 = vunpack.c.l.bf16 %v784
      %v799 = vunpack.c.l.bf16 %v785
      %v800 = vunpack.c.l.bf16 %v786
      %v801 = vunpack.c.l.bf16 %v787
      %v802 = vunpack.c.l.bf16 %v788
      %vm803 = vcmask 64512
      %804 = vst.msk [vmem:[#allocation2] sm:$0xff] %vm803, %v789
      %805 = vst.msk [vmem:[#allocation2 + $0x8] sm:$0xff] %vm803, %v790
      %806 = vst.msk [vmem:[#allocation2 + $0x10] sm:$0xff] %vm803, %v791
      %807 = vst.msk [vmem:[#allocation2 + $0x18] sm:$0xff] %vm803, %v792
      %808 = vst.msk [vmem:[#allocation2 + $0x20] sm:$0xff] %vm803, %v793
      %809 = vst.msk [vmem:[#allocation2 + $0x28] sm:$0xff] %vm803, %v794
      %810 = vst.msk [vmem:[#allocation2 + $0x30] sm:$0xff] %vm803, %v795
      %811 = vst.msk [vmem:[#allocation2 + $0x38] sm:$0xff] %vm803, %v796
      %812 = vst.msk [vmem:[#allocation2 + $0x40] sm:$0xff] %vm803, %v797
      %813 = vst.msk [vmem:[#allocation2 + $0x48] sm:$0xff] %vm803, %v798
      %814 = vst.msk [vmem:[#allocation2 + $0x50] sm:$0xff] %vm803, %v799
      %815 = vst.msk [vmem:[#allocation2 + $0x58] sm:$0xff] %vm803, %v800
      %816 = vst.msk [vmem:[#allocation2 + $0x60] sm:$0xff] %vm803, %v801
      %817 = vst.msk [vmem:[#allocation2 + $0x68] sm:$0xff] %vm803, %v802
      %v818 = vld [vmem:[#allocation2] sm:$0xff]
      %v819 = vld [vmem:[#allocation2 + $0x8] sm:$0xff]
      %v820 = vld [vmem:[#allocation2 + $0x10] sm:$0xff]
      %v821 = vld [vmem:[#allocation2 + $0x18] sm:$0xff]
      %v822 = vld [vmem:[#allocation2 + $0x20] sm:$0xff]
      %v823 = vld [vmem:[#allocation2 + $0x28] sm:$0xff]
      %v824 = vld [vmem:[#allocation2 + $0x30] sm:$0xff]
      %v825 = vld [vmem:[#allocation2 + $0x38] sm:$0xff]
      %v826 = vld [vmem:[#allocation2 + $0x40] sm:$0xff]
      %v827 = vld [vmem:[#allocation2 + $0x48] sm:$0xff]
      %v828 = vld [vmem:[#allocation2 + $0x50] sm:$0xff]
      %v829 = vld [vmem:[#allocation2 + $0x58] sm:$0xff]
      %v830 = vld [vmem:[#allocation2 + $0x60] sm:$0xff]
      %v831 = vld [vmem:[#allocation2 + $0x68] sm:$0xff]
      %v832 = vmul.f32 %v720, %v818
      %v833 = vmul.f32 %v722, %v819
      %v834 = vmul.f32 %v724, %v820
      %v835 = vmul.f32 %v726, %v821
      %v836 = vmul.f32 %v728, %v822
      %v837 = vmul.f32 %v730, %v823
      %v838 = vmul.f32 %v732, %v824
      %v839 = vmul.f32 %v734, %v825
      %v840 = vmul.f32 %v736, %v826
      %v841 = vmul.f32 %v738, %v827
      %v842 = vmul.f32 %v740, %v828
      %v843 = vmul.f32 %v742, %v829
      %v844 = vmul.f32 %v744, %v830
      %v845 = vmul.f32 %v746, %v831
      %v846 = vadd.f32 %v651, %v832
      %v847 = vadd.f32 %v655, %v833
      %v848 = vadd.f32 %v661, %v834
      %v849 = vadd.f32 %v665, %v835
      %v850 = vadd.f32 %v671, %v836
      %v851 = vadd.f32 %v675, %v837
      %v852 = vadd.f32 %v681, %v838
      %v853 = vadd.f32 %v685, %v839
      %v854 = vadd.f32 %v691, %v840
      %v855 = vadd.f32 %v695, %v841
      %v856 = vadd.f32 %v701, %v842
      %v857 = vadd.f32 %v705, %v843
      %v858 = vadd.f32 %v711, %v844
      %v859 = vadd.f32 %v715, %v845
      %v860 = vpack.c.bf16 %v847, %v846
      %v861 = vpack.c.bf16 %v849, %v848
      %v862 = vpack.c.bf16 %v851, %v850
      %v863 = vpack.c.bf16 %v853, %v852
      %v864 = vpack.c.bf16 %v855, %v854
      %v865 = vpack.c.bf16 %v857, %v856
      %v866 = vpack.c.bf16 %v859, %v858
      %v867 = vld [vmem:[%s6] sm:$0xf]
      %v868 = vld [vmem:[%s6 + $0x4] sm:$0xf]
      %v869 = vld [vmem:[%s6 + $0x8] sm:$0xf]
      %v870 = vld [vmem:[%s6 + $0xc] sm:$0xf]
      %v871 = vld [vmem:[%s6 + $0x10] sm:$0xf]
      %v872 = vld [vmem:[%s6 + $0x14] sm:$0xf]
      %v873 = vld [vmem:[%s6 + $0x18] sm:$0xf]
      %v874 = vld [vmem:[%s6 + $0x1c] sm:$0xf]
      %v875 = vld [vmem:[%s6 + $0x20] sm:$0xf]
      %v876 = vld [vmem:[%s6 + $0x24] sm:$0xf]
      %v877 = vld [vmem:[%s6 + $0x28] sm:$0xf]
      %v878 = vld [vmem:[%s6 + $0x2c] sm:$0xf]
      %v879 = vld [vmem:[%s6 + $0x30] sm:$0xf]
      %v880 = vld [vmem:[%s6 + $0x34] sm:$0xf]
      %v881 = vld [vmem:[%s6 + $0x38] sm:$0xf]
      %v882 = vld [vmem:[%s6 + $0x3c] sm:$0xf]
      %v883 = vld [vmem:[%s7] sm:$0x1]
      %v885 = vlaneseq
      %v886 = vshrl.u32 %v885, 7
      %v887 = vsub.s32 0, %v886
      %v888 = vrot.slane %v883, %v887
      %v906 = vunpack.c.l.b16 %v867
      %v907 = vunpack.c.l.b16 %v868
      %v908 = vunpack.c.l.b16 %v869
      %v909 = vunpack.c.l.b16 %v870
      %v910 = vunpack.c.l.b16 %v871
      %v911 = vunpack.c.l.b16 %v872
      %v912 = vunpack.c.l.b16 %v873
      %v913 = vunpack.c.l.b16 %v874
      %v914 = vunpack.c.l.b16 %v875
      %v915 = vunpack.c.l.b16 %v876
      %v916 = vunpack.c.l.b16 %v877
      %v917 = vunpack.c.l.b16 %v878
      %v918 = vunpack.c.l.b16 %v879
      %v919 = vunpack.c.l.b16 %v880
      %v920 = vunpack.c.l.b16 %v881
      %v921 = vunpack.c.l.b16 %v882
      %v922 = vpack.c.b16 %v907, %v906
      %v923 = vpack.c.b16 %v909, %v908
      %v924 = vpack.c.b16 %v911, %v910
      %v925 = vpack.c.b16 %v913, %v912
      %v926 = vpack.c.b16 %v915, %v914
      %v927 = vpack.c.b16 %v917, %v916
      %v928 = vpack.c.b16 %v919, %v918
      %v929 = vpack.c.b16 %v921, %v920
      %938 = vmatprep.subr.bf16.mxu0 0
      %939 = vmatpush1.bf16.msra.mxu0 %v929
      %940 = vmatprep.subr.bf16.mxu0 0
      %941 = vmatpush1.bf16.msra.mxu0 %v928
      %942 = vmatprep.subr.bf16.mxu0 0
      %943 = vmatpush1.bf16.msra.mxu0 %v927
      %944 = vmatprep.subr.bf16.mxu0 0
      %945 = vmatpush1.bf16.msra.mxu0 %v926
      %946 = vmatprep.subr.bf16.mxu0 0
      %947 = vmatpush1.bf16.msra.mxu0 %v925
      %948 = vmatprep.subr.bf16.mxu0 0
      %949 = vmatpush1.bf16.msra.mxu0 %v924
      %950 = vmatprep.subr.bf16.mxu0 0
      %951 = vmatpush1.bf16.msra.mxu0 %v923
      %952 = vmatprep.subr.bf16.mxu0 0
      %953 = vmatpush1.bf16.msra.mxu0 %v922
      %954 = vmatprep.subr.bf16.mxu0 0
      %955 = vmatpush2.bf16.msra.mxu0 0
      %956 = vmatprep.subr.bf16.mxu0 0
      %957 = vmatpush2.bf16.msra.mxu0 0
      %958 = vmatprep.subr.bf16.mxu0 0
      %959 = vmatpush2.bf16.msra.mxu0 0
      %960 = vmatprep.subr.bf16.mxu0 0
      %961 = vmatpush2.bf16.msra.mxu0 0
      %962 = vmatprep.subr.bf16.mxu0 0
      %963 = vmatpush2.bf16.msra.mxu0 0
      %964 = vmatprep.subr.bf16.mxu0 0
      %965 = vmatpush2.bf16.msra.mxu0 0
      %966 = vmatprep.subr.bf16.mxu0 0
      %967 = vmatpush2.bf16.msra.mxu0 0
      %968 = vmatprep.subr.bf16.mxu0 0
      %969 = vmatpush2.bf16.msra.mxu0 0
      %970 = vmatprep.mubr.bf16.mxu0 0
      %971 = vmatmul.mubr.bf16.gmra.mxu0 %v860
      %v972 = vpop.f32.mrf.mxu0
      %v973 = vadd.f32 %v888, %v972
      %v974 = vpop.f32.mrf.mxu0
      %v975 = vpop.f32.mrf.mxu0
      %v976 = vadd.f32 %v888, %v975
      %v977 = vpop.f32.mrf.mxu0
      %978 = vmatprep.mubr.bf16.mxu0 0
      %979 = vmatmul.mubr.bf16.gmra.mxu0 %v861
      %v980 = vpop.f32.mrf.mxu0
      %v981 = vadd.f32 %v888, %v980
      %v982 = vpop.f32.mrf.mxu0
      %v983 = vpop.f32.mrf.mxu0
      %v984 = vadd.f32 %v888, %v983
      %v985 = vpop.f32.mrf.mxu0
      %986 = vmatprep.mubr.bf16.mxu0 0
      %987 = vmatmul.mubr.bf16.gmra.mxu0 %v862
      %v988 = vpop.f32.mrf.mxu0
      %v989 = vadd.f32 %v888, %v988
      %v990 = vpop.f32.mrf.mxu0
      %v991 = vpop.f32.mrf.mxu0
      %v992 = vadd.f32 %v888, %v991
      %v993 = vpop.f32.mrf.mxu0
      %994 = vmatprep.mubr.bf16.mxu0 0
      %995 = vmatmul.mubr.bf16.gmra.mxu0 %v863
      %v996 = vpop.f32.mrf.mxu0
      %v997 = vadd.f32 %v888, %v996
      %v998 = vpop.f32.mrf.mxu0
      %v999 = vpop.f32.mrf.mxu0
      %v1000 = vadd.f32 %v888, %v999
      %v1001 = vpop.f32.mrf.mxu0
      %1002 = vmatprep.mubr.bf16.mxu0 0
      %1003 = vmatmul.mubr.bf16.gmra.mxu0 %v864
      %v1004 = vpop.f32.mrf.mxu0
      %v1005 = vadd.f32 %v888, %v1004
      %v1006 = vpop.f32.mrf.mxu0
      %v1007 = vpop.f32.mrf.mxu0
      %v1008 = vadd.f32 %v888, %v1007
      %v1009 = vpop.f32.mrf.mxu0
      %1010 = vmatprep.mubr.bf16.mxu0 0
      %1011 = vmatmul.mubr.bf16.gmra.mxu0 %v865
      %v1012 = vpop.f32.mrf.mxu0
      %v1013 = vadd.f32 %v888, %v1012
      %v1014 = vpop.f32.mrf.mxu0
      %v1015 = vpop.f32.mrf.mxu0
      %v1016 = vadd.f32 %v888, %v1015
      %v1017 = vpop.f32.mrf.mxu0
      %1018 = vmatprep.mubr.bf16.mxu0 0
      %1019 = vmatmul.mubr.bf16.gmra.mxu0 %v866
      %v1020 = vpop.f32.mrf.mxu0
      %v1021 = vadd.f32 %v888, %v1020
      %v1022 = vpop.f32.mrf.mxu0
      %v1023 = vpop.f32.mrf.mxu0
      %v1024 = vadd.f32 %v888, %v1023
      %v1025 = vpop.f32.mrf.mxu0
      %1026 = vdwg.mxu0
      %v1027 = vmax.f32 %v973, 0.0
      %v1028 = vmax.f32 %v976, 0.0
      %v1029 = vmax.f32 %v981, 0.0
      %v1030 = vmax.f32 %v984, 0.0
      %v1031 = vmax.f32 %v989, 0.0
      %v1032 = vmax.f32 %v992, 0.0
      %v1033 = vmax.f32 %v997, 0.0
      %v1034 = vmax.f32 %v1000, 0.0
      %v1035 = vmax.f32 %v1005, 0.0
      %v1036 = vmax.f32 %v1008, 0.0
      %v1037 = vmax.f32 %v1013, 0.0
      %v1038 = vmax.f32 %v1016, 0.0
      %v1039 = vmax.f32 %v1021, 0.0
      %v1040 = vmax.f32 %v1024, 0.0
      %v1041 = vpack.c.bf16 %v1028, %v1027
      %v1042 = vpack.c.bf16 %v1030, %v1029
      %v1043 = vpack.c.bf16 %v1032, %v1031
      %v1044 = vpack.c.bf16 %v1034, %v1033
      %v1045 = vpack.c.bf16 %v1036, %v1035
      %v1046 = vpack.c.bf16 %v1038, %v1037
      %v1047 = vpack.c.bf16 %v1040, %v1039
      %v1048 = vld [vmem:[%s8] sm:$0xf]
      %v1049 = vld [vmem:[%s8 + $0x4] sm:$0xf]
      %v1050 = vld [vmem:[%s8 + $0x8] sm:$0xf]
      %v1051 = vld [vmem:[%s8 + $0xc] sm:$0xf]
      %v1052 = vld [vmem:[%s9] sm:$0x1]
      %v1053 = vld [vmem:[%s370] sm:$0xff]
      %v1054 = vld [vmem:[%s370 + $0x8] sm:$0xff]
      %v1055 = vld [vmem:[%s370 + $0x10] sm:$0xff]
      %v1056 = vld [vmem:[%s370 + $0x18] sm:$0xff]
      %v1057 = vld [vmem:[%s370 + $0x20] sm:$0xff]
      %v1058 = vld [vmem:[%s370 + $0x28] sm:$0xff]
      %v1059 = vld [vmem:[%s370 + $0x30] sm:$0xff]
      %v1060 = vld [vmem:[%s370 + $0x38] sm:$0xff]
      %v1061 = vld [vmem:[%s370 + $0x40] sm:$0xff]
      %v1062 = vld [vmem:[%s370 + $0x48] sm:$0xff]
      %v1063 = vld [vmem:[%s370 + $0x50] sm:$0xff]
      %v1064 = vld [vmem:[%s370 + $0x58] sm:$0xff]
      %v1065 = vld [vmem:[%s370 + $0x60] sm:$0xff]
      %v1066 = vld [vmem:[%s370 + $0x68] sm:$0xff]
      %v1068 = vlaneseq
      %v1069 = vshrl.u32 %v1068, 7
      %v1070 = vsub.s32 0, %v1069
      %v1071 = vrot.slane %v1052, %v1070
      %v1077 = vunpack.c.l.b16 %v1048
      %v1078 = vunpack.c.l.b16 %v1049
      %v1079 = vunpack.c.l.b16 %v1050
      %v1080 = vunpack.c.l.b16 %v1051
      %v1081 = vpack.c.b16 %v1078, %v1077
      %v1082 = vpack.c.b16 %v1080, %v1079
      %v1086 = vsel %vm427, %v1041, 0
      %v1089 = vsel %vm427, %v1042, 0
      %v1092 = vsel %vm427, %v1043, 0
      %v1095 = vsel %vm427, %v1044, 0
      %v1098 = vsel %vm427, %v1045, 0
      %v1101 = vsel %vm427, %v1046, 0
      %v1104 = vsel %vm427, %v1047, 0
      %1106 = vmatprep.subr.bf16.mxu0 0
      %1107 = vmatpush1.bf16.msra.mxu0 0
      %1108 = vmatprep.subr.bf16.mxu0 0
      %1109 = vmatpush1.bf16.msra.mxu0 0
      %1110 = vmatprep.subr.bf16.mxu0 0
      %1111 = vmatpush1.bf16.msra.mxu0 0
      %1112 = vmatprep.subr.bf16.mxu0 0
      %1113 = vmatpush1.bf16.msra.mxu0 0
      %1114 = vmatprep.subr.bf16.mxu0 0
      %1115 = vmatpush1.bf16.msra.mxu0 0
      %1116 = vmatprep.subr.bf16.mxu0 0
      %1117 = vmatpush1.bf16.msra.mxu0 0
      %1118 = vmatprep.subr.bf16.mxu0 0
      %1119 = vmatpush1.bf16.msra.mxu0 %v1082
      %1120 = vmatprep.subr.bf16.mxu0 0
      %1121 = vmatpush1.bf16.msra.mxu0 %v1081
      %1122 = vmatprep.subr.bf16.mxu0 0
      %1123 = vmatpush2.bf16.msra.mxu0 0
      %1124 = vmatprep.subr.bf16.mxu0 0
      %1125 = vmatpush2.bf16.msra.mxu0 0
      %1126 = vmatprep.subr.bf16.mxu0 0
      %1127 = vmatpush2.bf16.msra.mxu0 0
      %1128 = vmatprep.subr.bf16.mxu0 0
      %1129 = vmatpush2.bf16.msra.mxu0 0
      %1130 = vmatprep.subr.bf16.mxu0 0
      %1131 = vmatpush2.bf16.msra.mxu0 0
      %1132 = vmatprep.subr.bf16.mxu0 0
      %1133 = vmatpush2.bf16.msra.mxu0 0
      %1134 = vmatprep.subr.bf16.mxu0 0
      %1135 = vmatpush2.bf16.msra.mxu0 0
      %1136 = vmatprep.subr.bf16.mxu0 0
      %1137 = vmatpush2.bf16.msra.mxu0 0
      %1138 = vmatprep.mubr.bf16.mxu0 0
      %1139 = vmatmul.mubr.bf16.gmra.mxu0 %v1086
      %v1140 = vpop.f32.mrf.mxu0
      %v1141 = vadd.f32 %v1071, %v1140
      %v1142 = vpop.f32.mrf.mxu0
      %v1143 = vpop.f32.mrf.mxu0
      %v1144 = vadd.f32 %v1071, %v1143
      %v1145 = vpop.f32.mrf.mxu0
      %1146 = vmatprep.mubr.bf16.mxu0 0
      %1147 = vmatmul.mubr.bf16.gmra.mxu0 %v1089
      %v1148 = vpop.f32.mrf.mxu0
      %v1149 = vadd.f32 %v1071, %v1148
      %v1150 = vpop.f32.mrf.mxu0
      %v1151 = vpop.f32.mrf.mxu0
      %v1152 = vadd.f32 %v1071, %v1151
      %v1153 = vpop.f32.mrf.mxu0
      %1154 = vmatprep.mubr.bf16.mxu0 0
      %1155 = vmatmul.mubr.bf16.gmra.mxu0 %v1092
      %v1156 = vpop.f32.mrf.mxu0
      %v1157 = vadd.f32 %v1071, %v1156
      %v1158 = vpop.f32.mrf.mxu0
      %v1159 = vpop.f32.mrf.mxu0
      %v1160 = vadd.f32 %v1071, %v1159
      %v1161 = vpop.f32.mrf.mxu0
      %1162 = vmatprep.mubr.bf16.mxu0 0
      %1163 = vmatmul.mubr.bf16.gmra.mxu0 %v1095
      %v1164 = vpop.f32.mrf.mxu0
      %v1165 = vadd.f32 %v1071, %v1164
      %v1166 = vpop.f32.mrf.mxu0
      %v1167 = vpop.f32.mrf.mxu0
      %v1168 = vadd.f32 %v1071, %v1167
      %v1169 = vpop.f32.mrf.mxu0
      %1170 = vmatprep.mubr.bf16.mxu0 0
      %1171 = vmatmul.mubr.bf16.gmra.mxu0 %v1098
      %v1172 = vpop.f32.mrf.mxu0
      %v1173 = vadd.f32 %v1071, %v1172
      %v1174 = vpop.f32.mrf.mxu0
      %v1175 = vpop.f32.mrf.mxu0
      %v1176 = vadd.f32 %v1071, %v1175
      %v1177 = vpop.f32.mrf.mxu0
      %1178 = vmatprep.mubr.bf16.mxu0 0
      %1179 = vmatmul.mubr.bf16.gmra.mxu0 %v1101
      %v1180 = vpop.f32.mrf.mxu0
      %v1181 = vadd.f32 %v1071, %v1180
      %v1182 = vpop.f32.mrf.mxu0
      %v1183 = vpop.f32.mrf.mxu0
      %v1184 = vadd.f32 %v1071, %v1183
      %v1185 = vpop.f32.mrf.mxu0
      %1186 = vmatprep.mubr.bf16.mxu0 0
      %1187 = vmatmul.mubr.bf16.gmra.mxu0 %v1104
      %v1188 = vpop.f32.mrf.mxu0
      %v1189 = vadd.f32 %v1071, %v1188
      %v1190 = vpop.f32.mrf.mxu0
      %v1191 = vpop.f32.mrf.mxu0
      %v1192 = vadd.f32 %v1071, %v1191
      %v1193 = vpop.f32.mrf.mxu0
      %1194 = vdwg.mxu0
      %v1195 = vsub.f32 %v1053, %v1141
      %v1196 = vsub.f32 %v1054, %v1144
      %v1197 = vsub.f32 %v1055, %v1149
      %v1198 = vsub.f32 %v1056, %v1152
      %v1199 = vsub.f32 %v1057, %v1157
      %v1200 = vsub.f32 %v1058, %v1160
      %v1201 = vsub.f32 %v1059, %v1165
      %v1202 = vsub.f32 %v1060, %v1168
      %v1203 = vsub.f32 %v1061, %v1173
      %v1204 = vsub.f32 %v1062, %v1176
      %v1205 = vsub.f32 %v1063, %v1181
      %v1206 = vsub.f32 %v1064, %v1184
      %v1207 = vsub.f32 %v1065, %v1189
      %v1208 = vsub.f32 %v1066, %v1192
      %v1209 = vmul.f32 %v1195, %v1195
      %v1210 = vmul.f32 %v1196, %v1196
      %v1211 = vmul.f32 %v1197, %v1197
      %v1212 = vmul.f32 %v1198, %v1198
      %v1213 = vmul.f32 %v1199, %v1199
      %v1214 = vmul.f32 %v1200, %v1200
      %v1215 = vmul.f32 %v1201, %v1201
      %v1216 = vmul.f32 %v1202, %v1202
      %v1217 = vmul.f32 %v1203, %v1203
      %v1218 = vmul.f32 %v1204, %v1204
      %v1219 = vmul.f32 %v1205, %v1205
      %v1220 = vmul.f32 %v1206, %v1206
      %v1221 = vmul.f32 %v1207, %v1207
      %v1222 = vmul.f32 %v1208, %v1208
      %v1223 = vsel %vm427, %v1209, 0.0
      %1224 = vadd.xlane.f32.xlu0 %v1223
      %v1225 = vpop.xlane.xlu0 %1224
      %v1226 = vsel %vm427, %v1210, 0.0
      %1227 = vadd.xlane.f32.xlu0 %v1226
      %v1228 = vpop.xlane.xlu0 %1227
      %v1229 = vsel %vm427, %v1211, 0.0
      %1230 = vadd.xlane.f32.xlu0 %v1229
      %v1231 = vpop.xlane.xlu0 %1230
      %v1232 = vsel %vm427, %v1212, 0.0
      %1233 = vadd.xlane.f32.xlu0 %v1232
      %v1234 = vpop.xlane.xlu0 %1233
      %v1235 = vsel %vm427, %v1213, 0.0
      %1236 = vadd.xlane.f32.xlu0 %v1235
      %v1237 = vpop.xlane.xlu0 %1236
      %v1238 = vsel %vm427, %v1214, 0.0
      %1239 = vadd.xlane.f32.xlu0 %v1238
      %v1240 = vpop.xlane.xlu0 %1239
      %v1241 = vsel %vm427, %v1215, 0.0
      %1242 = vadd.xlane.f32.xlu0 %v1241
      %v1243 = vpop.xlane.xlu0 %1242
      %v1244 = vsel %vm427, %v1216, 0.0
      %1245 = vadd.xlane.f32.xlu0 %v1244
      %v1246 = vpop.xlane.xlu0 %1245
      %v1247 = vsel %vm427, %v1217, 0.0
      %1248 = vadd.xlane.f32.xlu0 %v1247
      %v1249 = vpop.xlane.xlu0 %1248
      %v1250 = vsel %vm427, %v1218, 0.0
      %1251 = vadd.xlane.f32.xlu0 %v1250
      %v1252 = vpop.xlane.xlu0 %1251
      %v1253 = vsel %vm427, %v1219, 0.0
      %1254 = vadd.xlane.f32.xlu0 %v1253
      %v1255 = vpop.xlane.xlu0 %1254
      %v1256 = vsel %vm427, %v1220, 0.0
      %1257 = vadd.xlane.f32.xlu0 %v1256
      %v1258 = vpop.xlane.xlu0 %1257
      %v1259 = vsel %vm427, %v1221, 0.0
      %1260 = vadd.xlane.f32.xlu0 %v1259
      %v1261 = vpop.xlane.xlu0 %1260
      %v1262 = vsel %vm427, %v1222, 0.0
      %1263 = vadd.xlane.f32.xlu0 %v1262
      %v1264 = vpop.xlane.xlu0 %1263
      %v1265 = vmul.f32 %v1225, -0.5
      %v1266 = vmul.f32 %v1228, -0.5
      %v1267 = vmul.f32 %v1231, -0.5
      %v1268 = vmul.f32 %v1234, -0.5
      %v1269 = vmul.f32 %v1237, -0.5
      %v1270 = vmul.f32 %v1240, -0.5
      %v1271 = vmul.f32 %v1243, -0.5
      %v1272 = vmul.f32 %v1246, -0.5
      %v1273 = vmul.f32 %v1249, -0.5
      %v1274 = vmul.f32 %v1252, -0.5
      %v1275 = vmul.f32 %v1255, -0.5
      %v1276 = vmul.f32 %v1258, -0.5
      %v1277 = vmul.f32 %v1261, -0.5
      %v1278 = vmul.f32 %v1264, -0.5
      %v1279 = vsub.f32 %v1265, 29.406033
      %v1280 = vsub.f32 %v1266, 29.406033
      %v1281 = vsub.f32 %v1267, 29.406033
      %v1282 = vsub.f32 %v1268, 29.406033
      %v1283 = vsub.f32 %v1269, 29.406033
      %v1284 = vsub.f32 %v1270, 29.406033
      %v1285 = vsub.f32 %v1271, 29.406033
      %v1286 = vsub.f32 %v1272, 29.406033
      %v1287 = vsub.f32 %v1273, 29.406033
      %v1288 = vsub.f32 %v1274, 29.406033
      %v1289 = vsub.f32 %v1275, 29.406033
      %v1290 = vsub.f32 %v1276, 29.406033
      %v1291 = vsub.f32 %v1277, 29.406033
      %v1292 = vsub.f32 %v1278, 29.406033
      %v1293 = vmul.f32 %v651, %v651
      %v1294 = vmul.f32 %v655, %v655
      %v1295 = vmul.f32 %v661, %v661
      %v1296 = vmul.f32 %v665, %v665
      %v1297 = vmul.f32 %v671, %v671
      %v1298 = vmul.f32 %v675, %v675
      %v1299 = vmul.f32 %v681, %v681
      %v1300 = vmul.f32 %v685, %v685
      %v1301 = vmul.f32 %v691, %v691
      %v1302 = vmul.f32 %v695, %v695
      %v1303 = vmul.f32 %v701, %v701
      %v1304 = vmul.f32 %v705, %v705
      %v1305 = vmul.f32 %v711, %v711
      %v1306 = vmul.f32 %v715, %v715
      %v1307 = vadd.f32 %v747, %v1293
      %v1308 = vadd.f32 %v748, %v1294
      %v1309 = vadd.f32 %v749, %v1295
      %v1310 = vadd.f32 %v750, %v1296
      %v1311 = vadd.f32 %v751, %v1297
      %v1312 = vadd.f32 %v752, %v1298
      %v1313 = vadd.f32 %v753, %v1299
      %v1314 = vadd.f32 %v754, %v1300
      %v1315 = vadd.f32 %v755, %v1301
      %v1316 = vadd.f32 %v756, %v1302
      %v1317 = vadd.f32 %v757, %v1303
      %v1318 = vadd.f32 %v758, %v1304
      %v1319 = vadd.f32 %v759, %v1305
      %v1320 = vadd.f32 %v760, %v1306
      %v1321 = vsub.f32 %v1307, 1.0
      %v1322 = vsub.f32 %v1308, 1.0
      %v1323 = vsub.f32 %v1309, 1.0
      %v1324 = vsub.f32 %v1310, 1.0
      %v1325 = vsub.f32 %v1311, 1.0
      %v1326 = vsub.f32 %v1312, 1.0
      %v1327 = vsub.f32 %v1313, 1.0
      %v1328 = vsub.f32 %v1314, 1.0
      %v1329 = vsub.f32 %v1315, 1.0
      %v1330 = vsub.f32 %v1316, 1.0
      %v1331 = vsub.f32 %v1317, 1.0
      %v1332 = vsub.f32 %v1318, 1.0
      %v1333 = vsub.f32 %v1319, 1.0
      %v1334 = vsub.f32 %v1320, 1.0
      %v1335 = vmul.f32 %v653, 2.0
      %v1336 = vmul.f32 %v657, 2.0
      %v1337 = vmul.f32 %v663, 2.0
      %v1338 = vmul.f32 %v667, 2.0
      %v1339 = vmul.f32 %v673, 2.0
      %v1340 = vmul.f32 %v677, 2.0
      %v1341 = vmul.f32 %v683, 2.0
      %v1342 = vmul.f32 %v687, 2.0
      %v1343 = vmul.f32 %v693, 2.0
      %v1344 = vmul.f32 %v697, 2.0
      %v1345 = vmul.f32 %v703, 2.0
      %v1346 = vmul.f32 %v707, 2.0
      %v1347 = vmul.f32 %v713, 2.0
      %v1348 = vmul.f32 %v717, 2.0
      %v1349 = vsub.f32 %v1321, %v1335
      %v1350 = vsub.f32 %v1322, %v1336
      %v1351 = vsub.f32 %v1323, %v1337
      %v1352 = vsub.f32 %v1324, %v1338
      %v1353 = vsub.f32 %v1325, %v1339
      %v1354 = vsub.f32 %v1326, %v1340
      %v1355 = vsub.f32 %v1327, %v1341
      %v1356 = vsub.f32 %v1328, %v1342
      %v1357 = vsub.f32 %v1329, %v1343
      %v1358 = vsub.f32 %v1330, %v1344
      %v1359 = vsub.f32 %v1331, %v1345
      %v1360 = vsub.f32 %v1332, %v1346
      %v1361 = vsub.f32 %v1333, %v1347
      %v1362 = vsub.f32 %v1334, %v1348
      %1363 = vadd.xlane.f32.xlu0 %v1349
      %v1364 = vpop.xlane.xlu0 %1363
      %1365 = vadd.xlane.f32.xlu0 %v1350
      %v1366 = vpop.xlane.xlu0 %1365
      %1367 = vadd.xlane.f32.xlu0 %v1351
      %v1368 = vpop.xlane.xlu0 %1367
      %1369 = vadd.xlane.f32.xlu0 %v1352
      %v1370 = vpop.xlane.xlu0 %1369
      %1371 = vadd.xlane.f32.xlu0 %v1353
      %v1372 = vpop.xlane.xlu0 %1371
      %1373 = vadd.xlane.f32.xlu0 %v1354
      %v1374 = vpop.xlane.xlu0 %1373
      %1375 = vadd.xlane.f32.xlu0 %v1355
      %v1376 = vpop.xlane.xlu0 %1375
      %1377 = vadd.xlane.f32.xlu0 %v1356
      %v1378 = vpop.xlane.xlu0 %1377
      %1379 = vadd.xlane.f32.xlu0 %v1357
      %v1380 = vpop.xlane.xlu0 %1379
      %1381 = vadd.xlane.f32.xlu0 %v1358
      %v1382 = vpop.xlane.xlu0 %1381
      %1383 = vadd.xlane.f32.xlu0 %v1359
      %v1384 = vpop.xlane.xlu0 %1383
      %1385 = vadd.xlane.f32.xlu0 %v1360
      %v1386 = vpop.xlane.xlu0 %1385
      %1387 = vadd.xlane.f32.xlu0 %v1361
      %v1388 = vpop.xlane.xlu0 %1387
      %1389 = vadd.xlane.f32.xlu0 %v1362
      %v1390 = vpop.xlane.xlu0 %1389
      %v1391 = vmul.f32 %v1364, 0.5
      %v1392 = vmul.f32 %v1366, 0.5
      %v1393 = vmul.f32 %v1368, 0.5
      %v1394 = vmul.f32 %v1370, 0.5
      %v1395 = vmul.f32 %v1372, 0.5
      %v1396 = vmul.f32 %v1374, 0.5
      %v1397 = vmul.f32 %v1376, 0.5
      %v1398 = vmul.f32 %v1378, 0.5
      %v1399 = vmul.f32 %v1380, 0.5
      %v1400 = vmul.f32 %v1382, 0.5
      %v1401 = vmul.f32 %v1384, 0.5
      %v1402 = vmul.f32 %v1386, 0.5
      %v1403 = vmul.f32 %v1388, 0.5
      %v1404 = vmul.f32 %v1390, 0.5
      %v1405 = vlaneseq
      %v1406 = vshrl.u32 %v1405, 7
      %v1407 = vadd.s32 %v1406, 8
      %v1408 = vadd.s32 %v1406, 16
      %v1409 = vadd.s32 %v1406, 24
      %v1410 = vadd.s32 %v1406, 32
      %v1411 = vadd.s32 %v1406, 40
      %v1412 = vadd.s32 %v1406, 48
      %v1413 = vadd.s32 %v1406, 56
      %v1414 = vadd.s32 %v1406, 64
      %v1415 = vadd.s32 %v1406, 72
      %v1416 = vadd.s32 %v1406, 80
      %v1417 = vadd.s32 %v1406, 88
      %v1418 = vadd.s32 %v1406, 96
      %v1419 = vadd.s32 %v1406, 104
      %s1420 = smul.u32 %s21, 112
      %v1421 = vstv %s1420
      %v1422 = vadd.s32 %v1406, %v1421
      %v1423 = vadd.s32 %v1407, %v1421
      %v1424 = vadd.s32 %v1408, %v1421
      %v1425 = vadd.s32 %v1409, %v1421
      %v1426 = vadd.s32 %v1410, %v1421
      %v1427 = vadd.s32 %v1411, %v1421
      %v1428 = vadd.s32 %v1412, %v1421
      %v1429 = vadd.s32 %v1413, %v1421
      %v1430 = vadd.s32 %v1414, %v1421
      %v1431 = vadd.s32 %v1415, %v1421
      %v1432 = vadd.s32 %v1416, %v1421
      %v1433 = vadd.s32 %v1417, %v1421
      %v1434 = vadd.s32 %v1418, %v1421
      %v1435 = vadd.s32 %v1419, %v1421
      %vm1436 = vcmp.lt.s32.totalorder %v1422, 200
      %vm1437 = vcmp.lt.s32.totalorder %v1423, 200
      %vm1438 = vcmp.lt.s32.totalorder %v1424, 200
      %vm1439 = vcmp.lt.s32.totalorder %v1425, 200
      %vm1440 = vcmp.lt.s32.totalorder %v1426, 200
      %vm1441 = vcmp.lt.s32.totalorder %v1427, 200
      %vm1442 = vcmp.lt.s32.totalorder %v1428, 200
      %vm1443 = vcmp.lt.s32.totalorder %v1429, 200
      %vm1444 = vcmp.lt.s32.totalorder %v1430, 200
      %vm1445 = vcmp.lt.s32.totalorder %v1431, 200
      %vm1446 = vcmp.lt.s32.totalorder %v1432, 200
      %vm1447 = vcmp.lt.s32.totalorder %v1433, 200
      %vm1448 = vcmp.lt.s32.totalorder %v1434, 200
      %vm1449 = vcmp.lt.s32.totalorder %v1435, 200
      %v1450 = vsub.f32 %v1279, %v1391
      %v1451 = vsub.f32 %v1280, %v1392
      %v1452 = vsub.f32 %v1281, %v1393
      %v1453 = vsub.f32 %v1282, %v1394
      %v1454 = vsub.f32 %v1283, %v1395
      %v1455 = vsub.f32 %v1284, %v1396
      %v1456 = vsub.f32 %v1285, %v1397
      %v1457 = vsub.f32 %v1286, %v1398
      %v1458 = vsub.f32 %v1287, %v1399
      %v1459 = vsub.f32 %v1288, %v1400
      %v1460 = vsub.f32 %v1289, %v1401
      %v1461 = vsub.f32 %v1290, %v1402
      %v1462 = vsub.f32 %v1291, %v1403
      %v1463 = vsub.f32 %v1292, %v1404
      %v1464 = vsel %vm1436, %v1450, 0.0
      %v1465 = vsel %vm1437, %v1451, 0.0
      %v1466 = vsel %vm1438, %v1452, 0.0
      %v1467 = vsel %vm1439, %v1453, 0.0
      %v1468 = vsel %vm1440, %v1454, 0.0
      %v1469 = vsel %vm1441, %v1455, 0.0
      %v1470 = vsel %vm1442, %v1456, 0.0
      %v1471 = vsel %vm1443, %v1457, 0.0
      %v1472 = vsel %vm1444, %v1458, 0.0
      %v1473 = vsel %vm1445, %v1459, 0.0
      %v1474 = vsel %vm1446, %v1460, 0.0
      %v1475 = vsel %vm1447, %v1461, 0.0
      %v1476 = vsel %vm1448, %v1462, 0.0
      %v1477 = vsel %vm1449, %v1463, 0.0
      %vm1478 = vcmask 7168
      %v1479 = vsel %vm1478, %v1464, 0.0
      %v1480 = vsel %vm1478, %v1465, 0.0
      %v1481 = vadd.f32 %v1479, %v1480
      %v1482 = vsel %vm1478, %v1466, 0.0
      %v1483 = vadd.f32 %v1481, %v1482
      %v1484 = vsel %vm1478, %v1467, 0.0
      %v1485 = vadd.f32 %v1483, %v1484
      %v1486 = vsel %vm1478, %v1468, 0.0
      %v1487 = vadd.f32 %v1485, %v1486
      %v1488 = vsel %vm1478, %v1469, 0.0
      %v1489 = vadd.f32 %v1487, %v1488
      %v1490 = vsel %vm1478, %v1470, 0.0
      %v1491 = vadd.f32 %v1489, %v1490
      %v1492 = vsel %vm1478, %v1471, 0.0
      %v1493 = vadd.f32 %v1491, %v1492
      %v1494 = vsel %vm1478, %v1472, 0.0
      %v1495 = vadd.f32 %v1493, %v1494
      %v1496 = vsel %vm1478, %v1473, 0.0
      %v1497 = vadd.f32 %v1495, %v1496
      %v1498 = vsel %vm1478, %v1474, 0.0
      %v1499 = vadd.f32 %v1497, %v1498
      %v1500 = vsel %vm1478, %v1475, 0.0
      %v1501 = vadd.f32 %v1499, %v1500
      %v1502 = vsel %vm1478, %v1476, 0.0
      %v1503 = vadd.f32 %v1501, %v1502
      %v1504 = vsel %vm1478, %v1477, 0.0
      %v1505 = vadd.f32 %v1503, %v1504
      %1506 = vadd.xlane.f32.xlu0 %v1505
      %v1507 = vpop.xlane.xlu0 %1506
      %v1508 = vrot.slane %v1507, 4
      %v1509 = vadd.f32 %v1507, %v1508
      %v1510 = vrot.slane %v1509, 2
      %v1511 = vadd.f32 %v1509, %v1510
      %v1512 = vrot.slane %v1511, 1
      %v1513 = vadd.f32 %v1511, %v1512
      %s1514 = vtos %v1513
      %v1515 = vstv %s1514
      %1516 = vst [vmem:[%s381] sm:$0xff] %v1515
      %p1517 = scmp.lt.s32.totalorder %s21, 1
      %s1518 = scalar_select %p1517, %s21, 1
      %s1519 = smul.addr %s1518, 8
      %s1520 = scalar_lea.vmem %s10, %s1519
      // Predicated region
      $region61: #{vae_neg_elbo.1} parent=59 // pred_check
        %p1521 = pneg %p259
      $region62: #{vae_neg_elbo.1} parent=59 // pred_check_branch
        %1523 = sbr.rel (%p1521) target = $region64
      $region63: #{vae_neg_elbo.1} parent=59 // pred_region
        _
      $region64: #{vae_neg_elbo.1} parent=59 // pred_fallthru
        _
    $region60: #{vae_neg_elbo.1} parent=5 // pred_fallthru
      _
    %p1524 = scmp.le.s32.totalorder 2, %s16
    // Predicated region
    $region65: #{vae_neg_elbo.1} parent=5 // pred_check
      %p1525 = pneg %p1524
    $region66: #{vae_neg_elbo.1} parent=5 // pred_check_branch
      %1527 = sbr.rel (%p1525) target = $region68
    $region67: #{vae_neg_elbo.1} parent=5 // pred_region
      %s1528 = ssub.s32 %s16, 2
      // Predicated region
      $region69: #{vae_neg_elbo.1} parent=67 // pred_check
        %p1529 = pneg %p265
      $region70: #{vae_neg_elbo.1} parent=67 // pred_check_branch
        %1531 = sbr.rel (%p1529) target = $region72
      $region71: #{vae_neg_elbo.1} parent=67 // pred_region
        %p1532 = scmp.lt.s32.totalorder %s22, 1
        %s1533 = scalar_select %p1532, %s22, 1
        %s1534 = smul.addr %s1533, 8
        %s1535 = scalar_lea.vmem %s10, %s1534
      $region72: #{vae_neg_elbo.1} parent=67 // pred_fallthru
        _
    $region68: #{vae_neg_elbo.1} parent=5 // pred_fallthru
      _
  $region6: #{vae_neg_elbo.1} parent=0 // loop_footer
    %s20 = sadd.s32 1, %s16
  $region7: #{vae_neg_elbo.1} parent=0 // loop_footer_branch
    %15 = sbr.rel target = $region3
  $region8: #{vae_neg_elbo.1} parent=0 // loop_exit
    _

</llo_original>
